<compile_context>
chip_gen: v7x
topology: tpu7x:2x2x1
jax: 0.10.0
libtpu: 0.0.40
codegen_flags: <defaults>
</compile_context>

<pallas_src>
import functools

import jax
import jax.numpy as jnp
from jax.experimental import pallas as pl
from jax.experimental.pallas import tpu as pltpu


# ----------------------------------------------------------------------------
# Fused forward kernel: [conv+ReLU]*n_layers -> flatten -> fc1+ReLU -> fc2
# ----------------------------------------------------------------------------
def _fused_cnn1d_kernel(*refs, n_layers, K, L, B, Cmax):
    # refs layout:
    #   [x, (conv_w, conv_b)*n_layers, fc1_w, fc1_b, fc2_w, fc2_b,
    #    out, pad_scratch, cols_scratch, flat_scratch]
    pad = K // 2
    x_ref = refs[0]
    conv_refs = refs[1:1 + 2 * n_layers]
    fc1w_ref, fc1b_ref, fc2w_ref, fc2b_ref = refs[1 + 2 * n_layers:5 + 2 * n_layers]
    o_ref = refs[5 + 2 * n_layers]
    pad_ref, cols_ref, flat_ref = refs[6 + 2 * n_layers:9 + 2 * n_layers]

    # Zero the halo buffer once: provides the conv zero-padding rows and keeps
    # unused channel columns at zero (their weight rows are zero as well).
    pad_ref[...] = jnp.zeros_like(pad_ref)

    h = x_ref[...].astype(jnp.float32)                      # (B, L, Cmax)
    for i in range(n_layers):
        w_ref = conv_refs[2 * i]                            # (K*Cmax, C_out)
        b_ref = conv_refs[2 * i + 1]                        # (1, C_out)
        C = h.shape[-1]

        # Stage the current activation into the pre-zeroed VMEM halo buffer.
        pad_ref[:, pad:pad + L, :C] = h
        # im2col: the K shifted windows laid side-by-side along the lane axis.
        for k in range(K):
            cols_ref[:, :, k * Cmax:(k + 1) * Cmax] = pad_ref[:, k:k + L, :]

        # Whole conv layer as one GEMM: (B*L, K*Cmax) @ (K*Cmax, C_out).
        y = jnp.dot(cols_ref[...].reshape(B * L, K * Cmax), w_ref[...],
                    preferred_element_type=jnp.float32)
        y = jnp.maximum(y + b_ref[...], 0.0)                # bias + ReLU
        h = y.reshape(B, L, -1)                             # (B, L, C_out)

    # Channels-last flatten (index = l*H + c).  PyTorch's (B, C, L) flatten
    # order was folded into fc1's weight rows at trace time, so this is the
    # exact input ordering fc1 expects.
    H = h.shape[-1]
    for l in range(L):
        flat_ref[:, l * H:(l + 1) * H] = h[:, l, :]

    z = jnp.dot(flat_ref[...], fc1w_ref[...], preferred_element_type=jnp.float32)
    z = jnp.maximum(z + fc1b_ref[...], 0.0)                 # fc1 + ReLU
    out = jnp.dot(z, fc2w_ref[...], preferred_element_type=jnp.float32)
    out = out + fc2b_ref[...]                               # fc2
    o_ref[...] = out.astype(o_ref.dtype)


# ----------------------------------------------------------------------------
# Wrapper: builds the fused pallas_call
# ----------------------------------------------------------------------------
def model_forward(x, params, *, kernel_size):
    """x: (B, in_length, in_channels) — matches the PyTorch forward's input."""
    B, L, C_in = x.shape
    # PyTorch Conv1d(stride=1, padding=K//2) only preserves L (as fc1 assumes)
    # for odd kernel sizes.
    assert kernel_size % 2 == 1, "kernel_size must be odd"
    K = kernel_size
    pad = K // 2
    Lp = L + 2 * pad
    n_layers = len(params["convs"])
    H = params["convs"][-1][0].shape[-1]                    # hidden_size
    Cmax = max([C_in] + [w.shape[1] for (w, _) in params["convs"]])
    D_h = params["fc1_w"].shape[1]
    D_out = params["fc2_w"].shape[1]

    # Pad the input's channel dim to Cmax at trace time so the in-kernel halo
    # store is full lane width for every layer (padded channels hit zero weight
    # rows, so the result is unchanged).
    x_in = x.astype(jnp.float32)
    if C_in < Cmax:
        x_in = jnp.pad(x_in, ((0, 0), (0, 0), (0, Cmax - C_in)))

    inputs = [x_in]
    in_specs = [pl.BlockSpec((B, L, Cmax), lambda i: (0, 0, 0))]

    for (w, b) in params["convs"]:
        Kw, ci, co = w.shape
        # Zero-pad the input-channel dim to Cmax and flatten taps so the weight
        # row index is k*Cmax + c, matching the in-kernel im2col layout.
        w_pad = (jnp.zeros((Kw, Cmax, co), jnp.float32)
                 .at[:, :ci, :].set(w.astype(jnp.float32)))
        inputs += [w_pad.reshape(Kw * Cmax, co),
                   b.astype(jnp.float32).reshape(1, co)]
        in_specs += [pl.BlockSpec((Kw * Cmax, co), lambda i: (0, 0)),
                     pl.BlockSpec((1, co), lambda i: (0, 0))]

    # Fold PyTorch's (B, C, L).view(B, -1) ordering (row index c*L + l) into
    # fc1's weight by permuting its rows to channels-last order (l*H + c).
    # One-time trace-level cost; removes the runtime transpose entirely.
    fc1w = params["fc1_w"].astype(jnp.float32)              # (H*L, D_h)
    fc1w_perm = fc1w.reshape(H, L, D_h).transpose(1, 0, 2).reshape(L * H, D_h)
    fc2w = params["fc2_w"].astype(jnp.float32)              # (D_h, D_out)
    inputs += [fc1w_perm, params["fc1_b"].astype(jnp.float32).reshape(1, D_h),
               fc2w, params["fc2_b"].astype(jnp.float32).reshape(1, D_out)]
    in_specs += [pl.BlockSpec((L * H, D_h), lambda i: (0, 0)),
                 pl.BlockSpec((1, D_h), lambda i: (0, 0)),
                 pl.BlockSpec((D_h, D_out), lambda i: (0, 0)),
                 pl.BlockSpec((1, D_out), lambda i: (0, 0))]

    kernel = functools.partial(_fused_cnn1d_kernel, n_layers=n_layers,
                               K=K, L=L, B=B, Cmax=Cmax)
    # NOTE: at larger batch, add a batch grid axis marked "parallel" (shards the
    # two TensorCores on v7x); at this size a single invocation is optimal.
    return pl.pallas_call(
        kernel,
        out_shape=jax.ShapeDtypeStruct((B, D_out), jnp.float32),
        grid=(1,),
        in_specs=in_specs,
        out_specs=pl.BlockSpec((B, D_out), lambda i: (0, 0)),
        scratch_shapes=[
            pltpu.VMEM((B, Lp, Cmax), jnp.float32),      # halo (pad) buffer
            pltpu.VMEM((B, L, K * Cmax), jnp.float32),   # im2col columns
            pltpu.VMEM((B, L * H), jnp.float32),         # channels-last flatten
        ],
        compiler_params=pltpu.CompilerParams(
            dimension_semantics=("arbitrary",)),
    )(*inputs)


# ----------------------------------------------------------------------------
# Parameter init (PyTorch-equivalent shapes; conv weights stored as (K, C_in, C_out))
# ----------------------------------------------------------------------------
def init_params(key, *, in_channels, hidden_size, n_layers, out_channels,
                kernel_size, in_length):
    keys = jax.random.split(key, 2 * (n_layers + 2))
    ki = iter(range(len(keys)))
    convs = []
    c_in = in_channels
    for _ in range(n_layers):
        w = 0.1 * jax.random.normal(keys[next(ki)],
                                    (kernel_size, c_in, hidden_size), jnp.float32)
        b = 0.1 * jax.random.normal(keys[next(ki)], (hidden_size,), jnp.float32)
        convs.append((w, b))
        c_in = hidden_size
    fc1_w = 0.1 * jax.random.normal(keys[next(ki)],
                                    (hidden_size * in_length, hidden_size), jnp.float32)
    fc1_b = 0.1 * jax.random.normal(keys[next(ki)], (hidden_size,), jnp.float32)
    fc2_w = 0.1 * jax.random.normal(keys[next(ki)],
                                    (hidden_size, out_channels), jnp.float32)
    fc2_b = 0.1 * jax.random.normal(keys[next(ki)], (out_channels,), jnp.float32)
    return {"convs": convs, "fc1_w": fc1_w, "fc1_b": fc1_b,
            "fc2_w": fc2_w, "fc2_b": fc2_b}


if __name__ == "__main__":
    # Use full-precision matmuls everywhere so kernel and reference agree closely.
    jax.config.update("jax_default_matmul_precision", "highest")

    B, in_length, in_channels = 2, 16, 4
    hidden_size, n_layers, out_channels, kernel_size = 32, 2, 8, 3

    key = jax.random.PRNGKey(0)
    k_x, k_p = jax.random.split(key)
    x = jax.random.normal(k_x, (B, in_length, in_channels), jnp.float32)
    params = init_params(k_p, in_channels=in_channels, hidden_size=hidden_size,
                         n_layers=n_layers, out_channels=out_channels,
                         kernel_size=kernel_size, in_length=in_length)

    out = model_forward(x, params, kernel_size=kernel_size)
    out = jax.block_until_ready(out)
    assert out.shape == (B, out_channels), out.shape

    # Plain-JAX reference (mirrors the PyTorch forward exactly).
    def ref_forward(x, params):
        h = jnp.transpose(x, (0, 2, 1))                     # (B, C, L)
        for (w, b) in params["convs"]:
            w_oih = jnp.transpose(w, (2, 1, 0))             # (C_out, C_in, K)
            h = jax.lax.conv_general_dilated(
                h, w_oih, window_strides=(1,),
                padding=[(kernel_size // 2, kernel_size // 2)],
                dimension_numbers=("NCH", "OIH", "NCH"))
            h = jnp.maximum(h + b[None, :, None], 0.0)
        h = h.reshape(h.shape[0], -1)                       # (B, H*L), index c*L+l
        h = jnp.maximum(h @ params["fc1_w"] + params["fc1_b"], 0.0)
        return h @ params["fc2_w"] + params["fc2_b"]

    ref = jax.block_until_ready(ref_forward(x, params))
    max_diff = float(jnp.max(jnp.abs(out - ref)))
    assert jnp.allclose(out, ref, atol=1e-3, rtol=1e-3), max_diff

    print("KERNEL_OK")
</pallas_src>

<mosaic_0001>
module attributes {stable_mosaic.version = 11 : i64} {
  func.func @_fused_cnn1d_kernel(%arg0: i32, %arg1: memref<2x16x32xf32, #tpu.memory_space<vmem>>, %arg2: memref<96x32xf32, #tpu.memory_space<vmem>>, %arg3: memref<1x32xf32, #tpu.memory_space<vmem>>, %arg4: memref<96x32xf32, #tpu.memory_space<vmem>>, %arg5: memref<1x32xf32, #tpu.memory_space<vmem>>, %arg6: memref<512x32xf32, #tpu.memory_space<vmem>>, %arg7: memref<1x32xf32, #tpu.memory_space<vmem>>, %arg8: memref<32x8xf32, #tpu.memory_space<vmem>>, %arg9: memref<1x8xf32, #tpu.memory_space<vmem>>, %arg10: memref<2x8xf32, #tpu.memory_space<vmem>>, %arg11: memref<2x18x32xf32, #tpu.memory_space<vmem>>, %arg12: memref<2x16x96xf32, #tpu.memory_space<vmem>>, %arg13: memref<2x512xf32, #tpu.memory_space<vmem>>) attributes {dimension_semantics = [#tpu.dimension_semantics<arbitrary>], iteration_bounds = array<i64: 1>, scalar_prefetch = 0 : i64, scratch_operands = 3 : i64, tpu.core_type = #tpu.core_type<tc>, window_params = [{pipeline_mode = #tpu.pipeline_mode<synchronous>, transform_indices = @transform_0, window_bounds = array<i64: 2, 16, 32>}, {pipeline_mode = #tpu.pipeline_mode<synchronous>, transform_indices = @transform_1, window_bounds = array<i64: 96, 32>}, {pipeline_mode = #tpu.pipeline_mode<synchronous>, transform_indices = @transform_2, window_bounds = array<i64: 1, 32>}, {pipeline_mode = #tpu.pipeline_mode<synchronous>, transform_indices = @transform_3, window_bounds = array<i64: 96, 32>}, {pipeline_mode = #tpu.pipeline_mode<synchronous>, transform_indices = @transform_4, window_bounds = array<i64: 1, 32>}, {pipeline_mode = #tpu.pipeline_mode<synchronous>, transform_indices = @transform_5, window_bounds = array<i64: 512, 32>}, {pipeline_mode = #tpu.pipeline_mode<synchronous>, transform_indices = @transform_6, window_bounds = array<i64: 1, 32>}, {pipeline_mode = #tpu.pipeline_mode<synchronous>, transform_indices = @transform_7, window_bounds = array<i64: 32, 8>}, {pipeline_mode = #tpu.pipeline_mode<synchronous>, transform_indices = @transform_8, window_bounds = array<i64: 1, 8>}, {pipeline_mode = #tpu.pipeline_mode<synchronous>, transform_indices = @transform_9, window_bounds = array<i64: 2, 8>}]} {
    %cst = arith.constant 0.000000e+00 : f32
    %0 = vector.broadcast %cst : f32 to vector<2x18x32xf32>
    %c0 = arith.constant 0 : index
    %c0_0 = arith.constant 0 : index
    %c0_1 = arith.constant 0 : index
    %1 = vector.load %arg11[%c0, %c0_0, %c0_1] : memref<2x18x32xf32, #tpu.memory_space<vmem>>, vector<2x18x32xf32>
    tpu.vector_store %arg11[%c0, %c0_0, %c0_1], %0 {strides = array<i32>} : memref<2x18x32xf32, #tpu.memory_space<vmem>>, vector<2x18x32xf32>,
    %c0_2 = arith.constant 0 : index
    %c0_3 = arith.constant 0 : index
    %c0_4 = arith.constant 0 : index
    %2 = vector.load %arg1[%c0_2, %c0_3, %c0_4] : memref<2x16x32xf32, #tpu.memory_space<vmem>>, vector<2x16x32xf32>
    %c0_5 = arith.constant 0 : index
    %c1 = arith.constant 1 : index
    %c0_6 = arith.constant 0 : index
    %3 = vector.load %arg11[%c0_5, %c1, %c0_6] : memref<2x18x32xf32, #tpu.memory_space<vmem>>, vector<2x16x32xf32>
    tpu.vector_store %arg11[%c0_5, %c1, %c0_6], %2 {strides = array<i32>} : memref<2x18x32xf32, #tpu.memory_space<vmem>>, vector<2x16x32xf32>,
    %c0_7 = arith.constant 0 : index
    %c0_8 = arith.constant 0 : index
    %c0_9 = arith.constant 0 : index
    %4 = vector.load %arg11[%c0_7, %c0_8, %c0_9] : memref<2x18x32xf32, #tpu.memory_space<vmem>>, vector<2x16x32xf32>
    %c0_10 = arith.constant 0 : index
    %c0_11 = arith.constant 0 : index
    %c0_12 = arith.constant 0 : index
    %5 = vector.load %arg12[%c0_10, %c0_11, %c0_12] : memref<2x16x96xf32, #tpu.memory_space<vmem>>, vector<2x16x32xf32>
    tpu.vector_store %arg12[%c0_10, %c0_11, %c0_12], %4 {strides = array<i32>} : memref<2x16x96xf32, #tpu.memory_space<vmem>>, vector<2x16x32xf32>,
    %c0_13 = arith.constant 0 : index
    %c1_14 = arith.constant 1 : index
    %c0_15 = arith.constant 0 : index
    %6 = vector.load %arg11[%c0_13, %c1_14, %c0_15] : memref<2x18x32xf32, #tpu.memory_space<vmem>>, vector<2x16x32xf32>
    %c0_16 = arith.constant 0 : index
    %c0_17 = arith.constant 0 : index
    %c32 = arith.constant 32 : index
    %7 = vector.load %arg12[%c0_16, %c0_17, %c32] : memref<2x16x96xf32, #tpu.memory_space<vmem>>, vector<2x16x32xf32>
    tpu.vector_store %arg12[%c0_16, %c0_17, %c32], %6 {strides = array<i32>} : memref<2x16x96xf32, #tpu.memory_space<vmem>>, vector<2x16x32xf32>,
    %c0_18 = arith.constant 0 : index
    %c2 = arith.constant 2 : index
    %c0_19 = arith.constant 0 : index
    %8 = vector.load %arg11[%c0_18, %c2, %c0_19] : memref<2x18x32xf32, #tpu.memory_space<vmem>>, vector<2x16x32xf32>
    %c0_20 = arith.constant 0 : index
    %c0_21 = arith.constant 0 : index
    %c64 = arith.constant 64 : index
    %9 = vector.load %arg12[%c0_20, %c0_21, %c64] : memref<2x16x96xf32, #tpu.memory_space<vmem>>, vector<2x16x32xf32>
    tpu.vector_store %arg12[%c0_20, %c0_21, %c64], %8 {strides = array<i32>} : memref<2x16x96xf32, #tpu.memory_space<vmem>>, vector<2x16x32xf32>,
    %c0_22 = arith.constant 0 : index
    %c0_23 = arith.constant 0 : index
    %c0_24 = arith.constant 0 : index
    %10 = vector.load %arg12[%c0_22, %c0_23, %c0_24] : memref<2x16x96xf32, #tpu.memory_space<vmem>>, vector<2x16x96xf32>
    %11 = vector.shape_cast %10 : vector<2x16x96xf32> to vector<32x96xf32>
    %c0_25 = arith.constant 0 : index
    %c0_26 = arith.constant 0 : index
    %12 = vector.load %arg2[%c0_25, %c0_26] : memref<96x32xf32, #tpu.memory_space<vmem>>, vector<96x32xf32>
    %cst_27 = arith.constant dense<0.000000e+00> : vector<32x32xf32>
    %13 = tpu.matmul %11, %12, %cst_27 {dimension_numbers = #tpu.dot_dimension_numbers<[1], [0], [0], [1], [0, 0, 1, 1], [], []>, precision = #tpu.contract_precision<fp32>} : vector<32x96xf32>, vector<96x32xf32>, vector<32x32xf32> -> vector<32x32xf32>
    %c0_28 = arith.constant 0 : index
    %c0_29 = arith.constant 0 : index
    %14 = vector.load %arg3[%c0_28, %c0_29] : memref<1x32xf32, #tpu.memory_space<vmem>>, vector<1x32xf32>
    %15 = vector.broadcast %14 : vector<1x32xf32> to vector<32x32xf32>
    %16 = arith.addf %13, %15 : vector<32x32xf32>
    %cst_30 = arith.constant 0.000000e+00 : f32
    %17 = vector.broadcast %cst_30 : f32 to vector<32x32xf32>
    %18 = arith.maximumf %16, %17 : vector<32x32xf32>
    %19 = vector.shape_cast %18 : vector<32x32xf32> to vector<2x16x32xf32>
    %c0_31 = arith.constant 0 : index
    %c1_32 = arith.constant 1 : index
    %c0_33 = arith.constant 0 : index
    %20 = vector.load %arg11[%c0_31, %c1_32, %c0_33] : memref<2x18x32xf32, #tpu.memory_space<vmem>>, vector<2x16x32xf32>
    tpu.vector_store %arg11[%c0_31, %c1_32, %c0_33], %19 {strides = array<i32>} : memref<2x18x32xf32, #tpu.memory_space<vmem>>, vector<2x16x32xf32>,
    %c0_34 = arith.constant 0 : index
    %c0_35 = arith.constant 0 : index
    %c0_36 = arith.constant 0 : index
    %21 = vector.load %arg11[%c0_34, %c0_35, %c0_36] : memref<2x18x32xf32, #tpu.memory_space<vmem>>, vector<2x16x32xf32>
    %c0_37 = arith.constant 0 : index
    %c0_38 = arith.constant 0 : index
    %c0_39 = arith.constant 0 : index
    %22 = vector.load %arg12[%c0_37, %c0_38, %c0_39] : memref<2x16x96xf32, #tpu.memory_space<vmem>>, vector<2x16x32xf32>
    tpu.vector_store %arg12[%c0_37, %c0_38, %c0_39], %21 {strides = array<i32>} : memref<2x16x96xf32, #tpu.memory_space<vmem>>, vector<2x16x32xf32>,
    %c0_40 = arith.constant 0 : index
    %c1_41 = arith.constant 1 : index
    %c0_42 = arith.constant 0 : index
    %23 = vector.load %arg11[%c0_40, %c1_41, %c0_42] : memref<2x18x32xf32, #tpu.memory_space<vmem>>, vector<2x16x32xf32>
    %c0_43 = arith.constant 0 : index
    %c0_44 = arith.constant 0 : index
    %c32_45 = arith.constant 32 : index
    %24 = vector.load %arg12[%c0_43, %c0_44, %c32_45] : memref<2x16x96xf32, #tpu.memory_space<vmem>>, vector<2x16x32xf32>
    tpu.vector_store %arg12[%c0_43, %c0_44, %c32_45], %23 {strides = array<i32>} : memref<2x16x96xf32, #tpu.memory_space<vmem>>, vector<2x16x32xf32>,
    %c0_46 = arith.constant 0 : index
    %c2_47 = arith.constant 2 : index
    %c0_48 = arith.constant 0 : index
    %25 = vector.load %arg11[%c0_46, %c2_47, %c0_48] : memref<2x18x32xf32, #tpu.memory_space<vmem>>, vector<2x16x32xf32>
    %c0_49 = arith.constant 0 : index
    %c0_50 = arith.constant 0 : index
    %c64_51 = arith.constant 64 : index
    %26 = vector.load %arg12[%c0_49, %c0_50, %c64_51] : memref<2x16x96xf32, #tpu.memory_space<vmem>>, vector<2x16x32xf32>
    tpu.vector_store %arg12[%c0_49, %c0_50, %c64_51], %25 {strides = array<i32>} : memref<2x16x96xf32, #tpu.memory_space<vmem>>, vector<2x16x32xf32>,
    %c0_52 = arith.constant 0 : index
    %c0_53 = arith.constant 0 : index
    %c0_54 = arith.constant 0 : index
    %27 = vector.load %arg12[%c0_52, %c0_53, %c0_54] : memref<2x16x96xf32, #tpu.memory_space<vmem>>, vector<2x16x96xf32>
    %28 = vector.shape_cast %27 : vector<2x16x96xf32> to vector<32x96xf32>
    %c0_55 = arith.constant 0 : index
    %c0_56 = arith.constant 0 : index
    %29 = vector.load %arg4[%c0_55, %c0_56] : memref<96x32xf32, #tpu.memory_space<vmem>>, vector<96x32xf32>
    %cst_57 = arith.constant dense<0.000000e+00> : vector<32x32xf32>
    %30 = tpu.matmul %28, %29, %cst_57 {dimension_numbers = #tpu.dot_dimension_numbers<[1], [0], [0], [1], [0, 0, 1, 1], [], []>, precision = #tpu.contract_precision<fp32>} : vector<32x96xf32>, vector<96x32xf32>, vector<32x32xf32> -> vector<32x32xf32>
    %c0_58 = arith.constant 0 : index
    %c0_59 = arith.constant 0 : index
    %31 = vector.load %arg5[%c0_58, %c0_59] : memref<1x32xf32, #tpu.memory_space<vmem>>, vector<1x32xf32>
    %32 = vector.broadcast %31 : vector<1x32xf32> to vector<32x32xf32>
    %33 = arith.addf %30, %32 : vector<32x32xf32>
    %cst_60 = arith.constant 0.000000e+00 : f32
    %34 = vector.broadcast %cst_60 : f32 to vector<32x32xf32>
    %35 = arith.maximumf %33, %34 : vector<32x32xf32>
    %36 = vector.shape_cast %35 : vector<32x32xf32> to vector<2x16x32xf32>
    %37 = vector.extract_strided_slice %36 {offsets = [0, 0, 0], sizes = [2, 1, 32], strides = [1, 1, 1]} : vector<2x16x32xf32> to vector<2x1x32xf32>
    %38 = vector.shape_cast %37 : vector<2x1x32xf32> to vector<2x32xf32>
    %c0_61 = arith.constant 0 : index
    %c0_62 = arith.constant 0 : index
    %39 = vector.load %arg13[%c0_61, %c0_62] : memref<2x512xf32, #tpu.memory_space<vmem>>, vector<2x32xf32>
    tpu.vector_store %arg13[%c0_61, %c0_62], %38 {strides = array<i32>} : memref<2x512xf32, #tpu.memory_space<vmem>>, vector<2x32xf32>,
    %40 = vector.extract_strided_slice %36 {offsets = [0, 1, 0], sizes = [2, 1, 32], strides = [1, 1, 1]} : vector<2x16x32xf32> to vector<2x1x32xf32>
    %41 = vector.shape_cast %40 : vector<2x1x32xf32> to vector<2x32xf32>
    %c0_63 = arith.constant 0 : index
    %c32_64 = arith.constant 32 : index
    %42 = vector.load %arg13[%c0_63, %c32_64] : memref<2x512xf32, #tpu.memory_space<vmem>>, vector<2x32xf32>
    tpu.vector_store %arg13[%c0_63, %c32_64], %41 {strides = array<i32>} : memref<2x512xf32, #tpu.memory_space<vmem>>, vector<2x32xf32>,
    %43 = vector.extract_strided_slice %36 {offsets = [0, 2, 0], sizes = [2, 1, 32], strides = [1, 1, 1]} : vector<2x16x32xf32> to vector<2x1x32xf32>
    %44 = vector.shape_cast %43 : vector<2x1x32xf32> to vector<2x32xf32>
    %c0_65 = arith.constant 0 : index
    %c64_66 = arith.constant 64 : index
    %45 = vector.load %arg13[%c0_65, %c64_66] : memref<2x512xf32, #tpu.memory_space<vmem>>, vector<2x32xf32>
    tpu.vector_store %arg13[%c0_65, %c64_66], %44 {strides = array<i32>} : memref<2x512xf32, #tpu.memory_space<vmem>>, vector<2x32xf32>,
    %46 = vector.extract_strided_slice %36 {offsets = [0, 3, 0], sizes = [2, 1, 32], strides = [1, 1, 1]} : vector<2x16x32xf32> to vector<2x1x32xf32>
    %47 = vector.shape_cast %46 : vector<2x1x32xf32> to vector<2x32xf32>
    %c0_67 = arith.constant 0 : index
    %c96 = arith.constant 96 : index
    %48 = vector.load %arg13[%c0_67, %c96] : memref<2x512xf32, #tpu.memory_space<vmem>>, vector<2x32xf32>
    tpu.vector_store %arg13[%c0_67, %c96], %47 {strides = array<i32>} : memref<2x512xf32, #tpu.memory_space<vmem>>, vector<2x32xf32>,
    %49 = vector.extract_strided_slice %36 {offsets = [0, 4, 0], sizes = [2, 1, 32], strides = [1, 1, 1]} : vector<2x16x32xf32> to vector<2x1x32xf32>
    %50 = vector.shape_cast %49 : vector<2x1x32xf32> to vector<2x32xf32>
    %c0_68 = arith.constant 0 : index
    %c128 = arith.constant 128 : index
    %51 = vector.load %arg13[%c0_68, %c128] : memref<2x512xf32, #tpu.memory_space<vmem>>, vector<2x32xf32>
    tpu.vector_store %arg13[%c0_68, %c128], %50 {strides = array<i32>} : memref<2x512xf32, #tpu.memory_space<vmem>>, vector<2x32xf32>,
    %52 = vector.extract_strided_slice %36 {offsets = [0, 5, 0], sizes = [2, 1, 32], strides = [1, 1, 1]} : vector<2x16x32xf32> to vector<2x1x32xf32>
    %53 = vector.shape_cast %52 : vector<2x1x32xf32> to vector<2x32xf32>
    %c0_69 = arith.constant 0 : index
    %c160 = arith.constant 160 : index
    %54 = vector.load %arg13[%c0_69, %c160] : memref<2x512xf32, #tpu.memory_space<vmem>>, vector<2x32xf32>
    tpu.vector_store %arg13[%c0_69, %c160], %53 {strides = array<i32>} : memref<2x512xf32, #tpu.memory_space<vmem>>, vector<2x32xf32>,
    %55 = vector.extract_strided_slice %36 {offsets = [0, 6, 0], sizes = [2, 1, 32], strides = [1, 1, 1]} : vector<2x16x32xf32> to vector<2x1x32xf32>
    %56 = vector.shape_cast %55 : vector<2x1x32xf32> to vector<2x32xf32>
    %c0_70 = arith.constant 0 : index
    %c192 = arith.constant 192 : index
    %57 = vector.load %arg13[%c0_70, %c192] : memref<2x512xf32, #tpu.memory_space<vmem>>, vector<2x32xf32>
    tpu.vector_store %arg13[%c0_70, %c192], %56 {strides = array<i32>} : memref<2x512xf32, #tpu.memory_space<vmem>>, vector<2x32xf32>,
    %58 = vector.extract_strided_slice %36 {offsets = [0, 7, 0], sizes = [2, 1, 32], strides = [1, 1, 1]} : vector<2x16x32xf32> to vector<2x1x32xf32>
    %59 = vector.shape_cast %58 : vector<2x1x32xf32> to vector<2x32xf32>
    %c0_71 = arith.constant 0 : index
    %c224 = arith.constant 224 : index
    %60 = vector.load %arg13[%c0_71, %c224] : memref<2x512xf32, #tpu.memory_space<vmem>>, vector<2x32xf32>
    tpu.vector_store %arg13[%c0_71, %c224], %59 {strides = array<i32>} : memref<2x512xf32, #tpu.memory_space<vmem>>, vector<2x32xf32>,
    %61 = vector.extract_strided_slice %36 {offsets = [0, 8, 0], sizes = [2, 1, 32], strides = [1, 1, 1]} : vector<2x16x32xf32> to vector<2x1x32xf32>
    %62 = vector.shape_cast %61 : vector<2x1x32xf32> to vector<2x32xf32>
    %c0_72 = arith.constant 0 : index
    %c256 = arith.constant 256 : index
    %63 = vector.load %arg13[%c0_72, %c256] : memref<2x512xf32, #tpu.memory_space<vmem>>, vector<2x32xf32>
    tpu.vector_store %arg13[%c0_72, %c256], %62 {strides = array<i32>} : memref<2x512xf32, #tpu.memory_space<vmem>>, vector<2x32xf32>,
    %64 = vector.extract_strided_slice %36 {offsets = [0, 9, 0], sizes = [2, 1, 32], strides = [1, 1, 1]} : vector<2x16x32xf32> to vector<2x1x32xf32>
    %65 = vector.shape_cast %64 : vector<2x1x32xf32> to vector<2x32xf32>
    %c0_73 = arith.constant 0 : index
    %c288 = arith.constant 288 : index
    %66 = vector.load %arg13[%c0_73, %c288] : memref<2x512xf32, #tpu.memory_space<vmem>>, vector<2x32xf32>
    tpu.vector_store %arg13[%c0_73, %c288], %65 {strides = array<i32>} : memref<2x512xf32, #tpu.memory_space<vmem>>, vector<2x32xf32>,
    %67 = vector.extract_strided_slice %36 {offsets = [0, 10, 0], sizes = [2, 1, 32], strides = [1, 1, 1]} : vector<2x16x32xf32> to vector<2x1x32xf32>
    %68 = vector.shape_cast %67 : vector<2x1x32xf32> to vector<2x32xf32>
    %c0_74 = arith.constant 0 : index
    %c320 = arith.constant 320 : index
    %69 = vector.load %arg13[%c0_74, %c320] : memref<2x512xf32, #tpu.memory_space<vmem>>, vector<2x32xf32>
    tpu.vector_store %arg13[%c0_74, %c320], %68 {strides = array<i32>} : memref<2x512xf32, #tpu.memory_space<vmem>>, vector<2x32xf32>,
    %70 = vector.extract_strided_slice %36 {offsets = [0, 11, 0], sizes = [2, 1, 32], strides = [1, 1, 1]} : vector<2x16x32xf32> to vector<2x1x32xf32>
    %71 = vector.shape_cast %70 : vector<2x1x32xf32> to vector<2x32xf32>
    %c0_75 = arith.constant 0 : index
    %c352 = arith.constant 352 : index
    %72 = vector.load %arg13[%c0_75, %c352] : memref<2x512xf32, #tpu.memory_space<vmem>>, vector<2x32xf32>
    tpu.vector_store %arg13[%c0_75, %c352], %71 {strides = array<i32>} : memref<2x512xf32, #tpu.memory_space<vmem>>, vector<2x32xf32>,
    %73 = vector.extract_strided_slice %36 {offsets = [0, 12, 0], sizes = [2, 1, 32], strides = [1, 1, 1]} : vector<2x16x32xf32> to vector<2x1x32xf32>
    %74 = vector.shape_cast %73 : vector<2x1x32xf32> to vector<2x32xf32>
    %c0_76 = arith.constant 0 : index
    %c384 = arith.constant 384 : index
    %75 = vector.load %arg13[%c0_76, %c384] : memref<2x512xf32, #tpu.memory_space<vmem>>, vector<2x32xf32>
    tpu.vector_store %arg13[%c0_76, %c384], %74 {strides = array<i32>} : memref<2x512xf32, #tpu.memory_space<vmem>>, vector<2x32xf32>,
    %76 = vector.extract_strided_slice %36 {offsets = [0, 13, 0], sizes = [2, 1, 32], strides = [1, 1, 1]} : vector<2x16x32xf32> to vector<2x1x32xf32>
    %77 = vector.shape_cast %76 : vector<2x1x32xf32> to vector<2x32xf32>
    %c0_77 = arith.constant 0 : index
    %c416 = arith.constant 416 : index
    %78 = vector.load %arg13[%c0_77, %c416] : memref<2x512xf32, #tpu.memory_space<vmem>>, vector<2x32xf32>
    tpu.vector_store %arg13[%c0_77, %c416], %77 {strides = array<i32>} : memref<2x512xf32, #tpu.memory_space<vmem>>, vector<2x32xf32>,
    %79 = vector.extract_strided_slice %36 {offsets = [0, 14, 0], sizes = [2, 1, 32], strides = [1, 1, 1]} : vector<2x16x32xf32> to vector<2x1x32xf32>
    %80 = vector.shape_cast %79 : vector<2x1x32xf32> to vector<2x32xf32>
    %c0_78 = arith.constant 0 : index
    %c448 = arith.constant 448 : index
    %81 = vector.load %arg13[%c0_78, %c448] : memref<2x512xf32, #tpu.memory_space<vmem>>, vector<2x32xf32>
    tpu.vector_store %arg13[%c0_78, %c448], %80 {strides = array<i32>} : memref<2x512xf32, #tpu.memory_space<vmem>>, vector<2x32xf32>,
    %82 = vector.extract_strided_slice %36 {offsets = [0, 15, 0], sizes = [2, 1, 32], strides = [1, 1, 1]} : vector<2x16x32xf32> to vector<2x1x32xf32>
    %83 = vector.shape_cast %82 : vector<2x1x32xf32> to vector<2x32xf32>
    %c0_79 = arith.constant 0 : index
    %c480 = arith.constant 480 : index
    %84 = vector.load %arg13[%c0_79, %c480] : memref<2x512xf32, #tpu.memory_space<vmem>>, vector<2x32xf32>
    tpu.vector_store %arg13[%c0_79, %c480], %83 {strides = array<i32>} : memref<2x512xf32, #tpu.memory_space<vmem>>, vector<2x32xf32>,
    %c0_80 = arith.constant 0 : index
    %c0_81 = arith.constant 0 : index
    %85 = vector.load %arg13[%c0_80, %c0_81] : memref<2x512xf32, #tpu.memory_space<vmem>>, vector<2x512xf32>
    %c0_82 = arith.constant 0 : index
    %c0_83 = arith.constant 0 : index
    %86 = vector.load %arg6[%c0_82, %c0_83] : memref<512x32xf32, #tpu.memory_space<vmem>>, vector<512x32xf32>
    %cst_84 = arith.constant dense<0.000000e+00> : vector<2x32xf32>
    %87 = tpu.matmul %85, %86, %cst_84 {dimension_numbers = #tpu.dot_dimension_numbers<[1], [0], [0], [1], [0, 0, 1, 1], [], []>, precision = #tpu.contract_precision<fp32>} : vector<2x512xf32>, vector<512x32xf32>, vector<2x32xf32> -> vector<2x32xf32>
    %c0_85 = arith.constant 0 : index
    %c0_86 = arith.constant 0 : index
    %88 = vector.load %arg7[%c0_85, %c0_86] : memref<1x32xf32, #tpu.memory_space<vmem>>, vector<1x32xf32>
    %89 = vector.broadcast %88 : vector<1x32xf32> to vector<2x32xf32>
    %90 = arith.addf %87, %89 : vector<2x32xf32>
    %cst_87 = arith.constant 0.000000e+00 : f32
    %91 = vector.broadcast %cst_87 : f32 to vector<2x32xf32>
    %92 = arith.maximumf %90, %91 : vector<2x32xf32>
    %c0_88 = arith.constant 0 : index
    %c0_89 = arith.constant 0 : index
    %93 = vector.load %arg8[%c0_88, %c0_89] : memref<32x8xf32, #tpu.memory_space<vmem>>, vector<32x8xf32>
    %cst_90 = arith.constant dense<0.000000e+00> : vector<2x8xf32>
    %94 = tpu.matmul %92, %93, %cst_90 {dimension_numbers = #tpu.dot_dimension_numbers<[1], [0], [0], [1], [0, 0, 1, 1], [], []>, precision = #tpu.contract_precision<fp32>} : vector<2x32xf32>, vector<32x8xf32>, vector<2x8xf32> -> vector<2x8xf32>
    %c0_91 = arith.constant 0 : index
    %c0_92 = arith.constant 0 : index
    %95 = vector.load %arg9[%c0_91, %c0_92] : memref<1x8xf32, #tpu.memory_space<vmem>>, vector<1x8xf32>
    %96 = vector.broadcast %95 : vector<1x8xf32> to vector<2x8xf32>
    %97 = arith.addf %94, %96 : vector<2x8xf32>
    %c0_93 = arith.constant 0 : index
    %c0_94 = arith.constant 0 : index
    %98 = vector.load %arg10[%c0_93, %c0_94] : memref<2x8xf32, #tpu.memory_space<vmem>>, vector<2x8xf32>
    tpu.vector_store %arg10[%c0_93, %c0_94], %97 {strides = array<i32>} : memref<2x8xf32, #tpu.memory_space<vmem>>, vector<2x8xf32>,
    return
  }
  func.func @transform_0(%arg0: i32) -> (i32, i32, i32) {
    %c0_i32 = arith.constant 0 : i32
    %c0_i32_0 = arith.constant 0 : i32
    %c0_i32_1 = arith.constant 0 : i32
    %c0_i32_2 = arith.constant 0 : i32
    return %c0_i32, %c0_i32_0, %c0_i32_1 : i32, i32, i32
  }
  func.func @transform_1(%arg0: i32) -> (i32, i32) {
    %c0_i32 = arith.constant 0 : i32
    %c0_i32_0 = arith.constant 0 : i32
    %c0_i32_1 = arith.constant 0 : i32
    return %c0_i32, %c0_i32_0 : i32, i32
  }
  func.func @transform_2(%arg0: i32) -> (i32, i32) {
    %c0_i32 = arith.constant 0 : i32
    %c0_i32_0 = arith.constant 0 : i32
    %c0_i32_1 = arith.constant 0 : i32
    return %c0_i32, %c0_i32_0 : i32, i32
  }
  func.func @transform_3(%arg0: i32) -> (i32, i32) {
    %c0_i32 = arith.constant 0 : i32
    %c0_i32_0 = arith.constant 0 : i32
    %c0_i32_1 = arith.constant 0 : i32
    return %c0_i32, %c0_i32_0 : i32, i32
  }
  func.func @transform_4(%arg0: i32) -> (i32, i32) {
    %c0_i32 = arith.constant 0 : i32
    %c0_i32_0 = arith.constant 0 : i32
    %c0_i32_1 = arith.constant 0 : i32
    return %c0_i32, %c0_i32_0 : i32, i32
  }
  func.func @transform_5(%arg0: i32) -> (i32, i32) {
    %c0_i32 = arith.constant 0 : i32
    %c0_i32_0 = arith.constant 0 : i32
    %c0_i32_1 = arith.constant 0 : i32
    return %c0_i32, %c0_i32_0 : i32, i32
  }
  func.func @transform_6(%arg0: i32) -> (i32, i32) {
    %c0_i32 = arith.constant 0 : i32
    %c0_i32_0 = arith.constant 0 : i32
    %c0_i32_1 = arith.constant 0 : i32
    return %c0_i32, %c0_i32_0 : i32, i32
  }
  func.func @transform_7(%arg0: i32) -> (i32, i32) {
    %c0_i32 = arith.constant 0 : i32
    %c0_i32_0 = arith.constant 0 : i32
    %c0_i32_1 = arith.constant 0 : i32
    return %c0_i32, %c0_i32_0 : i32, i32
  }
  func.func @transform_8(%arg0: i32) -> (i32, i32) {
    %c0_i32 = arith.constant 0 : i32
    %c0_i32_0 = arith.constant 0 : i32
    %c0_i32_1 = arith.constant 0 : i32
    return %c0_i32, %c0_i32_0 : i32, i32
  }
  func.func @transform_9(%arg0: i32) -> (i32, i32) {
    %c0_i32 = arith.constant 0 : i32
    %c0_i32_0 = arith.constant 0 : i32
    %c0_i32_1 = arith.constant 0 : i32
    return %c0_i32, %c0_i32_0 : i32, i32
  }
}

</mosaic_0001>

<llo_original>
// kernel: tpu_custom_call.1
$region0: #{tpu_custom_call.1}
  #allocation0 [shape = 'u32[]', space=smem, size = 0x4, offset = 0x4, fixed_abs, tag = 'smem constant byte address 0x4 - core index']
  #allocation1 [shape = 'u32[144,128]{1,0:T(1,128)}', space=vmem, size = 0x12000, scoped, tag = 'internal scratch']
  #allocation2 [shape = 'f32[2,18,32]{2,1,0:T(8,128)}', space=vmem, size = 0x6000, scoped, tag = 'scratch operand']
  #allocation3 [shape = 'f32[2,16,96]{2,1,0:T(8,128)}', space=vmem, size = 0x4000, scoped, tag = 'scratch operand']
  #allocation4 [shape = 'f32[2,512]{1,0:T(2,128)}', space=vmem, size = 0x1000, scoped, tag = 'scratch operand']
  %s0 = inlined_call_operand.vmem [shape: f32[2,16,32], index: 0, kind: input, shape index: {}]
  %s1 = inlined_call_operand.vmem [shape: f32[96,32], index: 1, kind: input, shape index: {}]
  %s2 = inlined_call_operand.vmem [shape: f32[1,32], index: 2, kind: input, shape index: {}]
  %s3 = inlined_call_operand.vmem [shape: f32[96,32], index: 3, kind: input, shape index: {}]
  %s4 = inlined_call_operand.vmem [shape: f32[1,32], index: 4, kind: input, shape index: {}]
  %s5 = inlined_call_operand.vmem [shape: f32[512,32], index: 5, kind: input, shape index: {}]
  %s6 = inlined_call_operand.vmem [shape: f32[1,32], index: 6, kind: input, shape index: {}]
  %s7 = inlined_call_operand.vmem [shape: f32[32,8], index: 7, kind: input, shape index: {}]
  %s8 = inlined_call_operand.vmem [shape: f32[1,8], index: 8, kind: input, shape index: {}]
  %s9 = inlined_call_operand.hbm [shape: f32[2,8], index: 9, kind: output, shape index: {}]
  %s10 = sld [smem:[#allocation0]]
  $region46: #{tpu_custom_call.1} parent=0
    _
  %s12 = ssub.s32 1, %s10
  %s13 = scalar_select 0, %s12, %s10
  $region1: #{tpu_custom_call.1} parent=0
    #allocation5 [shape = 'u8[1024]{0}', space=vmem, size = 0x400, scoped, tag = 'output window, operand 0, single buffered']
    #allocation6 [shape = 's32[1]{0}', space=sflag, size = 0x4, scoped, tag = 'scoped memory for tpu_custom_call.1']
    %14 = vsyncpa [#allocation6], 0
    // Predicated region
    $region2: #{tpu_custom_call.1} parent=1 // pred_check
      _
    $region3: #{tpu_custom_call.1} parent=1 // pred_check_branch
      %16 = sbr.rel (0) target = $region5
    $region4: #{tpu_custom_call.1} parent=1 // pred_region
      _
    $region5: #{tpu_custom_call.1} parent=1 // pred_fallthru
      _
    // Predicated region
    $region6: #{tpu_custom_call.1} parent=1 // pred_check
      _
    $region7: #{tpu_custom_call.1} parent=1 // pred_check_branch
      %18 = sbr.rel (0) target = $region9
    $region8: #{tpu_custom_call.1} parent=1 // pred_region
      _
    $region9: #{tpu_custom_call.1} parent=1 // pred_fallthru
      _
    // Predicated region
    $region10: #{tpu_custom_call.1} parent=1 // pred_check
      _
    $region11: #{tpu_custom_call.1} parent=1 // pred_check_branch
      %20 = sbr.rel (0) target = $region13
    $region12: #{tpu_custom_call.1} parent=1 // pred_region
      _
    $region13: #{tpu_custom_call.1} parent=1 // pred_fallthru
      _
    // Predicated region
    $region14: #{tpu_custom_call.1} parent=1 // pred_check
      _
    $region15: #{tpu_custom_call.1} parent=1 // pred_check_branch
      %22 = sbr.rel (0) target = $region17
    $region16: #{tpu_custom_call.1} parent=1 // pred_region
      _
    $region17: #{tpu_custom_call.1} parent=1 // pred_fallthru
      _
    // Predicated region
    $region18: #{tpu_custom_call.1} parent=1 // pred_check
      _
    $region19: #{tpu_custom_call.1} parent=1 // pred_check_branch
      %24 = sbr.rel (0) target = $region21
    $region20: #{tpu_custom_call.1} parent=1 // pred_region
      _
    $region21: #{tpu_custom_call.1} parent=1 // pred_fallthru
      _
    // Predicated region
    $region22: #{tpu_custom_call.1} parent=1 // pred_check
      _
    $region23: #{tpu_custom_call.1} parent=1 // pred_check_branch
      %26 = sbr.rel (0) target = $region25
    $region24: #{tpu_custom_call.1} parent=1 // pred_region
      _
    $region25: #{tpu_custom_call.1} parent=1 // pred_fallthru
      _
    // Predicated region
    $region26: #{tpu_custom_call.1} parent=1 // pred_check
      _
    $region27: #{tpu_custom_call.1} parent=1 // pred_check_branch
      %28 = sbr.rel (0) target = $region29
    $region28: #{tpu_custom_call.1} parent=1 // pred_region
      _
    $region29: #{tpu_custom_call.1} parent=1 // pred_fallthru
      _
    // Predicated region
    $region30: #{tpu_custom_call.1} parent=1 // pred_check
      _
    $region31: #{tpu_custom_call.1} parent=1 // pred_check_branch
      %30 = sbr.rel (0) target = $region33
    $region32: #{tpu_custom_call.1} parent=1 // pred_region
      _
    $region33: #{tpu_custom_call.1} parent=1 // pred_fallthru
      _
    // Predicated region
    $region34: #{tpu_custom_call.1} parent=1 // pred_check
      _
    $region35: #{tpu_custom_call.1} parent=1 // pred_check_branch
      %32 = sbr.rel (0) target = $region37
    $region36: #{tpu_custom_call.1} parent=1 // pred_region
      _
    $region37: #{tpu_custom_call.1} parent=1 // pred_fallthru
      _
    %vm33 = vcmask 261120
    %34 = vst.msk [vmem:[#allocation2] sm:$0xff] %vm33, 0.0
    %35 = vst.msk [vmem:[#allocation2 + $0x8] sm:$0xff] %vm33, 0.0
    %vm36 = vcmask 254976
    %37 = vst.msk [vmem:[#allocation2 + $0x10] sm:$0x3] %vm36, 0.0
    %38 = vst.msk [vmem:[#allocation2 + $0x18] sm:$0xff] %vm33, 0.0
    %39 = vst.msk [vmem:[#allocation2 + $0x20] sm:$0xff] %vm33, 0.0
    %40 = vst.msk [vmem:[#allocation2 + $0x28] sm:$0x3] %vm36, 0.0
    %v41 = vld [vmem:[%s0] sm:$0xff]
    %v42 = vld [vmem:[%s0 + $0x8] sm:$0xff]
    %v43 = vld [vmem:[%s0 + $0x10] sm:$0xff]
    %v44 = vld [vmem:[%s0 + $0x18] sm:$0xff]
    %45 = vst.msk [vmem:[#allocation2 + $0x1] sm:$0xff] %vm33, %v41
    %46 = vst.msk [vmem:[#allocation2 + $0x9] sm:$0xff] %vm33, %v42
    %47 = vst.msk [vmem:[#allocation2 + $0x19] sm:$0xff] %vm33, %v43
    %48 = vst.msk [vmem:[#allocation2 + $0x21] sm:$0xff] %vm33, %v44
    %v49 = vld [vmem:[#allocation2] sm:$0xff]
    %v50 = vld [vmem:[#allocation2 + $0x8] sm:$0xff]
    %v51 = vld [vmem:[#allocation2 + $0x18] sm:$0xff]
    %v52 = vld [vmem:[#allocation2 + $0x20] sm:$0xff]
    %53 = vst.msk [vmem:[#allocation3] sm:$0xff] %vm33, %v49
    %54 = vst.msk [vmem:[#allocation3 + $0x8] sm:$0xff] %vm33, %v50
    %55 = vst.msk [vmem:[#allocation3 + $0x10] sm:$0xff] %vm33, %v51
    %56 = vst.msk [vmem:[#allocation3 + $0x18] sm:$0xff] %vm33, %v52
    %v57 = vld [vmem:[#allocation2 + $0x1] sm:$0xff]
    %v58 = vld [vmem:[#allocation2 + $0x9] sm:$0xff]
    %v59 = vld [vmem:[#allocation2 + $0x19] sm:$0xff]
    %v60 = vld [vmem:[#allocation2 + $0x21] sm:$0xff]
    %65 = vrot.lane.b32.xlu0 %v57, 32
    %v66 = vpop.permute.xlu0 %65
    %67 = vrot.lane.b32.xlu0 %v58, 32
    %v68 = vpop.permute.xlu0 %67
    %69 = vrot.lane.b32.xlu0 %v59, 32
    %v70 = vpop.permute.xlu0 %69
    %71 = vrot.lane.b32.xlu0 %v60, 32
    %v72 = vpop.permute.xlu0 %71
    %vm77 = vcmask 523520
    %78 = vst.msk [vmem:[#allocation3] sm:$0xff] %vm77, %v66
    %79 = vst.msk [vmem:[#allocation3 + $0x8] sm:$0xff] %vm77, %v68
    %80 = vst.msk [vmem:[#allocation3 + $0x10] sm:$0xff] %vm77, %v70
    %81 = vst.msk [vmem:[#allocation3 + $0x18] sm:$0xff] %vm77, %v72
    %v82 = vld [vmem:[#allocation2 + $0x2] sm:$0xff]
    %v83 = vld [vmem:[#allocation2 + $0xa] sm:$0xff]
    %v84 = vld [vmem:[#allocation2 + $0x1a] sm:$0xff]
    %v85 = vld [vmem:[#allocation2 + $0x22] sm:$0xff]
    %90 = vrot.lane.b32.xlu0 %v82, 64
    %v91 = vpop.permute.xlu0 %90
    %92 = vrot.lane.b32.xlu0 %v83, 64
    %v93 = vpop.permute.xlu0 %92
    %94 = vrot.lane.b32.xlu0 %v84, 64
    %v95 = vpop.permute.xlu0 %94
    %96 = vrot.lane.b32.xlu0 %v85, 64
    %v97 = vpop.permute.xlu0 %96
    %vm102 = vcmask 785920
    %103 = vst.msk [vmem:[#allocation3] sm:$0xff] %vm102, %v91
    %104 = vst.msk [vmem:[#allocation3 + $0x8] sm:$0xff] %vm102, %v93
    %105 = vst.msk [vmem:[#allocation3 + $0x10] sm:$0xff] %vm102, %v95
    %106 = vst.msk [vmem:[#allocation3 + $0x18] sm:$0xff] %vm102, %v97
    %v107 = vld [vmem:[#allocation3] sm:$0xff]
    %v108 = vld [vmem:[#allocation3 + $0x8] sm:$0xff]
    %v109 = vld [vmem:[#allocation3 + $0x10] sm:$0xff]
    %v110 = vld [vmem:[#allocation3 + $0x18] sm:$0xff]
    %v111 = vld [vmem:[%s1] sm:$0xff]
    %v112 = vld [vmem:[%s1 + $0x8] sm:$0xff]
    %v113 = vld [vmem:[%s1 + $0x10] sm:$0xff]
    %v114 = vld [vmem:[%s1 + $0x18] sm:$0xff]
    %v115 = vld [vmem:[%s1 + $0x20] sm:$0xff]
    %v116 = vld [vmem:[%s1 + $0x28] sm:$0xff]
    %v117 = vld [vmem:[%s1 + $0x30] sm:$0xff]
    %v118 = vld [vmem:[%s1 + $0x38] sm:$0xff]
    %v119 = vld [vmem:[%s1 + $0x40] sm:$0xff]
    %v120 = vld [vmem:[%s1 + $0x48] sm:$0xff]
    %v121 = vld [vmem:[%s1 + $0x50] sm:$0xff]
    %v122 = vld [vmem:[%s1 + $0x58] sm:$0xff]
    %v123 = vld [vmem:[%s2] sm:$0x1]
    %v125 = vlaneseq
    %v126 = vshrl.u32 %v125, 7
    %v127 = vsub.s32 0, %v126
    %v128 = vrot.slane %v123, %v127
    %vm130 = vcmask 785408
    %v132 = vsel %vm130, %v107, 0
    %v135 = vsel %vm130, %v108, 0
    %v138 = vsel %vm130, %v109, 0
    %v141 = vsel %vm130, %v110, 0
    %143 = vmatprep.subr.mxu0 0.0
    %v144 = vand.u32 %v111, 4294901760
    %145 = vmatpush1.msra.mxu0 %v144
    %146 = vmatprep.subr.mxu0 0.0
    %v147 = vand.u32 %v112, 4294901760
    %148 = vmatpush1.msra.mxu0 %v147
    %149 = vmatprep.subr.mxu0 0.0
    %v150 = vand.u32 %v113, 4294901760
    %151 = vmatpush1.msra.mxu0 %v150
    %152 = vmatprep.subr.mxu0 0.0
    %v153 = vand.u32 %v114, 4294901760
    %154 = vmatpush1.msra.mxu0 %v153
    %155 = vmatprep.subr.mxu0 0.0
    %v156 = vand.u32 %v115, 4294901760
    %157 = vmatpush1.msra.mxu0 %v156
    %158 = vmatprep.subr.mxu0 0.0
    %v159 = vand.u32 %v116, 4294901760
    %160 = vmatpush1.msra.mxu0 %v159
    %161 = vmatprep.subr.mxu0 0.0
    %v162 = vand.u32 %v117, 4294901760
    %163 = vmatpush1.msra.mxu0 %v162
    %164 = vmatprep.subr.mxu0 0.0
    %v165 = vand.u32 %v118, 4294901760
    %166 = vmatpush1.msra.mxu0 %v165
    %167 = vmatprep.subr.mxu0 0.0
    %v168 = vand.u32 %v119, 4294901760
    %169 = vmatpush1.msra.mxu0 %v168
    %170 = vmatprep.subr.mxu0 0.0
    %v171 = vand.u32 %v120, 4294901760
    %172 = vmatpush1.msra.mxu0 %v171
    %173 = vmatprep.subr.mxu0 0.0
    %v174 = vand.u32 %v121, 4294901760
    %175 = vmatpush1.msra.mxu0 %v174
    %176 = vmatprep.subr.mxu0 0.0
    %v177 = vand.u32 %v122, 4294901760
    %178 = vmatpush1.msra.mxu0 %v177
    %179 = vmatprep.subr.mxu0 0.0
    %180 = vmatpush1.msra.mxu0 0.0
    %181 = vmatprep.subr.mxu0 0.0
    %182 = vmatpush1.msra.mxu0 0.0
    %183 = vmatprep.subr.mxu0 0.0
    %184 = vmatpush1.msra.mxu0 0.0
    %185 = vmatprep.subr.mxu0 0.0
    %186 = vmatpush1.msra.mxu0 0.0
    %187 = vmatprep.subr.mxu0 0.0
    %188 = vmatpush1.msra.mxu0 0.0
    %189 = vmatprep.subr.mxu0 0.0
    %190 = vmatpush1.msra.mxu0 0.0
    %191 = vmatprep.subr.mxu0 0.0
    %192 = vmatpush1.msra.mxu0 0.0
    %193 = vmatprep.subr.mxu0 0.0
    %194 = vmatpush1.msra.mxu0 0.0
    %195 = vmatprep.subr.mxu0 0.0
    %196 = vmatpush1.msra.mxu0 0.0
    %197 = vmatprep.subr.mxu0 0.0
    %198 = vmatpush1.msra.mxu0 0.0
    %199 = vmatprep.subr.mxu0 0.0
    %200 = vmatpush1.msra.mxu0 0.0
    %201 = vmatprep.subr.mxu0 0.0
    %202 = vmatpush1.msra.mxu0 0.0
    %203 = vmatprep.subr.mxu0 0.0
    %204 = vmatpush1.msra.mxu0 0.0
    %205 = vmatprep.subr.mxu0 0.0
    %206 = vmatpush1.msra.mxu0 0.0
    %207 = vmatprep.subr.mxu0 0.0
    %208 = vmatpush1.msra.mxu0 0.0
    %209 = vmatprep.subr.mxu0 0.0
    %210 = vmatpush1.msra.mxu0 0.0
    %211 = vmatprep.subr.mxu0 0.0
    %212 = vmatpush1.msra.mxu0 0.0
    %213 = vmatprep.subr.mxu0 0.0
    %214 = vmatpush1.msra.mxu0 0.0
    %215 = vmatprep.subr.mxu0 0.0
    %216 = vmatpush1.msra.mxu0 0.0
    %217 = vmatprep.subr.mxu0 0.0
    %218 = vmatpush1.msra.mxu0 0.0
    %219 = vmatprep.mubr.f32.mxu0 0.0
    %v220 = vand.u32 %v132, 4294901760
    %v221 = vsub.f32 %v132, %v220
    %v222 = vand.u32 %v221, 4294901760
    %v223 = vsub.f32 %v221, %v222
    %v224 = vand.u32 %v223, 4294901760
    %225 = vmatmul.mubr.f32.gmra.mrb[0].mxu0 %v224
    %v226 = vpop.f32.mrb[0].mxu0
    %v227 = vadd.f32 %v128, %v226
    %v228 = vpop.f32.mrb[0].mxu0
    %229 = vmatprep.mubr.f32.mxu0 0.0
    %v230 = vand.u32 %v135, 4294901760
    %v231 = vsub.f32 %v135, %v230
    %v232 = vand.u32 %v231, 4294901760
    %v233 = vsub.f32 %v231, %v232
    %v234 = vand.u32 %v233, 4294901760
    %235 = vmatmul.mubr.f32.gmra.mrb[0].mxu0 %v234
    %v236 = vpop.f32.mrb[0].mxu0
    %v237 = vadd.f32 %v128, %v236
    %v238 = vpop.f32.mrb[0].mxu0
    %239 = vmatprep.mubr.f32.mxu0 0.0
    %v240 = vand.u32 %v138, 4294901760
    %v241 = vsub.f32 %v138, %v240
    %v242 = vand.u32 %v241, 4294901760
    %v243 = vsub.f32 %v241, %v242
    %v244 = vand.u32 %v243, 4294901760
    %245 = vmatmul.mubr.f32.gmra.mrb[0].mxu0 %v244
    %v246 = vpop.f32.mrb[0].mxu0
    %v247 = vadd.f32 %v128, %v246
    %v248 = vpop.f32.mrb[0].mxu0
    %249 = vmatprep.mubr.f32.mxu0 0.0
    %v250 = vand.u32 %v141, 4294901760
    %v251 = vsub.f32 %v141, %v250
    %v252 = vand.u32 %v251, 4294901760
    %v253 = vsub.f32 %v251, %v252
    %v254 = vand.u32 %v253, 4294901760
    %255 = vmatmul.mubr.f32.gmra.mrb[0].mxu0 %v254
    %v256 = vpop.f32.mrb[0].mxu0
    %v257 = vadd.f32 %v128, %v256
    %v258 = vpop.f32.mrb[0].mxu0
    %259 = vdwg.mxu0
    %260 = vmatprep.subr.mxu0 0.0
    %v261 = vand.u32 %v111, 4294901760
    %v262 = vsub.f32 %v111, %v261
    %v263 = vand.u32 %v262, 4294901760
    %v264 = vsub.f32 %v262, %v263
    %v265 = vand.u32 %v264, 4294901760
    %266 = vmatpush1.msra.mxu0 %v265
    %267 = vmatprep.subr.mxu0 0.0
    %v268 = vand.u32 %v112, 4294901760
    %v269 = vsub.f32 %v112, %v268
    %v270 = vand.u32 %v269, 4294901760
    %v271 = vsub.f32 %v269, %v270
    %v272 = vand.u32 %v271, 4294901760
    %273 = vmatpush1.msra.mxu0 %v272
    %274 = vmatprep.subr.mxu0 0.0
    %v275 = vand.u32 %v113, 4294901760
    %v276 = vsub.f32 %v113, %v275
    %v277 = vand.u32 %v276, 4294901760
    %v278 = vsub.f32 %v276, %v277
    %v279 = vand.u32 %v278, 4294901760
    %280 = vmatpush1.msra.mxu0 %v279
    %281 = vmatprep.subr.mxu0 0.0
    %v282 = vand.u32 %v114, 4294901760
    %v283 = vsub.f32 %v114, %v282
    %v284 = vand.u32 %v283, 4294901760
    %v285 = vsub.f32 %v283, %v284
    %v286 = vand.u32 %v285, 4294901760
    %287 = vmatpush1.msra.mxu0 %v286
    %288 = vmatprep.subr.mxu0 0.0
    %v289 = vand.u32 %v115, 4294901760
    %v290 = vsub.f32 %v115, %v289
    %v291 = vand.u32 %v290, 4294901760
    %v292 = vsub.f32 %v290, %v291
    %v293 = vand.u32 %v292, 4294901760
    %294 = vmatpush1.msra.mxu0 %v293
    %295 = vmatprep.subr.mxu0 0.0
    %v296 = vand.u32 %v116, 4294901760
    %v297 = vsub.f32 %v116, %v296
    %v298 = vand.u32 %v297, 4294901760
    %v299 = vsub.f32 %v297, %v298
    %v300 = vand.u32 %v299, 4294901760
    %301 = vmatpush1.msra.mxu0 %v300
    %302 = vmatprep.subr.mxu0 0.0
    %v303 = vand.u32 %v117, 4294901760
    %v304 = vsub.f32 %v117, %v303
    %v305 = vand.u32 %v304, 4294901760
    %v306 = vsub.f32 %v304, %v305
    %v307 = vand.u32 %v306, 4294901760
    %308 = vmatpush1.msra.mxu0 %v307
    %309 = vmatprep.subr.mxu0 0.0
    %v310 = vand.u32 %v118, 4294901760
    %v311 = vsub.f32 %v118, %v310
    %v312 = vand.u32 %v311, 4294901760
    %v313 = vsub.f32 %v311, %v312
    %v314 = vand.u32 %v313, 4294901760
    %315 = vmatpush1.msra.mxu0 %v314
    %316 = vmatprep.subr.mxu0 0.0
    %v317 = vand.u32 %v119, 4294901760
    %v318 = vsub.f32 %v119, %v317
    %v319 = vand.u32 %v318, 4294901760
    %v320 = vsub.f32 %v318, %v319
    %v321 = vand.u32 %v320, 4294901760
    %322 = vmatpush1.msra.mxu0 %v321
    %323 = vmatprep.subr.mxu0 0.0
    %v324 = vand.u32 %v120, 4294901760
    %v325 = vsub.f32 %v120, %v324
    %v326 = vand.u32 %v325, 4294901760
    %v327 = vsub.f32 %v325, %v326
    %v328 = vand.u32 %v327, 4294901760
    %329 = vmatpush1.msra.mxu0 %v328
    %330 = vmatprep.subr.mxu0 0.0
    %v331 = vand.u32 %v121, 4294901760
    %v332 = vsub.f32 %v121, %v331
    %v333 = vand.u32 %v332, 4294901760
    %v334 = vsub.f32 %v332, %v333
    %v335 = vand.u32 %v334, 4294901760
    %336 = vmatpush1.msra.mxu0 %v335
    %337 = vmatprep.subr.mxu0 0.0
    %v338 = vand.u32 %v122, 4294901760
    %v339 = vsub.f32 %v122, %v338
    %v340 = vand.u32 %v339, 4294901760
    %v341 = vsub.f32 %v339, %v340
    %v342 = vand.u32 %v341, 4294901760
    %343 = vmatpush1.msra.mxu0 %v342
    %344 = vmatprep.subr.mxu0 0.0
    %345 = vmatpush1.msra.mxu0 0.0
    %346 = vmatprep.subr.mxu0 0.0
    %347 = vmatpush1.msra.mxu0 0.0
    %348 = vmatprep.subr.mxu0 0.0
    %349 = vmatpush1.msra.mxu0 0.0
    %350 = vmatprep.subr.mxu0 0.0
    %351 = vmatpush1.msra.mxu0 0.0
    %352 = vmatprep.subr.mxu0 0.0
    %353 = vmatpush1.msra.mxu0 0.0
    %354 = vmatprep.subr.mxu0 0.0
    %355 = vmatpush1.msra.mxu0 0.0
    %356 = vmatprep.subr.mxu0 0.0
    %357 = vmatpush1.msra.mxu0 0.0
    %358 = vmatprep.subr.mxu0 0.0
    %359 = vmatpush1.msra.mxu0 0.0
    %360 = vmatprep.subr.mxu0 0.0
    %361 = vmatpush1.msra.mxu0 0.0
    %362 = vmatprep.subr.mxu0 0.0
    %363 = vmatpush1.msra.mxu0 0.0
    %364 = vmatprep.subr.mxu0 0.0
    %365 = vmatpush1.msra.mxu0 0.0
    %366 = vmatprep.subr.mxu0 0.0
    %367 = vmatpush1.msra.mxu0 0.0
    %368 = vmatprep.subr.mxu0 0.0
    %369 = vmatpush1.msra.mxu0 0.0
    %370 = vmatprep.subr.mxu0 0.0
    %371 = vmatpush1.msra.mxu0 0.0
    %372 = vmatprep.subr.mxu0 0.0
    %373 = vmatpush1.msra.mxu0 0.0
    %374 = vmatprep.subr.mxu0 0.0
    %375 = vmatpush1.msra.mxu0 0.0
    %376 = vmatprep.subr.mxu0 0.0
    %377 = vmatpush1.msra.mxu0 0.0
    %378 = vmatprep.subr.mxu0 0.0
    %379 = vmatpush1.msra.mxu0 0.0
    %380 = vmatprep.subr.mxu0 0.0
    %381 = vmatpush1.msra.mxu0 0.0
    %382 = vmatprep.subr.mxu0 0.0
    %383 = vmatpush1.msra.mxu0 0.0
    %384 = vmatprep.mubr.f32.mxu0 0.0
    %v385 = vand.u32 %v132, 4294901760
    %386 = vmatmul.mubr.f32.gmra.mrb[0].mxu0 %v385
    %v387 = vpop.f32.mrb[0].mxu0
    %v388 = vadd.f32 %v227, %v387
    %v389 = vpop.f32.mrb[0].mxu0
    %390 = vmatprep.mubr.f32.mxu0 0.0
    %v391 = vand.u32 %v135, 4294901760
    %392 = vmatmul.mubr.f32.gmra.mrb[0].mxu0 %v391
    %v393 = vpop.f32.mrb[0].mxu0
    %v394 = vadd.f32 %v237, %v393
    %v395 = vpop.f32.mrb[0].mxu0
    %396 = vmatprep.mubr.f32.mxu0 0.0
    %v397 = vand.u32 %v138, 4294901760
    %398 = vmatmul.mubr.f32.gmra.mrb[0].mxu0 %v397
    %v399 = vpop.f32.mrb[0].mxu0
    %v400 = vadd.f32 %v247, %v399
    %v401 = vpop.f32.mrb[0].mxu0
    %402 = vmatprep.mubr.f32.mxu0 0.0
    %v403 = vand.u32 %v141, 4294901760
    %404 = vmatmul.mubr.f32.gmra.mrb[0].mxu0 %v403
    %v405 = vpop.f32.mrb[0].mxu0
    %v406 = vadd.f32 %v257, %v405
    %v407 = vpop.f32.mrb[0].mxu0
    %408 = vdwg.mxu0
    %409 = vmatprep.subr.mxu0 0.0
    %v410 = vand.u32 %v111, 4294901760
    %v411 = vsub.f32 %v111, %v410
    %412 = vmatpush1.msra.mxu0 %v411
    %413 = vmatprep.subr.mxu0 0.0
    %v414 = vand.u32 %v112, 4294901760
    %v415 = vsub.f32 %v112, %v414
    %416 = vmatpush1.msra.mxu0 %v415
    %417 = vmatprep.subr.mxu0 0.0
    %v418 = vand.u32 %v113, 4294901760
    %v419 = vsub.f32 %v113, %v418
    %420 = vmatpush1.msra.mxu0 %v419
    %421 = vmatprep.subr.mxu0 0.0
    %v422 = vand.u32 %v114, 4294901760
    %v423 = vsub.f32 %v114, %v422
    %424 = vmatpush1.msra.mxu0 %v423
    %425 = vmatprep.subr.mxu0 0.0
    %v426 = vand.u32 %v115, 4294901760
    %v427 = vsub.f32 %v115, %v426
    %428 = vmatpush1.msra.mxu0 %v427
    %429 = vmatprep.subr.mxu0 0.0
    %v430 = vand.u32 %v116, 4294901760
    %v431 = vsub.f32 %v116, %v430
    %432 = vmatpush1.msra.mxu0 %v431
    %433 = vmatprep.subr.mxu0 0.0
    %v434 = vand.u32 %v117, 4294901760
    %v435 = vsub.f32 %v117, %v434
    %436 = vmatpush1.msra.mxu0 %v435
    %437 = vmatprep.subr.mxu0 0.0
    %v438 = vand.u32 %v118, 4294901760
    %v439 = vsub.f32 %v118, %v438
    %440 = vmatpush1.msra.mxu0 %v439
    %441 = vmatprep.subr.mxu0 0.0
    %v442 = vand.u32 %v119, 4294901760
    %v443 = vsub.f32 %v119, %v442
    %444 = vmatpush1.msra.mxu0 %v443
    %445 = vmatprep.subr.mxu0 0.0
    %v446 = vand.u32 %v120, 4294901760
    %v447 = vsub.f32 %v120, %v446
    %448 = vmatpush1.msra.mxu0 %v447
    %449 = vmatprep.subr.mxu0 0.0
    %v450 = vand.u32 %v121, 4294901760
    %v451 = vsub.f32 %v121, %v450
    %452 = vmatpush1.msra.mxu0 %v451
    %453 = vmatprep.subr.mxu0 0.0
    %v454 = vand.u32 %v122, 4294901760
    %v455 = vsub.f32 %v122, %v454
    %456 = vmatpush1.msra.mxu0 %v455
    %457 = vmatprep.subr.mxu0 0.0
    %458 = vmatpush1.msra.mxu0 0.0
    %459 = vmatprep.subr.mxu0 0.0
    %460 = vmatpush1.msra.mxu0 0.0
    %461 = vmatprep.subr.mxu0 0.0
    %462 = vmatpush1.msra.mxu0 0.0
    %463 = vmatprep.subr.mxu0 0.0
    %464 = vmatpush1.msra.mxu0 0.0
    %465 = vmatprep.subr.mxu0 0.0
    %466 = vmatpush1.msra.mxu0 0.0
    %467 = vmatprep.subr.mxu0 0.0
    %468 = vmatpush1.msra.mxu0 0.0
    %469 = vmatprep.subr.mxu0 0.0
    %470 = vmatpush1.msra.mxu0 0.0
    %471 = vmatprep.subr.mxu0 0.0
    %472 = vmatpush1.msra.mxu0 0.0
    %473 = vmatprep.subr.mxu0 0.0
    %474 = vmatpush1.msra.mxu0 0.0
    %475 = vmatprep.subr.mxu0 0.0
    %476 = vmatpush1.msra.mxu0 0.0
    %477 = vmatprep.subr.mxu0 0.0
    %478 = vmatpush1.msra.mxu0 0.0
    %479 = vmatprep.subr.mxu0 0.0
    %480 = vmatpush1.msra.mxu0 0.0
    %481 = vmatprep.subr.mxu0 0.0
    %482 = vmatpush1.msra.mxu0 0.0
    %483 = vmatprep.subr.mxu0 0.0
    %484 = vmatpush1.msra.mxu0 0.0
    %485 = vmatprep.subr.mxu0 0.0
    %486 = vmatpush1.msra.mxu0 0.0
    %487 = vmatprep.subr.mxu0 0.0
    %488 = vmatpush1.msra.mxu0 0.0
    %489 = vmatprep.subr.mxu0 0.0
    %490 = vmatpush1.msra.mxu0 0.0
    %491 = vmatprep.subr.mxu0 0.0
    %492 = vmatpush1.msra.mxu0 0.0
    %493 = vmatprep.subr.mxu0 0.0
    %494 = vmatpush1.msra.mxu0 0.0
    %495 = vmatprep.subr.mxu0 0.0
    %496 = vmatpush1.msra.mxu0 0.0
    %497 = vmatprep.mubr.f32.mxu0 0.0
    %v498 = vand.u32 %v132, 4294901760
    %v499 = vsub.f32 %v132, %v498
    %500 = vmatmul.mubr.f32.gmra.mrb[0].mxu0 %v499
    %v501 = vpop.f32.mrb[0].mxu0
    %v502 = vadd.f32 %v388, %v501
    %v503 = vpop.f32.mrb[0].mxu0
    %504 = vmatprep.mubr.f32.mxu0 0.0
    %v505 = vand.u32 %v135, 4294901760
    %v506 = vsub.f32 %v135, %v505
    %507 = vmatmul.mubr.f32.gmra.mrb[0].mxu0 %v506
    %v508 = vpop.f32.mrb[0].mxu0
    %v509 = vadd.f32 %v394, %v508
    %v510 = vpop.f32.mrb[0].mxu0
    %511 = vmatprep.mubr.f32.mxu0 0.0
    %v512 = vand.u32 %v138, 4294901760
    %v513 = vsub.f32 %v138, %v512
    %514 = vmatmul.mubr.f32.gmra.mrb[0].mxu0 %v513
    %v515 = vpop.f32.mrb[0].mxu0
    %v516 = vadd.f32 %v400, %v515
    %v517 = vpop.f32.mrb[0].mxu0
    %518 = vmatprep.mubr.f32.mxu0 0.0
    %v519 = vand.u32 %v141, 4294901760
    %v520 = vsub.f32 %v141, %v519
    %521 = vmatmul.mubr.f32.gmra.mrb[0].mxu0 %v520
    %v522 = vpop.f32.mrb[0].mxu0
    %v523 = vadd.f32 %v406, %v522
    %v524 = vpop.f32.mrb[0].mxu0
    %525 = vdwg.mxu0
    %526 = vmatprep.subr.mxu0 0.0
    %v527 = vand.u32 %v111, 4294901760
    %528 = vmatpush1.msra.mxu0 %v527
    %529 = vmatprep.subr.mxu0 0.0
    %v530 = vand.u32 %v112, 4294901760
    %531 = vmatpush1.msra.mxu0 %v530
    %532 = vmatprep.subr.mxu0 0.0
    %v533 = vand.u32 %v113, 4294901760
    %534 = vmatpush1.msra.mxu0 %v533
    %535 = vmatprep.subr.mxu0 0.0
    %v536 = vand.u32 %v114, 4294901760
    %537 = vmatpush1.msra.mxu0 %v536
    %538 = vmatprep.subr.mxu0 0.0
    %v539 = vand.u32 %v115, 4294901760
    %540 = vmatpush1.msra.mxu0 %v539
    %541 = vmatprep.subr.mxu0 0.0
    %v542 = vand.u32 %v116, 4294901760
    %543 = vmatpush1.msra.mxu0 %v542
    %544 = vmatprep.subr.mxu0 0.0
    %v545 = vand.u32 %v117, 4294901760
    %546 = vmatpush1.msra.mxu0 %v545
    %547 = vmatprep.subr.mxu0 0.0
    %v548 = vand.u32 %v118, 4294901760
    %549 = vmatpush1.msra.mxu0 %v548
    %550 = vmatprep.subr.mxu0 0.0
    %v551 = vand.u32 %v119, 4294901760
    %552 = vmatpush1.msra.mxu0 %v551
    %553 = vmatprep.subr.mxu0 0.0
    %v554 = vand.u32 %v120, 4294901760
    %555 = vmatpush1.msra.mxu0 %v554
    %556 = vmatprep.subr.mxu0 0.0
    %v557 = vand.u32 %v121, 4294901760
    %558 = vmatpush1.msra.mxu0 %v557
    %559 = vmatprep.subr.mxu0 0.0
    %v560 = vand.u32 %v122, 4294901760
    %561 = vmatpush1.msra.mxu0 %v560
    %562 = vmatprep.subr.mxu0 0.0
    %563 = vmatpush1.msra.mxu0 0.0
    %564 = vmatprep.subr.mxu0 0.0
    %565 = vmatpush1.msra.mxu0 0.0
    %566 = vmatprep.subr.mxu0 0.0
    %567 = vmatpush1.msra.mxu0 0.0
    %568 = vmatprep.subr.mxu0 0.0
    %569 = vmatpush1.msra.mxu0 0.0
    %570 = vmatprep.subr.mxu0 0.0
    %571 = vmatpush1.msra.mxu0 0.0
    %572 = vmatprep.subr.mxu0 0.0
    %573 = vmatpush1.msra.mxu0 0.0
    %574 = vmatprep.subr.mxu0 0.0
    %575 = vmatpush1.msra.mxu0 0.0
    %576 = vmatprep.subr.mxu0 0.0
    %577 = vmatpush1.msra.mxu0 0.0
    %578 = vmatprep.subr.mxu0 0.0
    %579 = vmatpush1.msra.mxu0 0.0
    %580 = vmatprep.subr.mxu0 0.0
    %581 = vmatpush1.msra.mxu0 0.0
    %582 = vmatprep.subr.mxu0 0.0
    %583 = vmatpush1.msra.mxu0 0.0
    %584 = vmatprep.subr.mxu0 0.0
    %585 = vmatpush1.msra.mxu0 0.0
    %586 = vmatprep.subr.mxu0 0.0
    %587 = vmatpush1.msra.mxu0 0.0
    %588 = vmatprep.subr.mxu0 0.0
    %589 = vmatpush1.msra.mxu0 0.0
    %590 = vmatprep.subr.mxu0 0.0
    %591 = vmatpush1.msra.mxu0 0.0
    %592 = vmatprep.subr.mxu0 0.0
    %593 = vmatpush1.msra.mxu0 0.0
    %594 = vmatprep.subr.mxu0 0.0
    %595 = vmatpush1.msra.mxu0 0.0
    %596 = vmatprep.subr.mxu0 0.0
    %597 = vmatpush1.msra.mxu0 0.0
    %598 = vmatprep.subr.mxu0 0.0
    %599 = vmatpush1.msra.mxu0 0.0
    %600 = vmatprep.subr.mxu0 0.0
    %601 = vmatpush1.msra.mxu0 0.0
    %602 = vmatprep.mubr.f32.mxu0 0.0
    %v603 = vand.u32 %v132, 4294901760
    %v604 = vsub.f32 %v132, %v603
    %v605 = vand.u32 %v604, 4294901760
    %606 = vmatmul.mubr.f32.gmra.mrb[0].mxu0 %v605
    %v607 = vpop.f32.mrb[0].mxu0
    %v608 = vadd.f32 %v502, %v607
    %v609 = vpop.f32.mrb[0].mxu0
    %610 = vmatprep.mubr.f32.mxu0 0.0
    %v611 = vand.u32 %v135, 4294901760
    %v612 = vsub.f32 %v135, %v611
    %v613 = vand.u32 %v612, 4294901760
    %614 = vmatmul.mubr.f32.gmra.mrb[0].mxu0 %v613
    %v615 = vpop.f32.mrb[0].mxu0
    %v616 = vadd.f32 %v509, %v615
    %v617 = vpop.f32.mrb[0].mxu0
    %618 = vmatprep.mubr.f32.mxu0 0.0
    %v619 = vand.u32 %v138, 4294901760
    %v620 = vsub.f32 %v138, %v619
    %v621 = vand.u32 %v620, 4294901760
    %622 = vmatmul.mubr.f32.gmra.mrb[0].mxu0 %v621
    %v623 = vpop.f32.mrb[0].mxu0
    %v624 = vadd.f32 %v516, %v623
    %v625 = vpop.f32.mrb[0].mxu0
    %626 = vmatprep.mubr.f32.mxu0 0.0
    %v627 = vand.u32 %v141, 4294901760
    %v628 = vsub.f32 %v141, %v627
    %v629 = vand.u32 %v628, 4294901760
    %630 = vmatmul.mubr.f32.gmra.mrb[0].mxu0 %v629
    %v631 = vpop.f32.mrb[0].mxu0
    %v632 = vadd.f32 %v523, %v631
    %v633 = vpop.f32.mrb[0].mxu0
    %634 = vdwg.mxu0
    %635 = vmatprep.subr.mxu0 0.0
    %v636 = vand.u32 %v111, 4294901760
    %v637 = vsub.f32 %v111, %v636
    %v638 = vand.u32 %v637, 4294901760
    %639 = vmatpush1.msra.mxu0 %v638
    %640 = vmatprep.subr.mxu0 0.0
    %v641 = vand.u32 %v112, 4294901760
    %v642 = vsub.f32 %v112, %v641
    %v643 = vand.u32 %v642, 4294901760
    %644 = vmatpush1.msra.mxu0 %v643
    %645 = vmatprep.subr.mxu0 0.0
    %v646 = vand.u32 %v113, 4294901760
    %v647 = vsub.f32 %v113, %v646
    %v648 = vand.u32 %v647, 4294901760
    %649 = vmatpush1.msra.mxu0 %v648
    %650 = vmatprep.subr.mxu0 0.0
    %v651 = vand.u32 %v114, 4294901760
    %v652 = vsub.f32 %v114, %v651
    %v653 = vand.u32 %v652, 4294901760
    %654 = vmatpush1.msra.mxu0 %v653
    %655 = vmatprep.subr.mxu0 0.0
    %v656 = vand.u32 %v115, 4294901760
    %v657 = vsub.f32 %v115, %v656
    %v658 = vand.u32 %v657, 4294901760
    %659 = vmatpush1.msra.mxu0 %v658
    %660 = vmatprep.subr.mxu0 0.0
    %v661 = vand.u32 %v116, 4294901760
    %v662 = vsub.f32 %v116, %v661
    %v663 = vand.u32 %v662, 4294901760
    %664 = vmatpush1.msra.mxu0 %v663
    %665 = vmatprep.subr.mxu0 0.0
    %v666 = vand.u32 %v117, 4294901760
    %v667 = vsub.f32 %v117, %v666
    %v668 = vand.u32 %v667, 4294901760
    %669 = vmatpush1.msra.mxu0 %v668
    %670 = vmatprep.subr.mxu0 0.0
    %v671 = vand.u32 %v118, 4294901760
    %v672 = vsub.f32 %v118, %v671
    %v673 = vand.u32 %v672, 4294901760
    %674 = vmatpush1.msra.mxu0 %v673
    %675 = vmatprep.subr.mxu0 0.0
    %v676 = vand.u32 %v119, 4294901760
    %v677 = vsub.f32 %v119, %v676
    %v678 = vand.u32 %v677, 4294901760
    %679 = vmatpush1.msra.mxu0 %v678
    %680 = vmatprep.subr.mxu0 0.0
    %v681 = vand.u32 %v120, 4294901760
    %v682 = vsub.f32 %v120, %v681
    %v683 = vand.u32 %v682, 4294901760
    %684 = vmatpush1.msra.mxu0 %v683
    %685 = vmatprep.subr.mxu0 0.0
    %v686 = vand.u32 %v121, 4294901760
    %v687 = vsub.f32 %v121, %v686
    %v688 = vand.u32 %v687, 4294901760
    %689 = vmatpush1.msra.mxu0 %v688
    %690 = vmatprep.subr.mxu0 0.0
    %v691 = vand.u32 %v122, 4294901760
    %v692 = vsub.f32 %v122, %v691
    %v693 = vand.u32 %v692, 4294901760
    %694 = vmatpush1.msra.mxu0 %v693
    %695 = vmatprep.subr.mxu0 0.0
    %696 = vmatpush1.msra.mxu0 0.0
    %697 = vmatprep.subr.mxu0 0.0
    %698 = vmatpush1.msra.mxu0 0.0
    %699 = vmatprep.subr.mxu0 0.0
    %700 = vmatpush1.msra.mxu0 0.0
    %701 = vmatprep.subr.mxu0 0.0
    %702 = vmatpush1.msra.mxu0 0.0
    %703 = vmatprep.subr.mxu0 0.0
    %704 = vmatpush1.msra.mxu0 0.0
    %705 = vmatprep.subr.mxu0 0.0
    %706 = vmatpush1.msra.mxu0 0.0
    %707 = vmatprep.subr.mxu0 0.0
    %708 = vmatpush1.msra.mxu0 0.0
    %709 = vmatprep.subr.mxu0 0.0
    %710 = vmatpush1.msra.mxu0 0.0
    %711 = vmatprep.subr.mxu0 0.0
    %712 = vmatpush1.msra.mxu0 0.0
    %713 = vmatprep.subr.mxu0 0.0
    %714 = vmatpush1.msra.mxu0 0.0
    %715 = vmatprep.subr.mxu0 0.0
    %716 = vmatpush1.msra.mxu0 0.0
    %717 = vmatprep.subr.mxu0 0.0
    %718 = vmatpush1.msra.mxu0 0.0
    %719 = vmatprep.subr.mxu0 0.0
    %720 = vmatpush1.msra.mxu0 0.0
    %721 = vmatprep.subr.mxu0 0.0
    %722 = vmatpush1.msra.mxu0 0.0
    %723 = vmatprep.subr.mxu0 0.0
    %724 = vmatpush1.msra.mxu0 0.0
    %725 = vmatprep.subr.mxu0 0.0
    %726 = vmatpush1.msra.mxu0 0.0
    %727 = vmatprep.subr.mxu0 0.0
    %728 = vmatpush1.msra.mxu0 0.0
    %729 = vmatprep.subr.mxu0 0.0
    %730 = vmatpush1.msra.mxu0 0.0
    %731 = vmatprep.subr.mxu0 0.0
    %732 = vmatpush1.msra.mxu0 0.0
    %733 = vmatprep.subr.mxu0 0.0
    %734 = vmatpush1.msra.mxu0 0.0
    %735 = vmatprep.mubr.f32.mxu0 0.0
    %v736 = vand.u32 %v132, 4294901760
    %737 = vmatmul.mubr.f32.gmra.mrb[0].mxu0 %v736
    %v738 = vpop.f32.mrb[0].mxu0
    %v739 = vadd.f32 %v608, %v738
    %v740 = vpop.f32.mrb[0].mxu0
    %741 = vmatprep.mubr.f32.mxu0 0.0
    %v742 = vand.u32 %v135, 4294901760
    %743 = vmatmul.mubr.f32.gmra.mrb[0].mxu0 %v742
    %v744 = vpop.f32.mrb[0].mxu0
    %v745 = vadd.f32 %v616, %v744
    %v746 = vpop.f32.mrb[0].mxu0
    %747 = vmatprep.mubr.f32.mxu0 0.0
    %v748 = vand.u32 %v138, 4294901760
    %749 = vmatmul.mubr.f32.gmra.mrb[0].mxu0 %v748
    %v750 = vpop.f32.mrb[0].mxu0
    %v751 = vadd.f32 %v624, %v750
    %v752 = vpop.f32.mrb[0].mxu0
    %753 = vmatprep.mubr.f32.mxu0 0.0
    %v754 = vand.u32 %v141, 4294901760
    %755 = vmatmul.mubr.f32.gmra.mrb[0].mxu0 %v754
    %v756 = vpop.f32.mrb[0].mxu0
    %v757 = vadd.f32 %v632, %v756
    %v758 = vpop.f32.mrb[0].mxu0
    %759 = vdwg.mxu0
    %760 = vmatprep.subr.mxu0 0.0
    %v761 = vand.u32 %v111, 4294901760
    %762 = vmatpush1.msra.mxu0 %v761
    %763 = vmatprep.subr.mxu0 0.0
    %v764 = vand.u32 %v112, 4294901760
    %765 = vmatpush1.msra.mxu0 %v764
    %766 = vmatprep.subr.mxu0 0.0
    %v767 = vand.u32 %v113, 4294901760
    %768 = vmatpush1.msra.mxu0 %v767
    %769 = vmatprep.subr.mxu0 0.0
    %v770 = vand.u32 %v114, 4294901760
    %771 = vmatpush1.msra.mxu0 %v770
    %772 = vmatprep.subr.mxu0 0.0
    %v773 = vand.u32 %v115, 4294901760
    %774 = vmatpush1.msra.mxu0 %v773
    %775 = vmatprep.subr.mxu0 0.0
    %v776 = vand.u32 %v116, 4294901760
    %777 = vmatpush1.msra.mxu0 %v776
    %778 = vmatprep.subr.mxu0 0.0
    %v779 = vand.u32 %v117, 4294901760
    %780 = vmatpush1.msra.mxu0 %v779
    %781 = vmatprep.subr.mxu0 0.0
    %v782 = vand.u32 %v118, 4294901760
    %783 = vmatpush1.msra.mxu0 %v782
    %784 = vmatprep.subr.mxu0 0.0
    %v785 = vand.u32 %v119, 4294901760
    %786 = vmatpush1.msra.mxu0 %v785
    %787 = vmatprep.subr.mxu0 0.0
    %v788 = vand.u32 %v120, 4294901760
    %789 = vmatpush1.msra.mxu0 %v788
    %790 = vmatprep.subr.mxu0 0.0
    %v791 = vand.u32 %v121, 4294901760
    %792 = vmatpush1.msra.mxu0 %v791
    %793 = vmatprep.subr.mxu0 0.0
    %v794 = vand.u32 %v122, 4294901760
    %795 = vmatpush1.msra.mxu0 %v794
    %796 = vmatprep.subr.mxu0 0.0
    %797 = vmatpush1.msra.mxu0 0.0
    %798 = vmatprep.subr.mxu0 0.0
    %799 = vmatpush1.msra.mxu0 0.0
    %800 = vmatprep.subr.mxu0 0.0
    %801 = vmatpush1.msra.mxu0 0.0
    %802 = vmatprep.subr.mxu0 0.0
    %803 = vmatpush1.msra.mxu0 0.0
    %804 = vmatprep.subr.mxu0 0.0
    %805 = vmatpush1.msra.mxu0 0.0
    %806 = vmatprep.subr.mxu0 0.0
    %807 = vmatpush1.msra.mxu0 0.0
    %808 = vmatprep.subr.mxu0 0.0
    %809 = vmatpush1.msra.mxu0 0.0
    %810 = vmatprep.subr.mxu0 0.0
    %811 = vmatpush1.msra.mxu0 0.0
    %812 = vmatprep.subr.mxu0 0.0
    %813 = vmatpush1.msra.mxu0 0.0
    %814 = vmatprep.subr.mxu0 0.0
    %815 = vmatpush1.msra.mxu0 0.0
    %816 = vmatprep.subr.mxu0 0.0
    %817 = vmatpush1.msra.mxu0 0.0
    %818 = vmatprep.subr.mxu0 0.0
    %819 = vmatpush1.msra.mxu0 0.0
    %820 = vmatprep.subr.mxu0 0.0
    %821 = vmatpush1.msra.mxu0 0.0
    %822 = vmatprep.subr.mxu0 0.0
    %823 = vmatpush1.msra.mxu0 0.0
    %824 = vmatprep.subr.mxu0 0.0
    %825 = vmatpush1.msra.mxu0 0.0
    %826 = vmatprep.subr.mxu0 0.0
    %827 = vmatpush1.msra.mxu0 0.0
    %828 = vmatprep.subr.mxu0 0.0
    %829 = vmatpush1.msra.mxu0 0.0
    %830 = vmatprep.subr.mxu0 0.0
    %831 = vmatpush1.msra.mxu0 0.0
    %832 = vmatprep.subr.mxu0 0.0
    %833 = vmatpush1.msra.mxu0 0.0
    %834 = vmatprep.subr.mxu0 0.0
    %835 = vmatpush1.msra.mxu0 0.0
    %836 = vmatprep.mubr.f32.mxu0 0.0
    %v837 = vand.u32 %v132, 4294901760
    %838 = vmatmul.mubr.f32.gmra.mrb[0].mxu0 %v837
    %v839 = vpop.f32.mrb[0].mxu0
    %v840 = vadd.f32 %v739, %v839
    %v841 = vpop.f32.mrb[0].mxu0
    %842 = vmatprep.mubr.f32.mxu0 0.0
    %v843 = vand.u32 %v135, 4294901760
    %844 = vmatmul.mubr.f32.gmra.mrb[0].mxu0 %v843
    %v845 = vpop.f32.mrb[0].mxu0
    %v846 = vadd.f32 %v745, %v845
    %v847 = vpop.f32.mrb[0].mxu0
    %848 = vmatprep.mubr.f32.mxu0 0.0
    %v849 = vand.u32 %v138, 4294901760
    %850 = vmatmul.mubr.f32.gmra.mrb[0].mxu0 %v849
    %v851 = vpop.f32.mrb[0].mxu0
    %v852 = vadd.f32 %v751, %v851
    %v853 = vpop.f32.mrb[0].mxu0
    %854 = vmatprep.mubr.f32.mxu0 0.0
    %v855 = vand.u32 %v141, 4294901760
    %856 = vmatmul.mubr.f32.gmra.mrb[0].mxu0 %v855
    %v857 = vpop.f32.mrb[0].mxu0
    %v858 = vadd.f32 %v757, %v857
    %v859 = vpop.f32.mrb[0].mxu0
    %860 = vdwg.mxu0
    %v861 = vmax.f32 %v840, 0.0
    %v862 = vmax.f32 %v846, 0.0
    %v863 = vmax.f32 %v852, 0.0
    %v864 = vmax.f32 %v858, 0.0
    %865 = vst.msk [vmem:[#allocation2 + $0x1] sm:$0xff] %vm33, %v861
    %866 = vst.msk [vmem:[#allocation2 + $0x9] sm:$0xff] %vm33, %v862
    %867 = vst.msk [vmem:[#allocation2 + $0x19] sm:$0xff] %vm33, %v863
    %868 = vst.msk [vmem:[#allocation2 + $0x21] sm:$0xff] %vm33, %v864
    %v869 = vld [vmem:[#allocation2] sm:$0xff]
    %v870 = vld [vmem:[#allocation2 + $0x8] sm:$0xff]
    %v871 = vld [vmem:[#allocation2 + $0x18] sm:$0xff]
    %v872 = vld [vmem:[#allocation2 + $0x20] sm:$0xff]
    %873 = vst.msk [vmem:[#allocation3] sm:$0xff] %vm33, %v869
    %874 = vst.msk [vmem:[#allocation3 + $0x8] sm:$0xff] %vm33, %v870
    %875 = vst.msk [vmem:[#allocation3 + $0x10] sm:$0xff] %vm33, %v871
    %876 = vst.msk [vmem:[#allocation3 + $0x18] sm:$0xff] %vm33, %v872
    %v877 = vld [vmem:[#allocation2 + $0x1] sm:$0xff]
    %v878 = vld [vmem:[#allocation2 + $0x9] sm:$0xff]
    %v879 = vld [vmem:[#allocation2 + $0x19] sm:$0xff]
    %v880 = vld [vmem:[#allocation2 + $0x21] sm:$0xff]
    %885 = vrot.lane.b32.xlu0 %v877, 32
    %v886 = vpop.permute.xlu0 %885
    %887 = vrot.lane.b32.xlu0 %v878, 32
    %v888 = vpop.permute.xlu0 %887
    %889 = vrot.lane.b32.xlu0 %v879, 32
    %v890 = vpop.permute.xlu0 %889
    %891 = vrot.lane.b32.xlu0 %v880, 32
    %v892 = vpop.permute.xlu0 %891
    %897 = vst.msk [vmem:[#allocation3] sm:$0xff] %vm77, %v886
    %898 = vst.msk [vmem:[#allocation3 + $0x8] sm:$0xff] %vm77, %v888
    %899 = vst.msk [vmem:[#allocation3 + $0x10] sm:$0xff] %vm77, %v890
    %900 = vst.msk [vmem:[#allocation3 + $0x18] sm:$0xff] %vm77, %v892
    %v901 = vld [vmem:[#allocation2 + $0x2] sm:$0xff]
    %v902 = vld [vmem:[#allocation2 + $0xa] sm:$0xff]
    %v903 = vld [vmem:[#allocation2 + $0x1a] sm:$0xff]
    %v904 = vld [vmem:[#allocation2 + $0x22] sm:$0xff]
    %909 = vrot.lane.b32.xlu0 %v901, 64
    %v910 = vpop.permute.xlu0 %909
    %911 = vrot.lane.b32.xlu0 %v902, 64
    %v912 = vpop.permute.xlu0 %911
    %913 = vrot.lane.b32.xlu0 %v903, 64
    %v914 = vpop.permute.xlu0 %913
    %915 = vrot.lane.b32.xlu0 %v904, 64
    %v916 = vpop.permute.xlu0 %915
    %921 = vst.msk [vmem:[#allocation3] sm:$0xff] %vm102, %v910
    %922 = vst.msk [vmem:[#allocation3 + $0x8] sm:$0xff] %vm102, %v912
    %923 = vst.msk [vmem:[#allocation3 + $0x10] sm:$0xff] %vm102, %v914
    %924 = vst.msk [vmem:[#allocation3 + $0x18] sm:$0xff] %vm102, %v916
    %v925 = vld [vmem:[#allocation3] sm:$0xff]
    %v926 = vld [vmem:[#allocation3 + $0x8] sm:$0xff]
    %v927 = vld [vmem:[#allocation3 + $0x10] sm:$0xff]
    %v928 = vld [vmem:[#allocation3 + $0x18] sm:$0xff]
    %v929 = vld [vmem:[%s3] sm:$0xff]
    %v930 = vld [vmem:[%s3 + $0x8] sm:$0xff]
    %v931 = vld [vmem:[%s3 + $0x10] sm:$0xff]
    %v932 = vld [vmem:[%s3 + $0x18] sm:$0xff]
    %v933 = vld [vmem:[%s3 + $0x20] sm:$0xff]
    %v934 = vld [vmem:[%s3 + $0x28] sm:$0xff]
    %v935 = vld [vmem:[%s3 + $0x30] sm:$0xff]
    %v936 = vld [vmem:[%s3 + $0x38] sm:$0xff]
    %v937 = vld [vmem:[%s3 + $0x40] sm:$0xff]
    %v938 = vld [vmem:[%s3 + $0x48] sm:$0xff]
    %v939 = vld [vmem:[%s3 + $0x50] sm:$0xff]
    %v940 = vld [vmem:[%s3 + $0x58] sm:$0xff]
    %v941 = vld [vmem:[%s4] sm:$0x1]
    %v943 = vlaneseq
    %v944 = vshrl.u32 %v943, 7
    %v945 = vsub.s32 0, %v944
    %v946 = vrot.slane %v941, %v945
    %v949 = vsel %vm130, %v925, 0
    %v952 = vsel %vm130, %v926, 0
    %v955 = vsel %vm130, %v927, 0
    %v958 = vsel %vm130, %v928, 0
    %960 = vmatprep.subr.mxu0 0.0
    %v961 = vand.u32 %v929, 4294901760
    %962 = vmatpush1.msra.mxu0 %v961
    %963 = vmatprep.subr.mxu0 0.0
    %v964 = vand.u32 %v930, 4294901760
    %965 = vmatpush1.msra.mxu0 %v964
    %966 = vmatprep.subr.mxu0 0.0
    %v967 = vand.u32 %v931, 4294901760
    %968 = vmatpush1.msra.mxu0 %v967
    %969 = vmatprep.subr.mxu0 0.0
    %v970 = vand.u32 %v932, 4294901760
    %971 = vmatpush1.msra.mxu0 %v970
    %972 = vmatprep.subr.mxu0 0.0
    %v973 = vand.u32 %v933, 4294901760
    %974 = vmatpush1.msra.mxu0 %v973
    %975 = vmatprep.subr.mxu0 0.0
    %v976 = vand.u32 %v934, 4294901760
    %977 = vmatpush1.msra.mxu0 %v976
    %978 = vmatprep.subr.mxu0 0.0
    %v979 = vand.u32 %v935, 4294901760
    %980 = vmatpush1.msra.mxu0 %v979
    %981 = vmatprep.subr.mxu0 0.0
    %v982 = vand.u32 %v936, 4294901760
    %983 = vmatpush1.msra.mxu0 %v982
    %984 = vmatprep.subr.mxu0 0.0
    %v985 = vand.u32 %v937, 4294901760
    %986 = vmatpush1.msra.mxu0 %v985
    %987 = vmatprep.subr.mxu0 0.0
    %v988 = vand.u32 %v938, 4294901760
    %989 = vmatpush1.msra.mxu0 %v988
    %990 = vmatprep.subr.mxu0 0.0
    %v991 = vand.u32 %v939, 4294901760
    %992 = vmatpush1.msra.mxu0 %v991
    %993 = vmatprep.subr.mxu0 0.0
    %v994 = vand.u32 %v940, 4294901760
    %995 = vmatpush1.msra.mxu0 %v994
    %996 = vmatprep.subr.mxu0 0.0
    %997 = vmatpush1.msra.mxu0 0.0
    %998 = vmatprep.subr.mxu0 0.0
    %999 = vmatpush1.msra.mxu0 0.0
    %1000 = vmatprep.subr.mxu0 0.0
    %1001 = vmatpush1.msra.mxu0 0.0
    %1002 = vmatprep.subr.mxu0 0.0
    %1003 = vmatpush1.msra.mxu0 0.0
    %1004 = vmatprep.subr.mxu0 0.0
    %1005 = vmatpush1.msra.mxu0 0.0
    %1006 = vmatprep.subr.mxu0 0.0
    %1007 = vmatpush1.msra.mxu0 0.0
    %1008 = vmatprep.subr.mxu0 0.0
    %1009 = vmatpush1.msra.mxu0 0.0
    %1010 = vmatprep.subr.mxu0 0.0
    %1011 = vmatpush1.msra.mxu0 0.0
    %1012 = vmatprep.subr.mxu0 0.0
    %1013 = vmatpush1.msra.mxu0 0.0
    %1014 = vmatprep.subr.mxu0 0.0
    %1015 = vmatpush1.msra.mxu0 0.0
    %1016 = vmatprep.subr.mxu0 0.0
    %1017 = vmatpush1.msra.mxu0 0.0
    %1018 = vmatprep.subr.mxu0 0.0
    %1019 = vmatpush1.msra.mxu0 0.0
    %1020 = vmatprep.subr.mxu0 0.0
    %1021 = vmatpush1.msra.mxu0 0.0
    %1022 = vmatprep.subr.mxu0 0.0
    %1023 = vmatpush1.msra.mxu0 0.0
    %1024 = vmatprep.subr.mxu0 0.0
    %1025 = vmatpush1.msra.mxu0 0.0
    %1026 = vmatprep.subr.mxu0 0.0
    %1027 = vmatpush1.msra.mxu0 0.0
    %1028 = vmatprep.subr.mxu0 0.0
    %1029 = vmatpush1.msra.mxu0 0.0
    %1030 = vmatprep.subr.mxu0 0.0
    %1031 = vmatpush1.msra.mxu0 0.0
    %1032 = vmatprep.subr.mxu0 0.0
    %1033 = vmatpush1.msra.mxu0 0.0
    %1034 = vmatprep.subr.mxu0 0.0
    %1035 = vmatpush1.msra.mxu0 0.0
    %1036 = vmatprep.mubr.f32.mxu0 0.0
    %v1037 = vand.u32 %v949, 4294901760
    %v1038 = vsub.f32 %v949, %v1037
    %v1039 = vand.u32 %v1038, 4294901760
    %v1040 = vsub.f32 %v1038, %v1039
    %v1041 = vand.u32 %v1040, 4294901760
    %1042 = vmatmul.mubr.f32.gmra.mrb[0].mxu0 %v1041
    %v1043 = vpop.f32.mrb[0].mxu0
    %v1044 = vadd.f32 %v946, %v1043
    %v1045 = vpop.f32.mrb[0].mxu0
    %1046 = vmatprep.mubr.f32.mxu0 0.0
    %v1047 = vand.u32 %v952, 4294901760
    %v1048 = vsub.f32 %v952, %v1047
    %v1049 = vand.u32 %v1048, 4294901760
    %v1050 = vsub.f32 %v1048, %v1049
    %v1051 = vand.u32 %v1050, 4294901760
    %1052 = vmatmul.mubr.f32.gmra.mrb[0].mxu0 %v1051
    %v1053 = vpop.f32.mrb[0].mxu0
    %v1054 = vadd.f32 %v946, %v1053
    %v1055 = vpop.f32.mrb[0].mxu0
    %1056 = vmatprep.mubr.f32.mxu0 0.0
    %v1057 = vand.u32 %v955, 4294901760
    %v1058 = vsub.f32 %v955, %v1057
    %v1059 = vand.u32 %v1058, 4294901760
    %v1060 = vsub.f32 %v1058, %v1059
    %v1061 = vand.u32 %v1060, 4294901760
    %1062 = vmatmul.mubr.f32.gmra.mrb[0].mxu0 %v1061
    %v1063 = vpop.f32.mrb[0].mxu0
    %v1064 = vadd.f32 %v946, %v1063
    %v1065 = vpop.f32.mrb[0].mxu0
    %1066 = vmatprep.mubr.f32.mxu0 0.0
    %v1067 = vand.u32 %v958, 4294901760
    %v1068 = vsub.f32 %v958, %v1067
    %v1069 = vand.u32 %v1068, 4294901760
    %v1070 = vsub.f32 %v1068, %v1069
    %v1071 = vand.u32 %v1070, 4294901760
    %1072 = vmatmul.mubr.f32.gmra.mrb[0].mxu0 %v1071
    %v1073 = vpop.f32.mrb[0].mxu0
    %v1074 = vadd.f32 %v946, %v1073
    %v1075 = vpop.f32.mrb[0].mxu0
    %1076 = vdwg.mxu0
    %1077 = vmatprep.subr.mxu0 0.0
    %v1078 = vand.u32 %v929, 4294901760
    %v1079 = vsub.f32 %v929, %v1078
    %v1080 = vand.u32 %v1079, 4294901760
    %v1081 = vsub.f32 %v1079, %v1080
    %v1082 = vand.u32 %v1081, 4294901760
    %1083 = vmatpush1.msra.mxu0 %v1082
    %1084 = vmatprep.subr.mxu0 0.0
    %v1085 = vand.u32 %v930, 4294901760
    %v1086 = vsub.f32 %v930, %v1085
    %v1087 = vand.u32 %v1086, 4294901760
    %v1088 = vsub.f32 %v1086, %v1087
    %v1089 = vand.u32 %v1088, 4294901760
    %1090 = vmatpush1.msra.mxu0 %v1089
    %1091 = vmatprep.subr.mxu0 0.0
    %v1092 = vand.u32 %v931, 4294901760
    %v1093 = vsub.f32 %v931, %v1092
    %v1094 = vand.u32 %v1093, 4294901760
    %v1095 = vsub.f32 %v1093, %v1094
    %v1096 = vand.u32 %v1095, 4294901760
    %1097 = vmatpush1.msra.mxu0 %v1096
    %1098 = vmatprep.subr.mxu0 0.0
    %v1099 = vand.u32 %v932, 4294901760
    %v1100 = vsub.f32 %v932, %v1099
    %v1101 = vand.u32 %v1100, 4294901760
    %v1102 = vsub.f32 %v1100, %v1101
    %v1103 = vand.u32 %v1102, 4294901760
    %1104 = vmatpush1.msra.mxu0 %v1103
    %1105 = vmatprep.subr.mxu0 0.0
    %v1106 = vand.u32 %v933, 4294901760
    %v1107 = vsub.f32 %v933, %v1106
    %v1108 = vand.u32 %v1107, 4294901760
    %v1109 = vsub.f32 %v1107, %v1108
    %v1110 = vand.u32 %v1109, 4294901760
    %1111 = vmatpush1.msra.mxu0 %v1110
    %1112 = vmatprep.subr.mxu0 0.0
    %v1113 = vand.u32 %v934, 4294901760
    %v1114 = vsub.f32 %v934, %v1113
    %v1115 = vand.u32 %v1114, 4294901760
    %v1116 = vsub.f32 %v1114, %v1115
    %v1117 = vand.u32 %v1116, 4294901760
    %1118 = vmatpush1.msra.mxu0 %v1117
    %1119 = vmatprep.subr.mxu0 0.0
    %v1120 = vand.u32 %v935, 4294901760
    %v1121 = vsub.f32 %v935, %v1120
    %v1122 = vand.u32 %v1121, 4294901760
    %v1123 = vsub.f32 %v1121, %v1122
    %v1124 = vand.u32 %v1123, 4294901760
    %1125 = vmatpush1.msra.mxu0 %v1124
    %1126 = vmatprep.subr.mxu0 0.0
    %v1127 = vand.u32 %v936, 4294901760
    %v1128 = vsub.f32 %v936, %v1127
    %v1129 = vand.u32 %v1128, 4294901760
    %v1130 = vsub.f32 %v1128, %v1129
    %v1131 = vand.u32 %v1130, 4294901760
    %1132 = vmatpush1.msra.mxu0 %v1131
    %1133 = vmatprep.subr.mxu0 0.0
    %v1134 = vand.u32 %v937, 4294901760
    %v1135 = vsub.f32 %v937, %v1134
    %v1136 = vand.u32 %v1135, 4294901760
    %v1137 = vsub.f32 %v1135, %v1136
    %v1138 = vand.u32 %v1137, 4294901760
    %1139 = vmatpush1.msra.mxu0 %v1138
    %1140 = vmatprep.subr.mxu0 0.0
    %v1141 = vand.u32 %v938, 4294901760
    %v1142 = vsub.f32 %v938, %v1141
    %v1143 = vand.u32 %v1142, 4294901760
    %v1144 = vsub.f32 %v1142, %v1143
    %v1145 = vand.u32 %v1144, 4294901760
    %1146 = vmatpush1.msra.mxu0 %v1145
    %1147 = vmatprep.subr.mxu0 0.0
    %v1148 = vand.u32 %v939, 4294901760
    %v1149 = vsub.f32 %v939, %v1148
    %v1150 = vand.u32 %v1149, 4294901760
    %v1151 = vsub.f32 %v1149, %v1150
    %v1152 = vand.u32 %v1151, 4294901760
    %1153 = vmatpush1.msra.mxu0 %v1152
    %1154 = vmatprep.subr.mxu0 0.0
    %v1155 = vand.u32 %v940, 4294901760
    %v1156 = vsub.f32 %v940, %v1155
    %v1157 = vand.u32 %v1156, 4294901760
    %v1158 = vsub.f32 %v1156, %v1157
    %v1159 = vand.u32 %v1158, 4294901760
    %1160 = vmatpush1.msra.mxu0 %v1159
    %1161 = vmatprep.subr.mxu0 0.0
    %1162 = vmatpush1.msra.mxu0 0.0
    %1163 = vmatprep.subr.mxu0 0.0
    %1164 = vmatpush1.msra.mxu0 0.0
    %1165 = vmatprep.subr.mxu0 0.0
    %1166 = vmatpush1.msra.mxu0 0.0
    %1167 = vmatprep.subr.mxu0 0.0
    %1168 = vmatpush1.msra.mxu0 0.0
    %1169 = vmatprep.subr.mxu0 0.0
    %1170 = vmatpush1.msra.mxu0 0.0
    %1171 = vmatprep.subr.mxu0 0.0
    %1172 = vmatpush1.msra.mxu0 0.0
    %1173 = vmatprep.subr.mxu0 0.0
    %1174 = vmatpush1.msra.mxu0 0.0
    %1175 = vmatprep.subr.mxu0 0.0
    %1176 = vmatpush1.msra.mxu0 0.0
    %1177 = vmatprep.subr.mxu0 0.0
    %1178 = vmatpush1.msra.mxu0 0.0
    %1179 = vmatprep.subr.mxu0 0.0
    %1180 = vmatpush1.msra.mxu0 0.0
    %1181 = vmatprep.subr.mxu0 0.0
    %1182 = vmatpush1.msra.mxu0 0.0
    %1183 = vmatprep.subr.mxu0 0.0
    %1184 = vmatpush1.msra.mxu0 0.0
    %1185 = vmatprep.subr.mxu0 0.0
    %1186 = vmatpush1.msra.mxu0 0.0
    %1187 = vmatprep.subr.mxu0 0.0
    %1188 = vmatpush1.msra.mxu0 0.0
    %1189 = vmatprep.subr.mxu0 0.0
    %1190 = vmatpush1.msra.mxu0 0.0
    %1191 = vmatprep.subr.mxu0 0.0
    %1192 = vmatpush1.msra.mxu0 0.0
    %1193 = vmatprep.subr.mxu0 0.0
    %1194 = vmatpush1.msra.mxu0 0.0
    %1195 = vmatprep.subr.mxu0 0.0
    %1196 = vmatpush1.msra.mxu0 0.0
    %1197 = vmatprep.subr.mxu0 0.0
    %1198 = vmatpush1.msra.mxu0 0.0
    %1199 = vmatprep.subr.mxu0 0.0
    %1200 = vmatpush1.msra.mxu0 0.0
    %1201 = vmatprep.mubr.f32.mxu0 0.0
    %v1202 = vand.u32 %v949, 4294901760
    %1203 = vmatmul.mubr.f32.gmra.mrb[0].mxu0 %v1202
    %v1204 = vpop.f32.mrb[0].mxu0
    %v1205 = vadd.f32 %v1044, %v1204
    %v1206 = vpop.f32.mrb[0].mxu0
    %1207 = vmatprep.mubr.f32.mxu0 0.0
    %v1208 = vand.u32 %v952, 4294901760
    %1209 = vmatmul.mubr.f32.gmra.mrb[0].mxu0 %v1208
    %v1210 = vpop.f32.mrb[0].mxu0
    %v1211 = vadd.f32 %v1054, %v1210
    %v1212 = vpop.f32.mrb[0].mxu0
    %1213 = vmatprep.mubr.f32.mxu0 0.0
    %v1214 = vand.u32 %v955, 4294901760
    %1215 = vmatmul.mubr.f32.gmra.mrb[0].mxu0 %v1214
    %v1216 = vpop.f32.mrb[0].mxu0
    %v1217 = vadd.f32 %v1064, %v1216
    %v1218 = vpop.f32.mrb[0].mxu0
    %1219 = vmatprep.mubr.f32.mxu0 0.0
    %v1220 = vand.u32 %v958, 4294901760
    %1221 = vmatmul.mubr.f32.gmra.mrb[0].mxu0 %v1220
    %v1222 = vpop.f32.mrb[0].mxu0
    %v1223 = vadd.f32 %v1074, %v1222
    %v1224 = vpop.f32.mrb[0].mxu0
    %1225 = vdwg.mxu0
    %1226 = vmatprep.subr.mxu0 0.0
    %v1227 = vand.u32 %v929, 4294901760
    %v1228 = vsub.f32 %v929, %v1227
    %1229 = vmatpush1.msra.mxu0 %v1228
    %1230 = vmatprep.subr.mxu0 0.0
    %v1231 = vand.u32 %v930, 4294901760
    %v1232 = vsub.f32 %v930, %v1231
    %1233 = vmatpush1.msra.mxu0 %v1232
    %1234 = vmatprep.subr.mxu0 0.0
    %v1235 = vand.u32 %v931, 4294901760
    %v1236 = vsub.f32 %v931, %v1235
    %1237 = vmatpush1.msra.mxu0 %v1236
    %1238 = vmatprep.subr.mxu0 0.0
    %v1239 = vand.u32 %v932, 4294901760
    %v1240 = vsub.f32 %v932, %v1239
    %1241 = vmatpush1.msra.mxu0 %v1240
    %1242 = vmatprep.subr.mxu0 0.0
    %v1243 = vand.u32 %v933, 4294901760
    %v1244 = vsub.f32 %v933, %v1243
    %1245 = vmatpush1.msra.mxu0 %v1244
    %1246 = vmatprep.subr.mxu0 0.0
    %v1247 = vand.u32 %v934, 4294901760
    %v1248 = vsub.f32 %v934, %v1247
    %1249 = vmatpush1.msra.mxu0 %v1248
    %1250 = vmatprep.subr.mxu0 0.0
    %v1251 = vand.u32 %v935, 4294901760
    %v1252 = vsub.f32 %v935, %v1251
    %1253 = vmatpush1.msra.mxu0 %v1252
    %1254 = vmatprep.subr.mxu0 0.0
    %v1255 = vand.u32 %v936, 4294901760
    %v1256 = vsub.f32 %v936, %v1255
    %1257 = vmatpush1.msra.mxu0 %v1256
    %1258 = vmatprep.subr.mxu0 0.0
    %v1259 = vand.u32 %v937, 4294901760
    %v1260 = vsub.f32 %v937, %v1259
    %1261 = vmatpush1.msra.mxu0 %v1260
    %1262 = vmatprep.subr.mxu0 0.0
    %v1263 = vand.u32 %v938, 4294901760
    %v1264 = vsub.f32 %v938, %v1263
    %1265 = vmatpush1.msra.mxu0 %v1264
    %1266 = vmatprep.subr.mxu0 0.0
    %v1267 = vand.u32 %v939, 4294901760
    %v1268 = vsub.f32 %v939, %v1267
    %1269 = vmatpush1.msra.mxu0 %v1268
    %1270 = vmatprep.subr.mxu0 0.0
    %v1271 = vand.u32 %v940, 4294901760
    %v1272 = vsub.f32 %v940, %v1271
    %1273 = vmatpush1.msra.mxu0 %v1272
    %1274 = vmatprep.subr.mxu0 0.0
    %1275 = vmatpush1.msra.mxu0 0.0
    %1276 = vmatprep.subr.mxu0 0.0
    %1277 = vmatpush1.msra.mxu0 0.0
    %1278 = vmatprep.subr.mxu0 0.0
    %1279 = vmatpush1.msra.mxu0 0.0
    %1280 = vmatprep.subr.mxu0 0.0
    %1281 = vmatpush1.msra.mxu0 0.0
    %1282 = vmatprep.subr.mxu0 0.0
    %1283 = vmatpush1.msra.mxu0 0.0
    %1284 = vmatprep.subr.mxu0 0.0
    %1285 = vmatpush1.msra.mxu0 0.0
    %1286 = vmatprep.subr.mxu0 0.0
    %1287 = vmatpush1.msra.mxu0 0.0
    %1288 = vmatprep.subr.mxu0 0.0
    %1289 = vmatpush1.msra.mxu0 0.0
    %1290 = vmatprep.subr.mxu0 0.0
    %1291 = vmatpush1.msra.mxu0 0.0
    %1292 = vmatprep.subr.mxu0 0.0
    %1293 = vmatpush1.msra.mxu0 0.0
    %1294 = vmatprep.subr.mxu0 0.0
    %1295 = vmatpush1.msra.mxu0 0.0
    %1296 = vmatprep.subr.mxu0 0.0
    %1297 = vmatpush1.msra.mxu0 0.0
    %1298 = vmatprep.subr.mxu0 0.0
    %1299 = vmatpush1.msra.mxu0 0.0
    %1300 = vmatprep.subr.mxu0 0.0
    %1301 = vmatpush1.msra.mxu0 0.0
    %1302 = vmatprep.subr.mxu0 0.0
    %1303 = vmatpush1.msra.mxu0 0.0
    %1304 = vmatprep.subr.mxu0 0.0
    %1305 = vmatpush1.msra.mxu0 0.0
    %1306 = vmatprep.subr.mxu0 0.0
    %1307 = vmatpush1.msra.mxu0 0.0
    %1308 = vmatprep.subr.mxu0 0.0
    %1309 = vmatpush1.msra.mxu0 0.0
    %1310 = vmatprep.subr.mxu0 0.0
    %1311 = vmatpush1.msra.mxu0 0.0
    %1312 = vmatprep.subr.mxu0 0.0
    %1313 = vmatpush1.msra.mxu0 0.0
    %1314 = vmatprep.mubr.f32.mxu0 0.0
    %v1315 = vand.u32 %v949, 4294901760
    %v1316 = vsub.f32 %v949, %v1315
    %1317 = vmatmul.mubr.f32.gmra.mrb[0].mxu0 %v1316
    %v1318 = vpop.f32.mrb[0].mxu0
    %v1319 = vadd.f32 %v1205, %v1318
    %v1320 = vpop.f32.mrb[0].mxu0
    %1321 = vmatprep.mubr.f32.mxu0 0.0
    %v1322 = vand.u32 %v952, 4294901760
    %v1323 = vsub.f32 %v952, %v1322
    %1324 = vmatmul.mubr.f32.gmra.mrb[0].mxu0 %v1323
    %v1325 = vpop.f32.mrb[0].mxu0
    %v1326 = vadd.f32 %v1211, %v1325
    %v1327 = vpop.f32.mrb[0].mxu0
    %1328 = vmatprep.mubr.f32.mxu0 0.0
    %v1329 = vand.u32 %v955, 4294901760
    %v1330 = vsub.f32 %v955, %v1329
    %1331 = vmatmul.mubr.f32.gmra.mrb[0].mxu0 %v1330
    %v1332 = vpop.f32.mrb[0].mxu0
    %v1333 = vadd.f32 %v1217, %v1332
    %v1334 = vpop.f32.mrb[0].mxu0
    %1335 = vmatprep.mubr.f32.mxu0 0.0
    %v1336 = vand.u32 %v958, 4294901760
    %v1337 = vsub.f32 %v958, %v1336
    %1338 = vmatmul.mubr.f32.gmra.mrb[0].mxu0 %v1337
    %v1339 = vpop.f32.mrb[0].mxu0
    %v1340 = vadd.f32 %v1223, %v1339
    %v1341 = vpop.f32.mrb[0].mxu0
    %1342 = vdwg.mxu0
    %1343 = vmatprep.subr.mxu0 0.0
    %v1344 = vand.u32 %v929, 4294901760
    %1345 = vmatpush1.msra.mxu0 %v1344
    %1346 = vmatprep.subr.mxu0 0.0
    %v1347 = vand.u32 %v930, 4294901760
    %1348 = vmatpush1.msra.mxu0 %v1347
    %1349 = vmatprep.subr.mxu0 0.0
    %v1350 = vand.u32 %v931, 4294901760
    %1351 = vmatpush1.msra.mxu0 %v1350
    %1352 = vmatprep.subr.mxu0 0.0
    %v1353 = vand.u32 %v932, 4294901760
    %1354 = vmatpush1.msra.mxu0 %v1353
    %1355 = vmatprep.subr.mxu0 0.0
    %v1356 = vand.u32 %v933, 4294901760
    %1357 = vmatpush1.msra.mxu0 %v1356
    %1358 = vmatprep.subr.mxu0 0.0
    %v1359 = vand.u32 %v934, 4294901760
    %1360 = vmatpush1.msra.mxu0 %v1359
    %1361 = vmatprep.subr.mxu0 0.0
    %v1362 = vand.u32 %v935, 4294901760
    %1363 = vmatpush1.msra.mxu0 %v1362
    %1364 = vmatprep.subr.mxu0 0.0
    %v1365 = vand.u32 %v936, 4294901760
    %1366 = vmatpush1.msra.mxu0 %v1365
    %1367 = vmatprep.subr.mxu0 0.0
    %v1368 = vand.u32 %v937, 4294901760
    %1369 = vmatpush1.msra.mxu0 %v1368
    %1370 = vmatprep.subr.mxu0 0.0
    %v1371 = vand.u32 %v938, 4294901760
    %1372 = vmatpush1.msra.mxu0 %v1371
    %1373 = vmatprep.subr.mxu0 0.0
    %v1374 = vand.u32 %v939, 4294901760
    %1375 = vmatpush1.msra.mxu0 %v1374
    %1376 = vmatprep.subr.mxu0 0.0
    %v1377 = vand.u32 %v940, 4294901760
    %1378 = vmatpush1.msra.mxu0 %v1377
    %1379 = vmatprep.subr.mxu0 0.0
    %1380 = vmatpush1.msra.mxu0 0.0
    %1381 = vmatprep.subr.mxu0 0.0
    %1382 = vmatpush1.msra.mxu0 0.0
    %1383 = vmatprep.subr.mxu0 0.0
    %1384 = vmatpush1.msra.mxu0 0.0
    %1385 = vmatprep.subr.mxu0 0.0
    %1386 = vmatpush1.msra.mxu0 0.0
    %1387 = vmatprep.subr.mxu0 0.0
    %1388 = vmatpush1.msra.mxu0 0.0
    %1389 = vmatprep.subr.mxu0 0.0
    %1390 = vmatpush1.msra.mxu0 0.0
    %1391 = vmatprep.subr.mxu0 0.0
    %1392 = vmatpush1.msra.mxu0 0.0
    %1393 = vmatprep.subr.mxu0 0.0
    %1394 = vmatpush1.msra.mxu0 0.0
    %1395 = vmatprep.subr.mxu0 0.0
    %1396 = vmatpush1.msra.mxu0 0.0
    %1397 = vmatprep.subr.mxu0 0.0
    %1398 = vmatpush1.msra.mxu0 0.0
    %1399 = vmatprep.subr.mxu0 0.0
    %1400 = vmatpush1.msra.mxu0 0.0
    %1401 = vmatprep.subr.mxu0 0.0
    %1402 = vmatpush1.msra.mxu0 0.0
    %1403 = vmatprep.subr.mxu0 0.0
    %1404 = vmatpush1.msra.mxu0 0.0
    %1405 = vmatprep.subr.mxu0 0.0
    %1406 = vmatpush1.msra.mxu0 0.0
    %1407 = vmatprep.subr.mxu0 0.0
    %1408 = vmatpush1.msra.mxu0 0.0
    %1409 = vmatprep.subr.mxu0 0.0
    %1410 = vmatpush1.msra.mxu0 0.0
    %1411 = vmatprep.subr.mxu0 0.0
    %1412 = vmatpush1.msra.mxu0 0.0
    %1413 = vmatprep.subr.mxu0 0.0
    %1414 = vmatpush1.msra.mxu0 0.0
    %1415 = vmatprep.subr.mxu0 0.0
    %1416 = vmatpush1.msra.mxu0 0.0
    %1417 = vmatprep.subr.mxu0 0.0
    %1418 = vmatpush1.msra.mxu0 0.0
    %1419 = vmatprep.mubr.f32.mxu0 0.0
    %v1420 = vand.u32 %v949, 4294901760
    %v1421 = vsub.f32 %v949, %v1420
    %v1422 = vand.u32 %v1421, 4294901760
    %1423 = vmatmul.mubr.f32.gmra.mrb[0].mxu0 %v1422
    %v1424 = vpop.f32.mrb[0].mxu0
    %v1425 = vadd.f32 %v1319, %v1424
    %v1426 = vpop.f32.mrb[0].mxu0
    %1427 = vmatprep.mubr.f32.mxu0 0.0
    %v1428 = vand.u32 %v952, 4294901760
    %v1429 = vsub.f32 %v952, %v1428
    %v1430 = vand.u32 %v1429, 4294901760
    %1431 = vmatmul.mubr.f32.gmra.mrb[0].mxu0 %v1430
    %v1432 = vpop.f32.mrb[0].mxu0
    %v1433 = vadd.f32 %v1326, %v1432
    %v1434 = vpop.f32.mrb[0].mxu0
    %1435 = vmatprep.mubr.f32.mxu0 0.0
    %v1436 = vand.u32 %v955, 4294901760
    %v1437 = vsub.f32 %v955, %v1436
    %v1438 = vand.u32 %v1437, 4294901760
    %1439 = vmatmul.mubr.f32.gmra.mrb[0].mxu0 %v1438
    %v1440 = vpop.f32.mrb[0].mxu0
    %v1441 = vadd.f32 %v1333, %v1440
    %v1442 = vpop.f32.mrb[0].mxu0
    %1443 = vmatprep.mubr.f32.mxu0 0.0
    %v1444 = vand.u32 %v958, 4294901760
    %v1445 = vsub.f32 %v958, %v1444
    %v1446 = vand.u32 %v1445, 4294901760
    %1447 = vmatmul.mubr.f32.gmra.mrb[0].mxu0 %v1446
    %v1448 = vpop.f32.mrb[0].mxu0
    %v1449 = vadd.f32 %v1340, %v1448
    %v1450 = vpop.f32.mrb[0].mxu0
    %1451 = vdwg.mxu0
    %1452 = vmatprep.subr.mxu0 0.0
    %v1453 = vand.u32 %v929, 4294901760
    %v1454 = vsub.f32 %v929, %v1453
    %v1455 = vand.u32 %v1454, 4294901760
    %1456 = vmatpush1.msra.mxu0 %v1455
    %1457 = vmatprep.subr.mxu0 0.0
    %v1458 = vand.u32 %v930, 4294901760
    %v1459 = vsub.f32 %v930, %v1458
    %v1460 = vand.u32 %v1459, 4294901760
    %1461 = vmatpush1.msra.mxu0 %v1460
    %1462 = vmatprep.subr.mxu0 0.0
    %v1463 = vand.u32 %v931, 4294901760
    %v1464 = vsub.f32 %v931, %v1463
    %v1465 = vand.u32 %v1464, 4294901760
    %1466 = vmatpush1.msra.mxu0 %v1465
    %1467 = vmatprep.subr.mxu0 0.0
    %v1468 = vand.u32 %v932, 4294901760
    %v1469 = vsub.f32 %v932, %v1468
    %v1470 = vand.u32 %v1469, 4294901760
    %1471 = vmatpush1.msra.mxu0 %v1470
    %1472 = vmatprep.subr.mxu0 0.0
    %v1473 = vand.u32 %v933, 4294901760
    %v1474 = vsub.f32 %v933, %v1473
    %v1475 = vand.u32 %v1474, 4294901760
    %1476 = vmatpush1.msra.mxu0 %v1475
    %1477 = vmatprep.subr.mxu0 0.0
    %v1478 = vand.u32 %v934, 4294901760
    %v1479 = vsub.f32 %v934, %v1478
    %v1480 = vand.u32 %v1479, 4294901760
    %1481 = vmatpush1.msra.mxu0 %v1480
    %1482 = vmatprep.subr.mxu0 0.0
    %v1483 = vand.u32 %v935, 4294901760
    %v1484 = vsub.f32 %v935, %v1483
    %v1485 = vand.u32 %v1484, 4294901760
    %1486 = vmatpush1.msra.mxu0 %v1485
    %1487 = vmatprep.subr.mxu0 0.0
    %v1488 = vand.u32 %v936, 4294901760
    %v1489 = vsub.f32 %v936, %v1488
    %v1490 = vand.u32 %v1489, 4294901760
    %1491 = vmatpush1.msra.mxu0 %v1490
    %1492 = vmatprep.subr.mxu0 0.0
    %v1493 = vand.u32 %v937, 4294901760
    %v1494 = vsub.f32 %v937, %v1493
    %v1495 = vand.u32 %v1494, 4294901760
    %1496 = vmatpush1.msra.mxu0 %v1495
    %1497 = vmatprep.subr.mxu0 0.0
    %v1498 = vand.u32 %v938, 4294901760
    %v1499 = vsub.f32 %v938, %v1498
    %v1500 = vand.u32 %v1499, 4294901760
    %1501 = vmatpush1.msra.mxu0 %v1500
    %1502 = vmatprep.subr.mxu0 0.0
    %v1503 = vand.u32 %v939, 4294901760
    %v1504 = vsub.f32 %v939, %v1503
    %v1505 = vand.u32 %v1504, 4294901760
    %1506 = vmatpush1.msra.mxu0 %v1505
    %1507 = vmatprep.subr.mxu0 0.0
    %v1508 = vand.u32 %v940, 4294901760
    %v1509 = vsub.f32 %v940, %v1508
    %v1510 = vand.u32 %v1509, 4294901760
    %1511 = vmatpush1.msra.mxu0 %v1510
    %1512 = vmatprep.subr.mxu0 0.0
    %1513 = vmatpush1.msra.mxu0 0.0
    %1514 = vmatprep.subr.mxu0 0.0
    %1515 = vmatpush1.msra.mxu0 0.0
    %1516 = vmatprep.subr.mxu0 0.0
    %1517 = vmatpush1.msra.mxu0 0.0
    %1518 = vmatprep.subr.mxu0 0.0
    %1519 = vmatpush1.msra.mxu0 0.0
    %1520 = vmatprep.subr.mxu0 0.0
    %1521 = vmatpush1.msra.mxu0 0.0
    %1522 = vmatprep.subr.mxu0 0.0
    %1523 = vmatpush1.msra.mxu0 0.0
    %1524 = vmatprep.subr.mxu0 0.0
    %1525 = vmatpush1.msra.mxu0 0.0
    %1526 = vmatprep.subr.mxu0 0.0
    %1527 = vmatpush1.msra.mxu0 0.0
    %1528 = vmatprep.subr.mxu0 0.0
    %1529 = vmatpush1.msra.mxu0 0.0
    %1530 = vmatprep.subr.mxu0 0.0
    %1531 = vmatpush1.msra.mxu0 0.0
    %1532 = vmatprep.subr.mxu0 0.0
    %1533 = vmatpush1.msra.mxu0 0.0
    %1534 = vmatprep.subr.mxu0 0.0
    %1535 = vmatpush1.msra.mxu0 0.0
    %1536 = vmatprep.subr.mxu0 0.0
    %1537 = vmatpush1.msra.mxu0 0.0
    %1538 = vmatprep.subr.mxu0 0.0
    %1539 = vmatpush1.msra.mxu0 0.0
    %1540 = vmatprep.subr.mxu0 0.0
    %1541 = vmatpush1.msra.mxu0 0.0
    %1542 = vmatprep.subr.mxu0 0.0
    %1543 = vmatpush1.msra.mxu0 0.0
    %1544 = vmatprep.subr.mxu0 0.0
    %1545 = vmatpush1.msra.mxu0 0.0
    %1546 = vmatprep.subr.mxu0 0.0
    %1547 = vmatpush1.msra.mxu0 0.0
    %1548 = vmatprep.subr.mxu0 0.0
    %1549 = vmatpush1.msra.mxu0 0.0
    %1550 = vmatprep.subr.mxu0 0.0
    %1551 = vmatpush1.msra.mxu0 0.0
    %1552 = vmatprep.mubr.f32.mxu0 0.0
    %v1553 = vand.u32 %v949, 4294901760
    %1554 = vmatmul.mubr.f32.gmra.mrb[0].mxu0 %v1553
    %v1555 = vpop.f32.mrb[0].mxu0
    %v1556 = vadd.f32 %v1425, %v1555
    %v1557 = vpop.f32.mrb[0].mxu0
    %1558 = vmatprep.mubr.f32.mxu0 0.0
    %v1559 = vand.u32 %v952, 4294901760
    %1560 = vmatmul.mubr.f32.gmra.mrb[0].mxu0 %v1559
    %v1561 = vpop.f32.mrb[0].mxu0
    %v1562 = vadd.f32 %v1433, %v1561
    %v1563 = vpop.f32.mrb[0].mxu0
    %1564 = vmatprep.mubr.f32.mxu0 0.0
    %v1565 = vand.u32 %v955, 4294901760
    %1566 = vmatmul.mubr.f32.gmra.mrb[0].mxu0 %v1565
    %v1567 = vpop.f32.mrb[0].mxu0
    %v1568 = vadd.f32 %v1441, %v1567
    %v1569 = vpop.f32.mrb[0].mxu0
    %1570 = vmatprep.mubr.f32.mxu0 0.0
    %v1571 = vand.u32 %v958, 4294901760
    %1572 = vmatmul.mubr.f32.gmra.mrb[0].mxu0 %v1571
    %v1573 = vpop.f32.mrb[0].mxu0
    %v1574 = vadd.f32 %v1449, %v1573
    %v1575 = vpop.f32.mrb[0].mxu0
    %1576 = vdwg.mxu0
    %1577 = vmatprep.subr.mxu0 0.0
    %v1578 = vand.u32 %v929, 4294901760
    %1579 = vmatpush1.msra.mxu0 %v1578
    %1580 = vmatprep.subr.mxu0 0.0
    %v1581 = vand.u32 %v930, 4294901760
    %1582 = vmatpush1.msra.mxu0 %v1581
    %1583 = vmatprep.subr.mxu0 0.0
    %v1584 = vand.u32 %v931, 4294901760
    %1585 = vmatpush1.msra.mxu0 %v1584
    %1586 = vmatprep.subr.mxu0 0.0
    %v1587 = vand.u32 %v932, 4294901760
    %1588 = vmatpush1.msra.mxu0 %v1587
    %1589 = vmatprep.subr.mxu0 0.0
    %v1590 = vand.u32 %v933, 4294901760
    %1591 = vmatpush1.msra.mxu0 %v1590
    %1592 = vmatprep.subr.mxu0 0.0
    %v1593 = vand.u32 %v934, 4294901760
    %1594 = vmatpush1.msra.mxu0 %v1593
    %1595 = vmatprep.subr.mxu0 0.0
    %v1596 = vand.u32 %v935, 4294901760
    %1597 = vmatpush1.msra.mxu0 %v1596
    %1598 = vmatprep.subr.mxu0 0.0
    %v1599 = vand.u32 %v936, 4294901760
    %1600 = vmatpush1.msra.mxu0 %v1599
    %1601 = vmatprep.subr.mxu0 0.0
    %v1602 = vand.u32 %v937, 4294901760
    %1603 = vmatpush1.msra.mxu0 %v1602
    %1604 = vmatprep.subr.mxu0 0.0
    %v1605 = vand.u32 %v938, 4294901760
    %1606 = vmatpush1.msra.mxu0 %v1605
    %1607 = vmatprep.subr.mxu0 0.0
    %v1608 = vand.u32 %v939, 4294901760
    %1609 = vmatpush1.msra.mxu0 %v1608
    %1610 = vmatprep.subr.mxu0 0.0
    %v1611 = vand.u32 %v940, 4294901760
    %1612 = vmatpush1.msra.mxu0 %v1611
    %1613 = vmatprep.subr.mxu0 0.0
    %1614 = vmatpush1.msra.mxu0 0.0
    %1615 = vmatprep.subr.mxu0 0.0
    %1616 = vmatpush1.msra.mxu0 0.0
    %1617 = vmatprep.subr.mxu0 0.0
    %1618 = vmatpush1.msra.mxu0 0.0
    %1619 = vmatprep.subr.mxu0 0.0
    %1620 = vmatpush1.msra.mxu0 0.0
    %1621 = vmatprep.subr.mxu0 0.0
    %1622 = vmatpush1.msra.mxu0 0.0
    %1623 = vmatprep.subr.mxu0 0.0
    %1624 = vmatpush1.msra.mxu0 0.0
    %1625 = vmatprep.subr.mxu0 0.0
    %1626 = vmatpush1.msra.mxu0 0.0
    %1627 = vmatprep.subr.mxu0 0.0
    %1628 = vmatpush1.msra.mxu0 0.0
    %1629 = vmatprep.subr.mxu0 0.0
    %1630 = vmatpush1.msra.mxu0 0.0
    %1631 = vmatprep.subr.mxu0 0.0
    %1632 = vmatpush1.msra.mxu0 0.0
    %1633 = vmatprep.subr.mxu0 0.0
    %1634 = vmatpush1.msra.mxu0 0.0
    %1635 = vmatprep.subr.mxu0 0.0
    %1636 = vmatpush1.msra.mxu0 0.0
    %1637 = vmatprep.subr.mxu0 0.0
    %1638 = vmatpush1.msra.mxu0 0.0
    %1639 = vmatprep.subr.mxu0 0.0
    %1640 = vmatpush1.msra.mxu0 0.0
    %1641 = vmatprep.subr.mxu0 0.0
    %1642 = vmatpush1.msra.mxu0 0.0
    %1643 = vmatprep.subr.mxu0 0.0
    %1644 = vmatpush1.msra.mxu0 0.0
    %1645 = vmatprep.subr.mxu0 0.0
    %1646 = vmatpush1.msra.mxu0 0.0
    %1647 = vmatprep.subr.mxu0 0.0
    %1648 = vmatpush1.msra.mxu0 0.0
    %1649 = vmatprep.subr.mxu0 0.0
    %1650 = vmatpush1.msra.mxu0 0.0
    %1651 = vmatprep.subr.mxu0 0.0
    %1652 = vmatpush1.msra.mxu0 0.0
    %1653 = vmatprep.mubr.f32.mxu0 0.0
    %v1654 = vand.u32 %v949, 4294901760
    %1655 = vmatmul.mubr.f32.gmra.mrb[0].mxu0 %v1654
    %v1656 = vpop.f32.mrb[0].mxu0
    %v1657 = vadd.f32 %v1556, %v1656
    %v1658 = vpop.f32.mrb[0].mxu0
    %1659 = vmatprep.mubr.f32.mxu0 0.0
    %v1660 = vand.u32 %v952, 4294901760
    %1661 = vmatmul.mubr.f32.gmra.mrb[0].mxu0 %v1660
    %v1662 = vpop.f32.mrb[0].mxu0
    %v1663 = vadd.f32 %v1562, %v1662
    %v1664 = vpop.f32.mrb[0].mxu0
    %1665 = vmatprep.mubr.f32.mxu0 0.0
    %v1666 = vand.u32 %v955, 4294901760
    %1667 = vmatmul.mubr.f32.gmra.mrb[0].mxu0 %v1666
    %v1668 = vpop.f32.mrb[0].mxu0
    %v1669 = vadd.f32 %v1568, %v1668
    %v1670 = vpop.f32.mrb[0].mxu0
    %1671 = vmatprep.mubr.f32.mxu0 0.0
    %v1672 = vand.u32 %v958, 4294901760
    %1673 = vmatmul.mubr.f32.gmra.mrb[0].mxu0 %v1672
    %v1674 = vpop.f32.mrb[0].mxu0
    %v1675 = vadd.f32 %v1574, %v1674
    %v1676 = vpop.f32.mrb[0].mxu0
    %1677 = vdwg.mxu0
    %v1678 = vmax.f32 %v1657, 0.0
    %v1679 = vmax.f32 %v1663, 0.0
    %v1680 = vmax.f32 %v1669, 0.0
    %v1681 = vmax.f32 %v1675, 0.0
    %v1685 = vunpack.c.l.s4 1983009808
    %v1686 = vunpack.c.0.s8 %v1685
    %v1687 = vlaneseq
    %v1688 = vshrl.u32 %v1687, 7
    %v1689 = vsub.s32 %v1686, %v1688
    %v1690 = vrot.slane %v1678, %v1689
    %v1692 = vunpack.c.l.s4 1983009808
    %v1693 = vunpack.c.0.s8 %v1692
    %v1694 = vlaneseq
    %v1695 = vshrl.u32 %v1694, 7
    %v1696 = vsub.s32 %v1693, %v1695
    %v1697 = vrot.slane %v1680, %v1696
    %vm1698 = vcmask 1044484
    %v1699 = vsel %vm1698, %v1690, %v1690
    %vm1700 = vcmask 1046534
    %v1701 = vsel %vm1700, %v1690, %v1699
    %v1702 = vrot.slane %v1697, 7
    %vm1703 = vcmask 1041409
    %v1704 = vsel %vm1703, %v1702, %v1701
    %vm1705 = vcmask 1043459
    %v1706 = vsel %vm1705, %v1702, %v1704
    %vm1707 = vcmask 1045509
    %v1708 = vsel %vm1707, %v1702, %v1706
    %vm1709 = vcmask 1047559
    %v1710 = vsel %vm1709, %v1702, %v1708
    %1712 = vst.msk [vmem:[#allocation4] sm:$0x3] %vm36, %v1710
    %v1713 = vrot.slane %v1690, 1
    %v1714 = vsel %vm1698, %v1713, %v1713
    %v1715 = vsel %vm1700, %v1713, %v1714
    %v1716 = vsel %vm1703, %v1697, %v1715
    %v1717 = vsel %vm1705, %v1697, %v1716
    %v1718 = vsel %vm1707, %v1697, %v1717
    %v1719 = vsel %vm1709, %v1697, %v1718
    %1720 = vrot.lane.b32.xlu0 %v1719, 32
    %v1721 = vpop.permute.xlu0 %1720
    %vm1723 = vcmask 517376
    %1724 = vst.msk [vmem:[#allocation4] sm:$0x3] %vm1723, %v1721
    %v1725 = vcombine.high %v1690, %v1690
    %v1726 = vcombine.high %v1697, %v1697
    %v1727 = vsel %vm1698, %v1725, %v1725
    %v1728 = vsel %vm1700, %v1725, %v1727
    %v1729 = vrot.slane %v1726, 7
    %v1730 = vsel %vm1703, %v1729, %v1728
    %v1731 = vsel %vm1705, %v1729, %v1730
    %v1732 = vsel %vm1707, %v1729, %v1731
    %v1733 = vsel %vm1709, %v1729, %v1732
    %1734 = vrot.lane.b32.xlu0 %v1733, 64
    %v1735 = vpop.permute.xlu0 %1734
    %vm1737 = vcmask 779776
    %1738 = vst.msk [vmem:[#allocation4] sm:$0x3] %vm1737, %v1735
    %v1739 = vrot.slane %v1725, 1
    %v1740 = vsel %vm1698, %v1739, %v1739
    %v1741 = vsel %vm1700, %v1739, %v1740
    %v1742 = vsel %vm1703, %v1726, %v1741
    %v1743 = vsel %vm1705, %v1726, %v1742
    %v1744 = vsel %vm1707, %v1726, %v1743
    %v1745 = vsel %vm1709, %v1726, %v1744
    %1746 = vrot.lane.b32.xlu0 %v1745, 96
    %v1747 = vpop.permute.xlu0 %1746
    %vm1749 = vcmask 1042176
    %1750 = vst.msk [vmem:[#allocation4] sm:$0x3] %vm1749, %v1747
    %v1751 = vcombine.high %v1678, %v1678
    %v1753 = vunpack.c.l.s4 1983009808
    %v1754 = vunpack.c.0.s8 %v1753
    %v1755 = vlaneseq
    %v1756 = vshrl.u32 %v1755, 7
    %v1757 = vsub.s32 %v1754, %v1756
    %v1758 = vrot.slane %v1751, %v1757
    %v1759 = vcombine.high %v1680, %v1680
    %v1761 = vunpack.c.l.s4 1983009808
    %v1762 = vunpack.c.0.s8 %v1761
    %v1763 = vlaneseq
    %v1764 = vshrl.u32 %v1763, 7
    %v1765 = vsub.s32 %v1762, %v1764
    %v1766 = vrot.slane %v1759, %v1765
    %v1767 = vsel %vm1698, %v1758, %v1758
    %v1768 = vsel %vm1700, %v1758, %v1767
    %v1769 = vrot.slane %v1766, 7
    %v1770 = vsel %vm1703, %v1769, %v1768
    %v1771 = vsel %vm1705, %v1769, %v1770
    %v1772 = vsel %vm1707, %v1769, %v1771
    %v1773 = vsel %vm1709, %v1769, %v1772
    %1775 = vst.msk [vmem:[#allocation4 + $0x2] sm:$0x3] %vm36, %v1773
    %v1776 = vrot.slane %v1758, 1
    %v1777 = vsel %vm1698, %v1776, %v1776
    %v1778 = vsel %vm1700, %v1776, %v1777
    %v1779 = vsel %vm1703, %v1766, %v1778
    %v1780 = vsel %vm1705, %v1766, %v1779
    %v1781 = vsel %vm1707, %v1766, %v1780
    %v1782 = vsel %vm1709, %v1766, %v1781
    %1783 = vrot.lane.b32.xlu0 %v1782, 32
    %v1784 = vpop.permute.xlu0 %1783
    %1786 = vst.msk [vmem:[#allocation4 + $0x2] sm:$0x3] %vm1723, %v1784
    %v1787 = vcombine.high %v1758, %v1758
    %v1788 = vcombine.high %v1766, %v1766
    %v1789 = vsel %vm1698, %v1787, %v1787
    %v1790 = vsel %vm1700, %v1787, %v1789
    %v1791 = vrot.slane %v1788, 7
    %v1792 = vsel %vm1703, %v1791, %v1790
    %v1793 = vsel %vm1705, %v1791, %v1792
    %v1794 = vsel %vm1707, %v1791, %v1793
    %v1795 = vsel %vm1709, %v1791, %v1794
    %1796 = vrot.lane.b32.xlu0 %v1795, 64
    %v1797 = vpop.permute.xlu0 %1796
    %1799 = vst.msk [vmem:[#allocation4 + $0x2] sm:$0x3] %vm1737, %v1797
    %v1800 = vrot.slane %v1787, 1
    %v1801 = vsel %vm1698, %v1800, %v1800
    %v1802 = vsel %vm1700, %v1800, %v1801
    %v1803 = vsel %vm1703, %v1788, %v1802
    %v1804 = vsel %vm1705, %v1788, %v1803
    %v1805 = vsel %vm1707, %v1788, %v1804
    %v1806 = vsel %vm1709, %v1788, %v1805
    %1807 = vrot.lane.b32.xlu0 %v1806, 96
    %v1808 = vpop.permute.xlu0 %1807
    %1810 = vst.msk [vmem:[#allocation4 + $0x2] sm:$0x3] %vm1749, %v1808
    %v1814 = vunpack.c.l.s4 1983009808
    %v1815 = vunpack.c.0.s8 %v1814
    %v1816 = vlaneseq
    %v1817 = vshrl.u32 %v1816, 7
    %v1818 = vsub.s32 %v1815, %v1817
    %v1819 = vrot.slane %v1679, %v1818
    %v1821 = vunpack.c.l.s4 1983009808
    %v1822 = vunpack.c.0.s8 %v1821
    %v1823 = vlaneseq
    %v1824 = vshrl.u32 %v1823, 7
    %v1825 = vsub.s32 %v1822, %v1824
    %v1826 = vrot.slane %v1681, %v1825
    %v1827 = vsel %vm1698, %v1819, %v1819
    %v1828 = vsel %vm1700, %v1819, %v1827
    %v1829 = vrot.slane %v1826, 7
    %v1830 = vsel %vm1703, %v1829, %v1828
    %v1831 = vsel %vm1705, %v1829, %v1830
    %v1832 = vsel %vm1707, %v1829, %v1831
    %v1833 = vsel %vm1709, %v1829, %v1832
    %1835 = vst.msk [vmem:[#allocation4 + $0x4] sm:$0x3] %vm36, %v1833
    %v1836 = vrot.slane %v1819, 1
    %v1837 = vsel %vm1698, %v1836, %v1836
    %v1838 = vsel %vm1700, %v1836, %v1837
    %v1839 = vsel %vm1703, %v1826, %v1838
    %v1840 = vsel %vm1705, %v1826, %v1839
    %v1841 = vsel %vm1707, %v1826, %v1840
    %v1842 = vsel %vm1709, %v1826, %v1841
    %1843 = vrot.lane.b32.xlu0 %v1842, 32
    %v1844 = vpop.permute.xlu0 %1843
    %1846 = vst.msk [vmem:[#allocation4 + $0x4] sm:$0x3] %vm1723, %v1844
    %v1847 = vcombine.high %v1819, %v1819
    %v1848 = vcombine.high %v1826, %v1826
    %v1849 = vsel %vm1698, %v1847, %v1847
    %v1850 = vsel %vm1700, %v1847, %v1849
    %v1851 = vrot.slane %v1848, 7
    %v1852 = vsel %vm1703, %v1851, %v1850
    %v1853 = vsel %vm1705, %v1851, %v1852
    %v1854 = vsel %vm1707, %v1851, %v1853
    %v1855 = vsel %vm1709, %v1851, %v1854
    %1856 = vrot.lane.b32.xlu0 %v1855, 64
    %v1857 = vpop.permute.xlu0 %1856
    %1859 = vst.msk [vmem:[#allocation4 + $0x4] sm:$0x3] %vm1737, %v1857
    %v1860 = vrot.slane %v1847, 1
    %v1861 = vsel %vm1698, %v1860, %v1860
    %v1862 = vsel %vm1700, %v1860, %v1861
    %v1863 = vsel %vm1703, %v1848, %v1862
    %v1864 = vsel %vm1705, %v1848, %v1863
    %v1865 = vsel %vm1707, %v1848, %v1864
    %v1866 = vsel %vm1709, %v1848, %v1865
    %1867 = vrot.lane.b32.xlu0 %v1866, 96
    %v1868 = vpop.permute.xlu0 %1867
    %1870 = vst.msk [vmem:[#allocation4 + $0x4] sm:$0x3] %vm1749, %v1868
    %v1871 = vcombine.high %v1679, %v1679
    %v1873 = vunpack.c.l.s4 1983009808
    %v1874 = vunpack.c.0.s8 %v1873
    %v1875 = vlaneseq
    %v1876 = vshrl.u32 %v1875, 7
    %v1877 = vsub.s32 %v1874, %v1876
    %v1878 = vrot.slane %v1871, %v1877
    %v1879 = vcombine.high %v1681, %v1681
    %v1881 = vunpack.c.l.s4 1983009808
    %v1882 = vunpack.c.0.s8 %v1881
    %v1883 = vlaneseq
    %v1884 = vshrl.u32 %v1883, 7
    %v1885 = vsub.s32 %v1882, %v1884
    %v1886 = vrot.slane %v1879, %v1885
    %v1887 = vsel %vm1698, %v1878, %v1878
    %v1888 = vsel %vm1700, %v1878, %v1887
    %v1889 = vrot.slane %v1886, 7
    %v1890 = vsel %vm1703, %v1889, %v1888
    %v1891 = vsel %vm1705, %v1889, %v1890
    %v1892 = vsel %vm1707, %v1889, %v1891
    %v1893 = vsel %vm1709, %v1889, %v1892
    %1895 = vst.msk [vmem:[#allocation4 + $0x6] sm:$0x3] %vm36, %v1893
    %v1896 = vrot.slane %v1878, 1
    %v1897 = vsel %vm1698, %v1896, %v1896
    %v1898 = vsel %vm1700, %v1896, %v1897
    %v1899 = vsel %vm1703, %v1886, %v1898
    %v1900 = vsel %vm1705, %v1886, %v1899
    %v1901 = vsel %vm1707, %v1886, %v1900
    %v1902 = vsel %vm1709, %v1886, %v1901
    %1903 = vrot.lane.b32.xlu0 %v1902, 32
    %v1904 = vpop.permute.xlu0 %1903
    %1906 = vst.msk [vmem:[#allocation4 + $0x6] sm:$0x3] %vm1723, %v1904
    %v1907 = vcombine.high %v1878, %v1878
    %v1908 = vcombine.high %v1886, %v1886
    %v1909 = vsel %vm1698, %v1907, %v1907
    %v1910 = vsel %vm1700, %v1907, %v1909
    %v1911 = vrot.slane %v1908, 7
    %v1912 = vsel %vm1703, %v1911, %v1910
    %v1913 = vsel %vm1705, %v1911, %v1912
    %v1914 = vsel %vm1707, %v1911, %v1913
    %v1915 = vsel %vm1709, %v1911, %v1914
    %1916 = vrot.lane.b32.xlu0 %v1915, 64
    %v1917 = vpop.permute.xlu0 %1916
    %1919 = vst.msk [vmem:[#allocation4 + $0x6] sm:$0x3] %vm1737, %v1917
    %v1920 = vrot.slane %v1907, 1
    %v1921 = vsel %vm1698, %v1920, %v1920
    %v1922 = vsel %vm1700, %v1920, %v1921
    %v1923 = vsel %vm1703, %v1908, %v1922
    %v1924 = vsel %vm1705, %v1908, %v1923
    %v1925 = vsel %vm1707, %v1908, %v1924
    %v1926 = vsel %vm1709, %v1908, %v1925
    %1927 = vrot.lane.b32.xlu0 %v1926, 96
    %v1928 = vpop.permute.xlu0 %1927
    %1930 = vst.msk [vmem:[#allocation4 + $0x6] sm:$0x3] %vm1749, %v1928
    %v1931 = vld [vmem:[#allocation4] sm:$0xff]
    %v1932 = vld [vmem:[%s5] sm:$0xff]
    %v1933 = vld [vmem:[%s5 + $0x8] sm:$0xff]
    %v1934 = vld [vmem:[%s5 + $0x10] sm:$0xff]
    %v1935 = vld [vmem:[%s5 + $0x18] sm:$0xff]
    %v1936 = vld [vmem:[%s5 + $0x20] sm:$0xff]
    %v1937 = vld [vmem:[%s5 + $0x28] sm:$0xff]
    %v1938 = vld [vmem:[%s5 + $0x30] sm:$0xff]
    %v1939 = vld [vmem:[%s5 + $0x38] sm:$0xff]
    %v1940 = vld [vmem:[%s5 + $0x40] sm:$0xff]
    %v1941 = vld [vmem:[%s5 + $0x48] sm:$0xff]
    %v1942 = vld [vmem:[%s5 + $0x50] sm:$0xff]
    %v1943 = vld [vmem:[%s5 + $0x58] sm:$0xff]
    %v1944 = vld [vmem:[%s5 + $0x60] sm:$0xff]
    %v1945 = vld [vmem:[%s5 + $0x68] sm:$0xff]
    %v1946 = vld [vmem:[%s5 + $0x70] sm:$0xff]
    %v1947 = vld [vmem:[%s5 + $0x78] sm:$0xff]
    %v1948 = vld [vmem:[%s5 + $0x80] sm:$0xff]
    %v1949 = vld [vmem:[%s5 + $0x88] sm:$0xff]
    %v1950 = vld [vmem:[%s5 + $0x90] sm:$0xff]
    %v1951 = vld [vmem:[%s5 + $0x98] sm:$0xff]
    %v1952 = vld [vmem:[%s5 + $0xa0] sm:$0xff]
    %v1953 = vld [vmem:[%s5 + $0xa8] sm:$0xff]
    %v1954 = vld [vmem:[%s5 + $0xb0] sm:$0xff]
    %v1955 = vld [vmem:[%s5 + $0xb8] sm:$0xff]
    %v1956 = vld [vmem:[%s5 + $0xc0] sm:$0xff]
    %v1957 = vld [vmem:[%s5 + $0xc8] sm:$0xff]
    %v1958 = vld [vmem:[%s5 + $0xd0] sm:$0xff]
    %v1959 = vld [vmem:[%s5 + $0xd8] sm:$0xff]
    %v1960 = vld [vmem:[%s5 + $0xe0] sm:$0xff]
    %v1961 = vld [vmem:[%s5 + $0xe8] sm:$0xff]
    %v1962 = vld [vmem:[%s5 + $0xf0] sm:$0xff]
    %v1963 = vld [vmem:[%s5 + $0xf8] sm:$0xff]
    %v1964 = vld [vmem:[%s5 + $0x100] sm:$0xff]
    %v1965 = vld [vmem:[%s5 + $0x108] sm:$0xff]
    %v1966 = vld [vmem:[%s5 + $0x110] sm:$0xff]
    %v1967 = vld [vmem:[%s5 + $0x118] sm:$0xff]
    %v1968 = vld [vmem:[%s5 + $0x120] sm:$0xff]
    %v1969 = vld [vmem:[%s5 + $0x128] sm:$0xff]
    %v1970 = vld [vmem:[%s5 + $0x130] sm:$0xff]
    %v1971 = vld [vmem:[%s5 + $0x138] sm:$0xff]
    %v1972 = vld [vmem:[%s5 + $0x140] sm:$0xff]
    %v1973 = vld [vmem:[%s5 + $0x148] sm:$0xff]
    %v1974 = vld [vmem:[%s5 + $0x150] sm:$0xff]
    %v1975 = vld [vmem:[%s5 + $0x158] sm:$0xff]
    %v1976 = vld [vmem:[%s5 + $0x160] sm:$0xff]
    %v1977 = vld [vmem:[%s5 + $0x168] sm:$0xff]
    %v1978 = vld [vmem:[%s5 + $0x170] sm:$0xff]
    %v1979 = vld [vmem:[%s5 + $0x178] sm:$0xff]
    %v1980 = vld [vmem:[%s5 + $0x180] sm:$0xff]
    %v1981 = vld [vmem:[%s5 + $0x188] sm:$0xff]
    %v1982 = vld [vmem:[%s5 + $0x190] sm:$0xff]
    %v1983 = vld [vmem:[%s5 + $0x198] sm:$0xff]
    %v1984 = vld [vmem:[%s5 + $0x1a0] sm:$0xff]
    %v1985 = vld [vmem:[%s5 + $0x1a8] sm:$0xff]
    %v1986 = vld [vmem:[%s5 + $0x1b0] sm:$0xff]
    %v1987 = vld [vmem:[%s5 + $0x1b8] sm:$0xff]
    %v1988 = vld [vmem:[%s5 + $0x1c0] sm:$0xff]
    %v1989 = vld [vmem:[%s5 + $0x1c8] sm:$0xff]
    %v1990 = vld [vmem:[%s5 + $0x1d0] sm:$0xff]
    %v1991 = vld [vmem:[%s5 + $0x1d8] sm:$0xff]
    %v1992 = vld [vmem:[%s5 + $0x1e0] sm:$0xff]
    %v1993 = vld [vmem:[%s5 + $0x1e8] sm:$0xff]
    %v1994 = vld [vmem:[%s5 + $0x1f0] sm:$0xff]
    %v1995 = vld [vmem:[%s5 + $0x1f8] sm:$0xff]
    %v1996 = vld [vmem:[%s6] sm:$0x1]
    %v1998 = vlaneseq
    %v1999 = vshrl.u32 %v1998, 7
    %v2000 = vsub.s32 0, %v1999
    %v2001 = vrot.slane %v1996, %v2000
    %v2004 = vcombine.high %v1931, %v1931
    %v2006 = vunpack.c.l.s4 1983009808
    %v2007 = vunpack.c.0.s8 %v2006
    %v2008 = vlaneseq
    %v2009 = vshrl.u32 %v2008, 7
    %v2010 = vsub.s32 %v2007, %v2009
    %v2011 = vrot.slane %v1931, %v2010
    %v2013 = vunpack.c.l.s4 1983009808
    %v2014 = vunpack.c.0.s8 %v2013
    %v2015 = vlaneseq
    %v2016 = vshrl.u32 %v2015, 7
    %v2017 = vsub.s32 %v2014, %v2016
    %v2018 = vrot.slane %v2004, %v2017
    %v2019 = vcombine.high %v2011, %v2011
    %v2020 = vcombine.high %v2018, %v2018
    %2025 = vmatprep.subr.mxu0 0.0
    %v2026 = vand.u32 %v1932, 4294901760
    %2027 = vmatpush1.msra.mxu0 %v2026
    %2028 = vmatprep.subr.mxu0 0.0
    %v2029 = vand.u32 %v1933, 4294901760
    %2030 = vmatpush1.msra.mxu0 %v2029
    %2031 = vmatprep.subr.mxu0 0.0
    %v2032 = vand.u32 %v1934, 4294901760
    %2033 = vmatpush1.msra.mxu0 %v2032
    %2034 = vmatprep.subr.mxu0 0.0
    %v2035 = vand.u32 %v1935, 4294901760
    %2036 = vmatpush1.msra.mxu0 %v2035
    %2037 = vmatprep.subr.mxu0 0.0
    %v2038 = vand.u32 %v1936, 4294901760
    %2039 = vmatpush1.msra.mxu0 %v2038
    %2040 = vmatprep.subr.mxu0 0.0
    %v2041 = vand.u32 %v1937, 4294901760
    %2042 = vmatpush1.msra.mxu0 %v2041
    %2043 = vmatprep.subr.mxu0 0.0
    %v2044 = vand.u32 %v1938, 4294901760
    %2045 = vmatpush1.msra.mxu0 %v2044
    %2046 = vmatprep.subr.mxu0 0.0
    %v2047 = vand.u32 %v1939, 4294901760
    %2048 = vmatpush1.msra.mxu0 %v2047
    %2049 = vmatprep.subr.mxu0 0.0
    %v2050 = vand.u32 %v1940, 4294901760
    %2051 = vmatpush1.msra.mxu0 %v2050
    %2052 = vmatprep.subr.mxu0 0.0
    %v2053 = vand.u32 %v1941, 4294901760
    %2054 = vmatpush1.msra.mxu0 %v2053
    %2055 = vmatprep.subr.mxu0 0.0
    %v2056 = vand.u32 %v1942, 4294901760
    %2057 = vmatpush1.msra.mxu0 %v2056
    %2058 = vmatprep.subr.mxu0 0.0
    %v2059 = vand.u32 %v1943, 4294901760
    %2060 = vmatpush1.msra.mxu0 %v2059
    %2061 = vmatprep.subr.mxu0 0.0
    %v2062 = vand.u32 %v1944, 4294901760
    %2063 = vmatpush1.msra.mxu0 %v2062
    %2064 = vmatprep.subr.mxu0 0.0
    %v2065 = vand.u32 %v1945, 4294901760
    %2066 = vmatpush1.msra.mxu0 %v2065
    %2067 = vmatprep.subr.mxu0 0.0
    %v2068 = vand.u32 %v1946, 4294901760
    %2069 = vmatpush1.msra.mxu0 %v2068
    %2070 = vmatprep.subr.mxu0 0.0
    %v2071 = vand.u32 %v1947, 4294901760
    %2072 = vmatpush1.msra.mxu0 %v2071
    %2073 = vmatprep.subr.mxu0 0.0
    %v2074 = vand.u32 %v1948, 4294901760
    %2075 = vmatpush1.msra.mxu0 %v2074
    %2076 = vmatprep.subr.mxu0 0.0
    %v2077 = vand.u32 %v1949, 4294901760
    %2078 = vmatpush1.msra.mxu0 %v2077
    %2079 = vmatprep.subr.mxu0 0.0
    %v2080 = vand.u32 %v1950, 4294901760
    %2081 = vmatpush1.msra.mxu0 %v2080
    %2082 = vmatprep.subr.mxu0 0.0
    %v2083 = vand.u32 %v1951, 4294901760
    %2084 = vmatpush1.msra.mxu0 %v2083
    %2085 = vmatprep.subr.mxu0 0.0
    %v2086 = vand.u32 %v1952, 4294901760
    %2087 = vmatpush1.msra.mxu0 %v2086
    %2088 = vmatprep.subr.mxu0 0.0
    %v2089 = vand.u32 %v1953, 4294901760
    %2090 = vmatpush1.msra.mxu0 %v2089
    %2091 = vmatprep.subr.mxu0 0.0
    %v2092 = vand.u32 %v1954, 4294901760
    %2093 = vmatpush1.msra.mxu0 %v2092
    %2094 = vmatprep.subr.mxu0 0.0
    %v2095 = vand.u32 %v1955, 4294901760
    %2096 = vmatpush1.msra.mxu0 %v2095
    %2097 = vmatprep.subr.mxu0 0.0
    %v2098 = vand.u32 %v1956, 4294901760
    %2099 = vmatpush1.msra.mxu0 %v2098
    %2100 = vmatprep.subr.mxu0 0.0
    %v2101 = vand.u32 %v1957, 4294901760
    %2102 = vmatpush1.msra.mxu0 %v2101
    %2103 = vmatprep.subr.mxu0 0.0
    %v2104 = vand.u32 %v1958, 4294901760
    %2105 = vmatpush1.msra.mxu0 %v2104
    %2106 = vmatprep.subr.mxu0 0.0
    %v2107 = vand.u32 %v1959, 4294901760
    %2108 = vmatpush1.msra.mxu0 %v2107
    %2109 = vmatprep.subr.mxu0 0.0
    %v2110 = vand.u32 %v1960, 4294901760
    %2111 = vmatpush1.msra.mxu0 %v2110
    %2112 = vmatprep.subr.mxu0 0.0
    %v2113 = vand.u32 %v1961, 4294901760
    %2114 = vmatpush1.msra.mxu0 %v2113
    %2115 = vmatprep.subr.mxu0 0.0
    %v2116 = vand.u32 %v1962, 4294901760
    %2117 = vmatpush1.msra.mxu0 %v2116
    %2118 = vmatprep.subr.mxu0 0.0
    %v2119 = vand.u32 %v1963, 4294901760
    %2120 = vmatpush1.msra.mxu0 %v2119
    %v2121 = vand.u32 %v2019, 4294901760
    %v2122 = vsub.f32 %v2019, %v2121
    %v2123 = vand.u32 %v2122, 4294901760
    %v2124 = vsub.f32 %v2122, %v2123
    %v2125 = vand.u32 %v2124, 4294901760
    %2126 = vmatprep.mubr.f32.mxu0 %v2125
    %v2127 = vand.u32 %v2011, 4294901760
    %v2128 = vsub.f32 %v2011, %v2127
    %v2129 = vand.u32 %v2128, 4294901760
    %v2130 = vsub.f32 %v2128, %v2129
    %v2131 = vand.u32 %v2130, 4294901760
    %2132 = vmatmul.mubr.f32.gmra.mrb[0].mxu0 %v2131
    %v2133 = vpop.f32.mrb[0].mxu0
    %v2134 = vadd.f32 %v2001, %v2133
    %v2135 = vpop.f32.mrb[0].mxu0
    %2136 = vdwg.mxu0
    %2137 = vmatprep.subr.mxu0 0.0
    %v2138 = vand.u32 %v1932, 4294901760
    %v2139 = vsub.f32 %v1932, %v2138
    %v2140 = vand.u32 %v2139, 4294901760
    %v2141 = vsub.f32 %v2139, %v2140
    %v2142 = vand.u32 %v2141, 4294901760
    %2143 = vmatpush1.msra.mxu0 %v2142
    %2144 = vmatprep.subr.mxu0 0.0
    %v2145 = vand.u32 %v1933, 4294901760
    %v2146 = vsub.f32 %v1933, %v2145
    %v2147 = vand.u32 %v2146, 4294901760
    %v2148 = vsub.f32 %v2146, %v2147
    %v2149 = vand.u32 %v2148, 4294901760
    %2150 = vmatpush1.msra.mxu0 %v2149
    %2151 = vmatprep.subr.mxu0 0.0
    %v2152 = vand.u32 %v1934, 4294901760
    %v2153 = vsub.f32 %v1934, %v2152
    %v2154 = vand.u32 %v2153, 4294901760
    %v2155 = vsub.f32 %v2153, %v2154
    %v2156 = vand.u32 %v2155, 4294901760
    %2157 = vmatpush1.msra.mxu0 %v2156
    %2158 = vmatprep.subr.mxu0 0.0
    %v2159 = vand.u32 %v1935, 4294901760
    %v2160 = vsub.f32 %v1935, %v2159
    %v2161 = vand.u32 %v2160, 4294901760
    %v2162 = vsub.f32 %v2160, %v2161
    %v2163 = vand.u32 %v2162, 4294901760
    %2164 = vmatpush1.msra.mxu0 %v2163
    %2165 = vmatprep.subr.mxu0 0.0
    %v2166 = vand.u32 %v1936, 4294901760
    %v2167 = vsub.f32 %v1936, %v2166
    %v2168 = vand.u32 %v2167, 4294901760
    %v2169 = vsub.f32 %v2167, %v2168
    %v2170 = vand.u32 %v2169, 4294901760
    %2171 = vmatpush1.msra.mxu0 %v2170
    %2172 = vmatprep.subr.mxu0 0.0
    %v2173 = vand.u32 %v1937, 4294901760
    %v2174 = vsub.f32 %v1937, %v2173
    %v2175 = vand.u32 %v2174, 4294901760
    %v2176 = vsub.f32 %v2174, %v2175
    %v2177 = vand.u32 %v2176, 4294901760
    %2178 = vmatpush1.msra.mxu0 %v2177
    %2179 = vmatprep.subr.mxu0 0.0
    %v2180 = vand.u32 %v1938, 4294901760
    %v2181 = vsub.f32 %v1938, %v2180
    %v2182 = vand.u32 %v2181, 4294901760
    %v2183 = vsub.f32 %v2181, %v2182
    %v2184 = vand.u32 %v2183, 4294901760
    %2185 = vmatpush1.msra.mxu0 %v2184
    %2186 = vmatprep.subr.mxu0 0.0
    %v2187 = vand.u32 %v1939, 4294901760
    %v2188 = vsub.f32 %v1939, %v2187
    %v2189 = vand.u32 %v2188, 4294901760
    %v2190 = vsub.f32 %v2188, %v2189
    %v2191 = vand.u32 %v2190, 4294901760
    %2192 = vmatpush1.msra.mxu0 %v2191
    %2193 = vmatprep.subr.mxu0 0.0
    %v2194 = vand.u32 %v1940, 4294901760
    %v2195 = vsub.f32 %v1940, %v2194
    %v2196 = vand.u32 %v2195, 4294901760
    %v2197 = vsub.f32 %v2195, %v2196
    %v2198 = vand.u32 %v2197, 4294901760
    %2199 = vmatpush1.msra.mxu0 %v2198
    %2200 = vmatprep.subr.mxu0 0.0
    %v2201 = vand.u32 %v1941, 4294901760
    %v2202 = vsub.f32 %v1941, %v2201
    %v2203 = vand.u32 %v2202, 4294901760
    %v2204 = vsub.f32 %v2202, %v2203
    %v2205 = vand.u32 %v2204, 4294901760
    %2206 = vmatpush1.msra.mxu0 %v2205
    %2207 = vmatprep.subr.mxu0 0.0
    %v2208 = vand.u32 %v1942, 4294901760
    %v2209 = vsub.f32 %v1942, %v2208
    %v2210 = vand.u32 %v2209, 4294901760
    %v2211 = vsub.f32 %v2209, %v2210
    %v2212 = vand.u32 %v2211, 4294901760
    %2213 = vmatpush1.msra.mxu0 %v2212
    %2214 = vmatprep.subr.mxu0 0.0
    %v2215 = vand.u32 %v1943, 4294901760
    %v2216 = vsub.f32 %v1943, %v2215
    %v2217 = vand.u32 %v2216, 4294901760
    %v2218 = vsub.f32 %v2216, %v2217
    %v2219 = vand.u32 %v2218, 4294901760
    %2220 = vmatpush1.msra.mxu0 %v2219
    %2221 = vmatprep.subr.mxu0 0.0
    %v2222 = vand.u32 %v1944, 4294901760
    %v2223 = vsub.f32 %v1944, %v2222
    %v2224 = vand.u32 %v2223, 4294901760
    %v2225 = vsub.f32 %v2223, %v2224
    %v2226 = vand.u32 %v2225, 4294901760
    %2227 = vmatpush1.msra.mxu0 %v2226
    %2228 = vmatprep.subr.mxu0 0.0
    %v2229 = vand.u32 %v1945, 4294901760
    %v2230 = vsub.f32 %v1945, %v2229
    %v2231 = vand.u32 %v2230, 4294901760
    %v2232 = vsub.f32 %v2230, %v2231
    %v2233 = vand.u32 %v2232, 4294901760
    %2234 = vmatpush1.msra.mxu0 %v2233
    %2235 = vmatprep.subr.mxu0 0.0
    %v2236 = vand.u32 %v1946, 4294901760
    %v2237 = vsub.f32 %v1946, %v2236
    %v2238 = vand.u32 %v2237, 4294901760
    %v2239 = vsub.f32 %v2237, %v2238
    %v2240 = vand.u32 %v2239, 4294901760
    %2241 = vmatpush1.msra.mxu0 %v2240
    %2242 = vmatprep.subr.mxu0 0.0
    %v2243 = vand.u32 %v1947, 4294901760
    %v2244 = vsub.f32 %v1947, %v2243
    %v2245 = vand.u32 %v2244, 4294901760
    %v2246 = vsub.f32 %v2244, %v2245
    %v2247 = vand.u32 %v2246, 4294901760
    %2248 = vmatpush1.msra.mxu0 %v2247
    %2249 = vmatprep.subr.mxu0 0.0
    %v2250 = vand.u32 %v1948, 4294901760
    %v2251 = vsub.f32 %v1948, %v2250
    %v2252 = vand.u32 %v2251, 4294901760
    %v2253 = vsub.f32 %v2251, %v2252
    %v2254 = vand.u32 %v2253, 4294901760
    %2255 = vmatpush1.msra.mxu0 %v2254
    %2256 = vmatprep.subr.mxu0 0.0
    %v2257 = vand.u32 %v1949, 4294901760
    %v2258 = vsub.f32 %v1949, %v2257
    %v2259 = vand.u32 %v2258, 4294901760
    %v2260 = vsub.f32 %v2258, %v2259
    %v2261 = vand.u32 %v2260, 4294901760
    %2262 = vmatpush1.msra.mxu0 %v2261
    %2263 = vmatprep.subr.mxu0 0.0
    %v2264 = vand.u32 %v1950, 4294901760
    %v2265 = vsub.f32 %v1950, %v2264
    %v2266 = vand.u32 %v2265, 4294901760
    %v2267 = vsub.f32 %v2265, %v2266
    %v2268 = vand.u32 %v2267, 4294901760
    %2269 = vmatpush1.msra.mxu0 %v2268
    %2270 = vmatprep.subr.mxu0 0.0
    %v2271 = vand.u32 %v1951, 4294901760
    %v2272 = vsub.f32 %v1951, %v2271
    %v2273 = vand.u32 %v2272, 4294901760
    %v2274 = vsub.f32 %v2272, %v2273
    %v2275 = vand.u32 %v2274, 4294901760
    %2276 = vmatpush1.msra.mxu0 %v2275
    %2277 = vmatprep.subr.mxu0 0.0
    %v2278 = vand.u32 %v1952, 4294901760
    %v2279 = vsub.f32 %v1952, %v2278
    %v2280 = vand.u32 %v2279, 4294901760
    %v2281 = vsub.f32 %v2279, %v2280
    %v2282 = vand.u32 %v2281, 4294901760
    %2283 = vmatpush1.msra.mxu0 %v2282
    %2284 = vmatprep.subr.mxu0 0.0
    %v2285 = vand.u32 %v1953, 4294901760
    %v2286 = vsub.f32 %v1953, %v2285
    %v2287 = vand.u32 %v2286, 4294901760
    %v2288 = vsub.f32 %v2286, %v2287
    %v2289 = vand.u32 %v2288, 4294901760
    %2290 = vmatpush1.msra.mxu0 %v2289
    %2291 = vmatprep.subr.mxu0 0.0
    %v2292 = vand.u32 %v1954, 4294901760
    %v2293 = vsub.f32 %v1954, %v2292
    %v2294 = vand.u32 %v2293, 4294901760
    %v2295 = vsub.f32 %v2293, %v2294
    %v2296 = vand.u32 %v2295, 4294901760
    %2297 = vmatpush1.msra.mxu0 %v2296
    %2298 = vmatprep.subr.mxu0 0.0
    %v2299 = vand.u32 %v1955, 4294901760
    %v2300 = vsub.f32 %v1955, %v2299
    %v2301 = vand.u32 %v2300, 4294901760
    %v2302 = vsub.f32 %v2300, %v2301
    %v2303 = vand.u32 %v2302, 4294901760
    %2304 = vmatpush1.msra.mxu0 %v2303
    %2305 = vmatprep.subr.mxu0 0.0
    %v2306 = vand.u32 %v1956, 4294901760
    %v2307 = vsub.f32 %v1956, %v2306
    %v2308 = vand.u32 %v2307, 4294901760
    %v2309 = vsub.f32 %v2307, %v2308
    %v2310 = vand.u32 %v2309, 4294901760
    %2311 = vmatpush1.msra.mxu0 %v2310
    %2312 = vmatprep.subr.mxu0 0.0
    %v2313 = vand.u32 %v1957, 4294901760
    %v2314 = vsub.f32 %v1957, %v2313
    %v2315 = vand.u32 %v2314, 4294901760
    %v2316 = vsub.f32 %v2314, %v2315
    %v2317 = vand.u32 %v2316, 4294901760
    %2318 = vmatpush1.msra.mxu0 %v2317
    %2319 = vmatprep.subr.mxu0 0.0
    %v2320 = vand.u32 %v1958, 4294901760
    %v2321 = vsub.f32 %v1958, %v2320
    %v2322 = vand.u32 %v2321, 4294901760
    %v2323 = vsub.f32 %v2321, %v2322
    %v2324 = vand.u32 %v2323, 4294901760
    %2325 = vmatpush1.msra.mxu0 %v2324
    %2326 = vmatprep.subr.mxu0 0.0
    %v2327 = vand.u32 %v1959, 4294901760
    %v2328 = vsub.f32 %v1959, %v2327
    %v2329 = vand.u32 %v2328, 4294901760
    %v2330 = vsub.f32 %v2328, %v2329
    %v2331 = vand.u32 %v2330, 4294901760
    %2332 = vmatpush1.msra.mxu0 %v2331
    %2333 = vmatprep.subr.mxu0 0.0
    %v2334 = vand.u32 %v1960, 4294901760
    %v2335 = vsub.f32 %v1960, %v2334
    %v2336 = vand.u32 %v2335, 4294901760
    %v2337 = vsub.f32 %v2335, %v2336
    %v2338 = vand.u32 %v2337, 4294901760
    %2339 = vmatpush1.msra.mxu0 %v2338
    %2340 = vmatprep.subr.mxu0 0.0
    %v2341 = vand.u32 %v1961, 4294901760
    %v2342 = vsub.f32 %v1961, %v2341
    %v2343 = vand.u32 %v2342, 4294901760
    %v2344 = vsub.f32 %v2342, %v2343
    %v2345 = vand.u32 %v2344, 4294901760
    %2346 = vmatpush1.msra.mxu0 %v2345
    %2347 = vmatprep.subr.mxu0 0.0
    %v2348 = vand.u32 %v1962, 4294901760
    %v2349 = vsub.f32 %v1962, %v2348
    %v2350 = vand.u32 %v2349, 4294901760
    %v2351 = vsub.f32 %v2349, %v2350
    %v2352 = vand.u32 %v2351, 4294901760
    %2353 = vmatpush1.msra.mxu0 %v2352
    %2354 = vmatprep.subr.mxu0 0.0
    %v2355 = vand.u32 %v1963, 4294901760
    %v2356 = vsub.f32 %v1963, %v2355
    %v2357 = vand.u32 %v2356, 4294901760
    %v2358 = vsub.f32 %v2356, %v2357
    %v2359 = vand.u32 %v2358, 4294901760
    %2360 = vmatpush1.msra.mxu0 %v2359
    %v2361 = vand.u32 %v2019, 4294901760
    %2362 = vmatprep.mubr.f32.mxu0 %v2361
    %v2363 = vand.u32 %v2011, 4294901760
    %2364 = vmatmul.mubr.f32.gmra.mrb[0].mxu0 %v2363
    %v2365 = vpop.f32.mrb[0].mxu0
    %v2366 = vadd.f32 %v2134, %v2365
    %v2367 = vpop.f32.mrb[0].mxu0
    %2368 = vdwg.mxu0
    %2369 = vmatprep.subr.mxu0 0.0
    %v2370 = vand.u32 %v1932, 4294901760
    %v2371 = vsub.f32 %v1932, %v2370
    %2372 = vmatpush1.msra.mxu0 %v2371
    %2373 = vmatprep.subr.mxu0 0.0
    %v2374 = vand.u32 %v1933, 4294901760
    %v2375 = vsub.f32 %v1933, %v2374
    %2376 = vmatpush1.msra.mxu0 %v2375
    %2377 = vmatprep.subr.mxu0 0.0
    %v2378 = vand.u32 %v1934, 4294901760
    %v2379 = vsub.f32 %v1934, %v2378
    %2380 = vmatpush1.msra.mxu0 %v2379
    %2381 = vmatprep.subr.mxu0 0.0
    %v2382 = vand.u32 %v1935, 4294901760
    %v2383 = vsub.f32 %v1935, %v2382
    %2384 = vmatpush1.msra.mxu0 %v2383
    %2385 = vmatprep.subr.mxu0 0.0
    %v2386 = vand.u32 %v1936, 4294901760
    %v2387 = vsub.f32 %v1936, %v2386
    %2388 = vmatpush1.msra.mxu0 %v2387
    %2389 = vmatprep.subr.mxu0 0.0
    %v2390 = vand.u32 %v1937, 4294901760
    %v2391 = vsub.f32 %v1937, %v2390
    %2392 = vmatpush1.msra.mxu0 %v2391
    %2393 = vmatprep.subr.mxu0 0.0
    %v2394 = vand.u32 %v1938, 4294901760
    %v2395 = vsub.f32 %v1938, %v2394
    %2396 = vmatpush1.msra.mxu0 %v2395
    %2397 = vmatprep.subr.mxu0 0.0
    %v2398 = vand.u32 %v1939, 4294901760
    %v2399 = vsub.f32 %v1939, %v2398
    %2400 = vmatpush1.msra.mxu0 %v2399
    %2401 = vmatprep.subr.mxu0 0.0
    %v2402 = vand.u32 %v1940, 4294901760
    %v2403 = vsub.f32 %v1940, %v2402
    %2404 = vmatpush1.msra.mxu0 %v2403
    %2405 = vmatprep.subr.mxu0 0.0
    %v2406 = vand.u32 %v1941, 4294901760
    %v2407 = vsub.f32 %v1941, %v2406
    %2408 = vmatpush1.msra.mxu0 %v2407
    %2409 = vmatprep.subr.mxu0 0.0
    %v2410 = vand.u32 %v1942, 4294901760
    %v2411 = vsub.f32 %v1942, %v2410
    %2412 = vmatpush1.msra.mxu0 %v2411
    %2413 = vmatprep.subr.mxu0 0.0
    %v2414 = vand.u32 %v1943, 4294901760
    %v2415 = vsub.f32 %v1943, %v2414
    %2416 = vmatpush1.msra.mxu0 %v2415
    %2417 = vmatprep.subr.mxu0 0.0
    %v2418 = vand.u32 %v1944, 4294901760
    %v2419 = vsub.f32 %v1944, %v2418
    %2420 = vmatpush1.msra.mxu0 %v2419
    %2421 = vmatprep.subr.mxu0 0.0
    %v2422 = vand.u32 %v1945, 4294901760
    %v2423 = vsub.f32 %v1945, %v2422
    %2424 = vmatpush1.msra.mxu0 %v2423
    %2425 = vmatprep.subr.mxu0 0.0
    %v2426 = vand.u32 %v1946, 4294901760
    %v2427 = vsub.f32 %v1946, %v2426
    %2428 = vmatpush1.msra.mxu0 %v2427
    %2429 = vmatprep.subr.mxu0 0.0
    %v2430 = vand.u32 %v1947, 4294901760
    %v2431 = vsub.f32 %v1947, %v2430
    %2432 = vmatpush1.msra.mxu0 %v2431
    %2433 = vmatprep.subr.mxu0 0.0
    %v2434 = vand.u32 %v1948, 4294901760
    %v2435 = vsub.f32 %v1948, %v2434
    %2436 = vmatpush1.msra.mxu0 %v2435
    %2437 = vmatprep.subr.mxu0 0.0
    %v2438 = vand.u32 %v1949, 4294901760
    %v2439 = vsub.f32 %v1949, %v2438
    %2440 = vmatpush1.msra.mxu0 %v2439
    %2441 = vmatprep.subr.mxu0 0.0
    %v2442 = vand.u32 %v1950, 4294901760
    %v2443 = vsub.f32 %v1950, %v2442
    %2444 = vmatpush1.msra.mxu0 %v2443
    %2445 = vmatprep.subr.mxu0 0.0
    %v2446 = vand.u32 %v1951, 4294901760
    %v2447 = vsub.f32 %v1951, %v2446
    %2448 = vmatpush1.msra.mxu0 %v2447
    %2449 = vmatprep.subr.mxu0 0.0
    %v2450 = vand.u32 %v1952, 4294901760
    %v2451 = vsub.f32 %v1952, %v2450
    %2452 = vmatpush1.msra.mxu0 %v2451
    %2453 = vmatprep.subr.mxu0 0.0
    %v2454 = vand.u32 %v1953, 4294901760
    %v2455 = vsub.f32 %v1953, %v2454
    %2456 = vmatpush1.msra.mxu0 %v2455
    %2457 = vmatprep.subr.mxu0 0.0
    %v2458 = vand.u32 %v1954, 4294901760
    %v2459 = vsub.f32 %v1954, %v2458
    %2460 = vmatpush1.msra.mxu0 %v2459
    %2461 = vmatprep.subr.mxu0 0.0
    %v2462 = vand.u32 %v1955, 4294901760
    %v2463 = vsub.f32 %v1955, %v2462
    %2464 = vmatpush1.msra.mxu0 %v2463
    %2465 = vmatprep.subr.mxu0 0.0
    %v2466 = vand.u32 %v1956, 4294901760
    %v2467 = vsub.f32 %v1956, %v2466
    %2468 = vmatpush1.msra.mxu0 %v2467
    %2469 = vmatprep.subr.mxu0 0.0
    %v2470 = vand.u32 %v1957, 4294901760
    %v2471 = vsub.f32 %v1957, %v2470
    %2472 = vmatpush1.msra.mxu0 %v2471
    %2473 = vmatprep.subr.mxu0 0.0
    %v2474 = vand.u32 %v1958, 4294901760
    %v2475 = vsub.f32 %v1958, %v2474
    %2476 = vmatpush1.msra.mxu0 %v2475
    %2477 = vmatprep.subr.mxu0 0.0
    %v2478 = vand.u32 %v1959, 4294901760
    %v2479 = vsub.f32 %v1959, %v2478
    %2480 = vmatpush1.msra.mxu0 %v2479
    %2481 = vmatprep.subr.mxu0 0.0
    %v2482 = vand.u32 %v1960, 4294901760
    %v2483 = vsub.f32 %v1960, %v2482
    %2484 = vmatpush1.msra.mxu0 %v2483
    %2485 = vmatprep.subr.mxu0 0.0
    %v2486 = vand.u32 %v1961, 4294901760
    %v2487 = vsub.f32 %v1961, %v2486
    %2488 = vmatpush1.msra.mxu0 %v2487
    %2489 = vmatprep.subr.mxu0 0.0
    %v2490 = vand.u32 %v1962, 4294901760
    %v2491 = vsub.f32 %v1962, %v2490
    %2492 = vmatpush1.msra.mxu0 %v2491
    %2493 = vmatprep.subr.mxu0 0.0
    %v2494 = vand.u32 %v1963, 4294901760
    %v2495 = vsub.f32 %v1963, %v2494
    %2496 = vmatpush1.msra.mxu0 %v2495
    %v2497 = vand.u32 %v2019, 4294901760
    %v2498 = vsub.f32 %v2019, %v2497
    %2499 = vmatprep.mubr.f32.mxu0 %v2498
    %v2500 = vand.u32 %v2011, 4294901760
    %v2501 = vsub.f32 %v2011, %v2500
    %2502 = vmatmul.mubr.f32.gmra.mrb[0].mxu0 %v2501
    %v2503 = vpop.f32.mrb[0].mxu0
    %v2504 = vadd.f32 %v2366, %v2503
    %v2505 = vpop.f32.mrb[0].mxu0
    %2506 = vdwg.mxu0
    %2507 = vmatprep.subr.mxu0 0.0
    %v2508 = vand.u32 %v1932, 4294901760
    %2509 = vmatpush1.msra.mxu0 %v2508
    %2510 = vmatprep.subr.mxu0 0.0
    %v2511 = vand.u32 %v1933, 4294901760
    %2512 = vmatpush1.msra.mxu0 %v2511
    %2513 = vmatprep.subr.mxu0 0.0
    %v2514 = vand.u32 %v1934, 4294901760
    %2515 = vmatpush1.msra.mxu0 %v2514
    %2516 = vmatprep.subr.mxu0 0.0
    %v2517 = vand.u32 %v1935, 4294901760
    %2518 = vmatpush1.msra.mxu0 %v2517
    %2519 = vmatprep.subr.mxu0 0.0
    %v2520 = vand.u32 %v1936, 4294901760
    %2521 = vmatpush1.msra.mxu0 %v2520
    %2522 = vmatprep.subr.mxu0 0.0
    %v2523 = vand.u32 %v1937, 4294901760
    %2524 = vmatpush1.msra.mxu0 %v2523
    %2525 = vmatprep.subr.mxu0 0.0
    %v2526 = vand.u32 %v1938, 4294901760
    %2527 = vmatpush1.msra.mxu0 %v2526
    %2528 = vmatprep.subr.mxu0 0.0
    %v2529 = vand.u32 %v1939, 4294901760
    %2530 = vmatpush1.msra.mxu0 %v2529
    %2531 = vmatprep.subr.mxu0 0.0
    %v2532 = vand.u32 %v1940, 4294901760
    %2533 = vmatpush1.msra.mxu0 %v2532
    %2534 = vmatprep.subr.mxu0 0.0
    %v2535 = vand.u32 %v1941, 4294901760
    %2536 = vmatpush1.msra.mxu0 %v2535
    %2537 = vmatprep.subr.mxu0 0.0
    %v2538 = vand.u32 %v1942, 4294901760
    %2539 = vmatpush1.msra.mxu0 %v2538
    %2540 = vmatprep.subr.mxu0 0.0
    %v2541 = vand.u32 %v1943, 4294901760
    %2542 = vmatpush1.msra.mxu0 %v2541
    %2543 = vmatprep.subr.mxu0 0.0
    %v2544 = vand.u32 %v1944, 4294901760
    %2545 = vmatpush1.msra.mxu0 %v2544
    %2546 = vmatprep.subr.mxu0 0.0
    %v2547 = vand.u32 %v1945, 4294901760
    %2548 = vmatpush1.msra.mxu0 %v2547
    %2549 = vmatprep.subr.mxu0 0.0
    %v2550 = vand.u32 %v1946, 4294901760
    %2551 = vmatpush1.msra.mxu0 %v2550
    %2552 = vmatprep.subr.mxu0 0.0
    %v2553 = vand.u32 %v1947, 4294901760
    %2554 = vmatpush1.msra.mxu0 %v2553
    %2555 = vmatprep.subr.mxu0 0.0
    %v2556 = vand.u32 %v1948, 4294901760
    %2557 = vmatpush1.msra.mxu0 %v2556
    %2558 = vmatprep.subr.mxu0 0.0
    %v2559 = vand.u32 %v1949, 4294901760
    %2560 = vmatpush1.msra.mxu0 %v2559
    %2561 = vmatprep.subr.mxu0 0.0
    %v2562 = vand.u32 %v1950, 4294901760
    %2563 = vmatpush1.msra.mxu0 %v2562
    %2564 = vmatprep.subr.mxu0 0.0
    %v2565 = vand.u32 %v1951, 4294901760
    %2566 = vmatpush1.msra.mxu0 %v2565
    %2567 = vmatprep.subr.mxu0 0.0
    %v2568 = vand.u32 %v1952, 4294901760
    %2569 = vmatpush1.msra.mxu0 %v2568
    %2570 = vmatprep.subr.mxu0 0.0
    %v2571 = vand.u32 %v1953, 4294901760
    %2572 = vmatpush1.msra.mxu0 %v2571
    %2573 = vmatprep.subr.mxu0 0.0
    %v2574 = vand.u32 %v1954, 4294901760
    %2575 = vmatpush1.msra.mxu0 %v2574
    %2576 = vmatprep.subr.mxu0 0.0
    %v2577 = vand.u32 %v1955, 4294901760
    %2578 = vmatpush1.msra.mxu0 %v2577
    %2579 = vmatprep.subr.mxu0 0.0
    %v2580 = vand.u32 %v1956, 4294901760
    %2581 = vmatpush1.msra.mxu0 %v2580
    %2582 = vmatprep.subr.mxu0 0.0
    %v2583 = vand.u32 %v1957, 4294901760
    %2584 = vmatpush1.msra.mxu0 %v2583
    %2585 = vmatprep.subr.mxu0 0.0
    %v2586 = vand.u32 %v1958, 4294901760
    %2587 = vmatpush1.msra.mxu0 %v2586
    %2588 = vmatprep.subr.mxu0 0.0
    %v2589 = vand.u32 %v1959, 4294901760
    %2590 = vmatpush1.msra.mxu0 %v2589
    %2591 = vmatprep.subr.mxu0 0.0
    %v2592 = vand.u32 %v1960, 4294901760
    %2593 = vmatpush1.msra.mxu0 %v2592
    %2594 = vmatprep.subr.mxu0 0.0
    %v2595 = vand.u32 %v1961, 4294901760
    %2596 = vmatpush1.msra.mxu0 %v2595
    %2597 = vmatprep.subr.mxu0 0.0
    %v2598 = vand.u32 %v1962, 4294901760
    %2599 = vmatpush1.msra.mxu0 %v2598
    %2600 = vmatprep.subr.mxu0 0.0
    %v2601 = vand.u32 %v1963, 4294901760
    %2602 = vmatpush1.msra.mxu0 %v2601
    %v2603 = vand.u32 %v2019, 4294901760
    %v2604 = vsub.f32 %v2019, %v2603
    %v2605 = vand.u32 %v2604, 4294901760
    %2606 = vmatprep.mubr.f32.mxu0 %v2605
    %v2607 = vand.u32 %v2011, 4294901760
    %v2608 = vsub.f32 %v2011, %v2607
    %v2609 = vand.u32 %v2608, 4294901760
    %2610 = vmatmul.mubr.f32.gmra.mrb[0].mxu0 %v2609
    %v2611 = vpop.f32.mrb[0].mxu0
    %v2612 = vadd.f32 %v2504, %v2611
    %v2613 = vpop.f32.mrb[0].mxu0
    %2614 = vdwg.mxu0
    %2615 = vmatprep.subr.mxu0 0.0
    %v2616 = vand.u32 %v1932, 4294901760
    %v2617 = vsub.f32 %v1932, %v2616
    %v2618 = vand.u32 %v2617, 4294901760
    %2619 = vmatpush1.msra.mxu0 %v2618
    %2620 = vmatprep.subr.mxu0 0.0
    %v2621 = vand.u32 %v1933, 4294901760
    %v2622 = vsub.f32 %v1933, %v2621
    %v2623 = vand.u32 %v2622, 4294901760
    %2624 = vmatpush1.msra.mxu0 %v2623
    %2625 = vmatprep.subr.mxu0 0.0
    %v2626 = vand.u32 %v1934, 4294901760
    %v2627 = vsub.f32 %v1934, %v2626
    %v2628 = vand.u32 %v2627, 4294901760
    %2629 = vmatpush1.msra.mxu0 %v2628
    %2630 = vmatprep.subr.mxu0 0.0
    %v2631 = vand.u32 %v1935, 4294901760
    %v2632 = vsub.f32 %v1935, %v2631
    %v2633 = vand.u32 %v2632, 4294901760
    %2634 = vmatpush1.msra.mxu0 %v2633
    %2635 = vmatprep.subr.mxu0 0.0
    %v2636 = vand.u32 %v1936, 4294901760
    %v2637 = vsub.f32 %v1936, %v2636
    %v2638 = vand.u32 %v2637, 4294901760
    %2639 = vmatpush1.msra.mxu0 %v2638
    %2640 = vmatprep.subr.mxu0 0.0
    %v2641 = vand.u32 %v1937, 4294901760
    %v2642 = vsub.f32 %v1937, %v2641
    %v2643 = vand.u32 %v2642, 4294901760
    %2644 = vmatpush1.msra.mxu0 %v2643
    %2645 = vmatprep.subr.mxu0 0.0
    %v2646 = vand.u32 %v1938, 4294901760
    %v2647 = vsub.f32 %v1938, %v2646
    %v2648 = vand.u32 %v2647, 4294901760
    %2649 = vmatpush1.msra.mxu0 %v2648
    %2650 = vmatprep.subr.mxu0 0.0
    %v2651 = vand.u32 %v1939, 4294901760
    %v2652 = vsub.f32 %v1939, %v2651
    %v2653 = vand.u32 %v2652, 4294901760
    %2654 = vmatpush1.msra.mxu0 %v2653
    %2655 = vmatprep.subr.mxu0 0.0
    %v2656 = vand.u32 %v1940, 4294901760
    %v2657 = vsub.f32 %v1940, %v2656
    %v2658 = vand.u32 %v2657, 4294901760
    %2659 = vmatpush1.msra.mxu0 %v2658
    %2660 = vmatprep.subr.mxu0 0.0
    %v2661 = vand.u32 %v1941, 4294901760
    %v2662 = vsub.f32 %v1941, %v2661
    %v2663 = vand.u32 %v2662, 4294901760
    %2664 = vmatpush1.msra.mxu0 %v2663
    %2665 = vmatprep.subr.mxu0 0.0
    %v2666 = vand.u32 %v1942, 4294901760
    %v2667 = vsub.f32 %v1942, %v2666
    %v2668 = vand.u32 %v2667, 4294901760
    %2669 = vmatpush1.msra.mxu0 %v2668
    %2670 = vmatprep.subr.mxu0 0.0
    %v2671 = vand.u32 %v1943, 4294901760
    %v2672 = vsub.f32 %v1943, %v2671
    %v2673 = vand.u32 %v2672, 4294901760
    %2674 = vmatpush1.msra.mxu0 %v2673
    %2675 = vmatprep.subr.mxu0 0.0
    %v2676 = vand.u32 %v1944, 4294901760
    %v2677 = vsub.f32 %v1944, %v2676
    %v2678 = vand.u32 %v2677, 4294901760
    %2679 = vmatpush1.msra.mxu0 %v2678
    %2680 = vmatprep.subr.mxu0 0.0
    %v2681 = vand.u32 %v1945, 4294901760
    %v2682 = vsub.f32 %v1945, %v2681
    %v2683 = vand.u32 %v2682, 4294901760
    %2684 = vmatpush1.msra.mxu0 %v2683
    %2685 = vmatprep.subr.mxu0 0.0
    %v2686 = vand.u32 %v1946, 4294901760
    %v2687 = vsub.f32 %v1946, %v2686
    %v2688 = vand.u32 %v2687, 4294901760
    %2689 = vmatpush1.msra.mxu0 %v2688
    %2690 = vmatprep.subr.mxu0 0.0
    %v2691 = vand.u32 %v1947, 4294901760
    %v2692 = vsub.f32 %v1947, %v2691
    %v2693 = vand.u32 %v2692, 4294901760
    %2694 = vmatpush1.msra.mxu0 %v2693
    %2695 = vmatprep.subr.mxu0 0.0
    %v2696 = vand.u32 %v1948, 4294901760
    %v2697 = vsub.f32 %v1948, %v2696
    %v2698 = vand.u32 %v2697, 4294901760
    %2699 = vmatpush1.msra.mxu0 %v2698
    %2700 = vmatprep.subr.mxu0 0.0
    %v2701 = vand.u32 %v1949, 4294901760
    %v2702 = vsub.f32 %v1949, %v2701
    %v2703 = vand.u32 %v2702, 4294901760
    %2704 = vmatpush1.msra.mxu0 %v2703
    %2705 = vmatprep.subr.mxu0 0.0
    %v2706 = vand.u32 %v1950, 4294901760
    %v2707 = vsub.f32 %v1950, %v2706
    %v2708 = vand.u32 %v2707, 4294901760
    %2709 = vmatpush1.msra.mxu0 %v2708
    %2710 = vmatprep.subr.mxu0 0.0
    %v2711 = vand.u32 %v1951, 4294901760
    %v2712 = vsub.f32 %v1951, %v2711
    %v2713 = vand.u32 %v2712, 4294901760
    %2714 = vmatpush1.msra.mxu0 %v2713
    %2715 = vmatprep.subr.mxu0 0.0
    %v2716 = vand.u32 %v1952, 4294901760
    %v2717 = vsub.f32 %v1952, %v2716
    %v2718 = vand.u32 %v2717, 4294901760
    %2719 = vmatpush1.msra.mxu0 %v2718
    %2720 = vmatprep.subr.mxu0 0.0
    %v2721 = vand.u32 %v1953, 4294901760
    %v2722 = vsub.f32 %v1953, %v2721
    %v2723 = vand.u32 %v2722, 4294901760
    %2724 = vmatpush1.msra.mxu0 %v2723
    %2725 = vmatprep.subr.mxu0 0.0
    %v2726 = vand.u32 %v1954, 4294901760
    %v2727 = vsub.f32 %v1954, %v2726
    %v2728 = vand.u32 %v2727, 4294901760
    %2729 = vmatpush1.msra.mxu0 %v2728
    %2730 = vmatprep.subr.mxu0 0.0
    %v2731 = vand.u32 %v1955, 4294901760
    %v2732 = vsub.f32 %v1955, %v2731
    %v2733 = vand.u32 %v2732, 4294901760
    %2734 = vmatpush1.msra.mxu0 %v2733
    %2735 = vmatprep.subr.mxu0 0.0
    %v2736 = vand.u32 %v1956, 4294901760
    %v2737 = vsub.f32 %v1956, %v2736
    %v2738 = vand.u32 %v2737, 4294901760
    %2739 = vmatpush1.msra.mxu0 %v2738
    %2740 = vmatprep.subr.mxu0 0.0
    %v2741 = vand.u32 %v1957, 4294901760
    %v2742 = vsub.f32 %v1957, %v2741
    %v2743 = vand.u32 %v2742, 4294901760
    %2744 = vmatpush1.msra.mxu0 %v2743
    %2745 = vmatprep.subr.mxu0 0.0
    %v2746 = vand.u32 %v1958, 4294901760
    %v2747 = vsub.f32 %v1958, %v2746
    %v2748 = vand.u32 %v2747, 4294901760
    %2749 = vmatpush1.msra.mxu0 %v2748
    %2750 = vmatprep.subr.mxu0 0.0
    %v2751 = vand.u32 %v1959, 4294901760
    %v2752 = vsub.f32 %v1959, %v2751
    %v2753 = vand.u32 %v2752, 4294901760
    %2754 = vmatpush1.msra.mxu0 %v2753
    %2755 = vmatprep.subr.mxu0 0.0
    %v2756 = vand.u32 %v1960, 4294901760
    %v2757 = vsub.f32 %v1960, %v2756
    %v2758 = vand.u32 %v2757, 4294901760
    %2759 = vmatpush1.msra.mxu0 %v2758
    %2760 = vmatprep.subr.mxu0 0.0
    %v2761 = vand.u32 %v1961, 4294901760
    %v2762 = vsub.f32 %v1961, %v2761
    %v2763 = vand.u32 %v2762, 4294901760
    %2764 = vmatpush1.msra.mxu0 %v2763
    %2765 = vmatprep.subr.mxu0 0.0
    %v2766 = vand.u32 %v1962, 4294901760
    %v2767 = vsub.f32 %v1962, %v2766
    %v2768 = vand.u32 %v2767, 4294901760
    %2769 = vmatpush1.msra.mxu0 %v2768
    %2770 = vmatprep.subr.mxu0 0.0
    %v2771 = vand.u32 %v1963, 4294901760
    %v2772 = vsub.f32 %v1963, %v2771
    %v2773 = vand.u32 %v2772, 4294901760
    %2774 = vmatpush1.msra.mxu0 %v2773
    %v2775 = vand.u32 %v2019, 4294901760
    %2776 = vmatprep.mubr.f32.mxu0 %v2775
    %v2777 = vand.u32 %v2011, 4294901760
    %2778 = vmatmul.mubr.f32.gmra.mrb[0].mxu0 %v2777
    %v2779 = vpop.f32.mrb[0].mxu0
    %v2780 = vadd.f32 %v2612, %v2779
    %v2781 = vpop.f32.mrb[0].mxu0
    %2782 = vdwg.mxu0
    %2783 = vmatprep.subr.mxu0 0.0
    %v2784 = vand.u32 %v1932, 4294901760
    %2785 = vmatpush1.msra.mxu0 %v2784
    %2786 = vmatprep.subr.mxu0 0.0
    %v2787 = vand.u32 %v1933, 4294901760
    %2788 = vmatpush1.msra.mxu0 %v2787
    %2789 = vmatprep.subr.mxu0 0.0
    %v2790 = vand.u32 %v1934, 4294901760
    %2791 = vmatpush1.msra.mxu0 %v2790
    %2792 = vmatprep.subr.mxu0 0.0
    %v2793 = vand.u32 %v1935, 4294901760
    %2794 = vmatpush1.msra.mxu0 %v2793
    %2795 = vmatprep.subr.mxu0 0.0
    %v2796 = vand.u32 %v1936, 4294901760
    %2797 = vmatpush1.msra.mxu0 %v2796
    %2798 = vmatprep.subr.mxu0 0.0
    %v2799 = vand.u32 %v1937, 4294901760
    %2800 = vmatpush1.msra.mxu0 %v2799
    %2801 = vmatprep.subr.mxu0 0.0
    %v2802 = vand.u32 %v1938, 4294901760
    %2803 = vmatpush1.msra.mxu0 %v2802
    %2804 = vmatprep.subr.mxu0 0.0
    %v2805 = vand.u32 %v1939, 4294901760
    %2806 = vmatpush1.msra.mxu0 %v2805
    %2807 = vmatprep.subr.mxu0 0.0
    %v2808 = vand.u32 %v1940, 4294901760
    %2809 = vmatpush1.msra.mxu0 %v2808
    %2810 = vmatprep.subr.mxu0 0.0
    %v2811 = vand.u32 %v1941, 4294901760
    %2812 = vmatpush1.msra.mxu0 %v2811
    %2813 = vmatprep.subr.mxu0 0.0
    %v2814 = vand.u32 %v1942, 4294901760
    %2815 = vmatpush1.msra.mxu0 %v2814
    %2816 = vmatprep.subr.mxu0 0.0
    %v2817 = vand.u32 %v1943, 4294901760
    %2818 = vmatpush1.msra.mxu0 %v2817
    %2819 = vmatprep.subr.mxu0 0.0
    %v2820 = vand.u32 %v1944, 4294901760
    %2821 = vmatpush1.msra.mxu0 %v2820
    %2822 = vmatprep.subr.mxu0 0.0
    %v2823 = vand.u32 %v1945, 4294901760
    %2824 = vmatpush1.msra.mxu0 %v2823
    %2825 = vmatprep.subr.mxu0 0.0
    %v2826 = vand.u32 %v1946, 4294901760
    %2827 = vmatpush1.msra.mxu0 %v2826
    %2828 = vmatprep.subr.mxu0 0.0
    %v2829 = vand.u32 %v1947, 4294901760
    %2830 = vmatpush1.msra.mxu0 %v2829
    %2831 = vmatprep.subr.mxu0 0.0
    %v2832 = vand.u32 %v1948, 4294901760
    %2833 = vmatpush1.msra.mxu0 %v2832
    %2834 = vmatprep.subr.mxu0 0.0
    %v2835 = vand.u32 %v1949, 4294901760
    %2836 = vmatpush1.msra.mxu0 %v2835
    %2837 = vmatprep.subr.mxu0 0.0
    %v2838 = vand.u32 %v1950, 4294901760
    %2839 = vmatpush1.msra.mxu0 %v2838
    %2840 = vmatprep.subr.mxu0 0.0
    %v2841 = vand.u32 %v1951, 4294901760
    %2842 = vmatpush1.msra.mxu0 %v2841
    %2843 = vmatprep.subr.mxu0 0.0
    %v2844 = vand.u32 %v1952, 4294901760
    %2845 = vmatpush1.msra.mxu0 %v2844
    %2846 = vmatprep.subr.mxu0 0.0
    %v2847 = vand.u32 %v1953, 4294901760
    %2848 = vmatpush1.msra.mxu0 %v2847
    %2849 = vmatprep.subr.mxu0 0.0
    %v2850 = vand.u32 %v1954, 4294901760
    %2851 = vmatpush1.msra.mxu0 %v2850
    %2852 = vmatprep.subr.mxu0 0.0
    %v2853 = vand.u32 %v1955, 4294901760
    %2854 = vmatpush1.msra.mxu0 %v2853
    %2855 = vmatprep.subr.mxu0 0.0
    %v2856 = vand.u32 %v1956, 4294901760
    %2857 = vmatpush1.msra.mxu0 %v2856
    %2858 = vmatprep.subr.mxu0 0.0
    %v2859 = vand.u32 %v1957, 4294901760
    %2860 = vmatpush1.msra.mxu0 %v2859
    %2861 = vmatprep.subr.mxu0 0.0
    %v2862 = vand.u32 %v1958, 4294901760
    %2863 = vmatpush1.msra.mxu0 %v2862
    %2864 = vmatprep.subr.mxu0 0.0
    %v2865 = vand.u32 %v1959, 4294901760
    %2866 = vmatpush1.msra.mxu0 %v2865
    %2867 = vmatprep.subr.mxu0 0.0
    %v2868 = vand.u32 %v1960, 4294901760
    %2869 = vmatpush1.msra.mxu0 %v2868
    %2870 = vmatprep.subr.mxu0 0.0
    %v2871 = vand.u32 %v1961, 4294901760
    %2872 = vmatpush1.msra.mxu0 %v2871
    %2873 = vmatprep.subr.mxu0 0.0
    %v2874 = vand.u32 %v1962, 4294901760
    %2875 = vmatpush1.msra.mxu0 %v2874
    %2876 = vmatprep.subr.mxu0 0.0
    %v2877 = vand.u32 %v1963, 4294901760
    %2878 = vmatpush1.msra.mxu0 %v2877
    %v2879 = vand.u32 %v2019, 4294901760
    %2880 = vmatprep.mubr.f32.mxu0 %v2879
    %v2881 = vand.u32 %v2011, 4294901760
    %2882 = vmatmul.mubr.f32.gmra.mrb[0].mxu0 %v2881
    %v2883 = vpop.f32.mrb[0].mxu0
    %v2884 = vadd.f32 %v2780, %v2883
    %v2885 = vpop.f32.mrb[0].mxu0
    %2886 = vdwg.mxu0
    %2887 = vmatprep.subr.mxu0 0.0
    %v2888 = vand.u32 %v1964, 4294901760
    %2889 = vmatpush1.msra.mxu0 %v2888
    %2890 = vmatprep.subr.mxu0 0.0
    %v2891 = vand.u32 %v1965, 4294901760
    %2892 = vmatpush1.msra.mxu0 %v2891
    %2893 = vmatprep.subr.mxu0 0.0
    %v2894 = vand.u32 %v1966, 4294901760
    %2895 = vmatpush1.msra.mxu0 %v2894
    %2896 = vmatprep.subr.mxu0 0.0
    %v2897 = vand.u32 %v1967, 4294901760
    %2898 = vmatpush1.msra.mxu0 %v2897
    %2899 = vmatprep.subr.mxu0 0.0
    %v2900 = vand.u32 %v1968, 4294901760
    %2901 = vmatpush1.msra.mxu0 %v2900
    %2902 = vmatprep.subr.mxu0 0.0
    %v2903 = vand.u32 %v1969, 4294901760
    %2904 = vmatpush1.msra.mxu0 %v2903
    %2905 = vmatprep.subr.mxu0 0.0
    %v2906 = vand.u32 %v1970, 4294901760
    %2907 = vmatpush1.msra.mxu0 %v2906
    %2908 = vmatprep.subr.mxu0 0.0
    %v2909 = vand.u32 %v1971, 4294901760
    %2910 = vmatpush1.msra.mxu0 %v2909
    %2911 = vmatprep.subr.mxu0 0.0
    %v2912 = vand.u32 %v1972, 4294901760
    %2913 = vmatpush1.msra.mxu0 %v2912
    %2914 = vmatprep.subr.mxu0 0.0
    %v2915 = vand.u32 %v1973, 4294901760
    %2916 = vmatpush1.msra.mxu0 %v2915
    %2917 = vmatprep.subr.mxu0 0.0
    %v2918 = vand.u32 %v1974, 4294901760
    %2919 = vmatpush1.msra.mxu0 %v2918
    %2920 = vmatprep.subr.mxu0 0.0
    %v2921 = vand.u32 %v1975, 4294901760
    %2922 = vmatpush1.msra.mxu0 %v2921
    %2923 = vmatprep.subr.mxu0 0.0
    %v2924 = vand.u32 %v1976, 4294901760
    %2925 = vmatpush1.msra.mxu0 %v2924
    %2926 = vmatprep.subr.mxu0 0.0
    %v2927 = vand.u32 %v1977, 4294901760
    %2928 = vmatpush1.msra.mxu0 %v2927
    %2929 = vmatprep.subr.mxu0 0.0
    %v2930 = vand.u32 %v1978, 4294901760
    %2931 = vmatpush1.msra.mxu0 %v2930
    %2932 = vmatprep.subr.mxu0 0.0
    %v2933 = vand.u32 %v1979, 4294901760
    %2934 = vmatpush1.msra.mxu0 %v2933
    %2935 = vmatprep.subr.mxu0 0.0
    %v2936 = vand.u32 %v1980, 4294901760
    %2937 = vmatpush1.msra.mxu0 %v2936
    %2938 = vmatprep.subr.mxu0 0.0
    %v2939 = vand.u32 %v1981, 4294901760
    %2940 = vmatpush1.msra.mxu0 %v2939
    %2941 = vmatprep.subr.mxu0 0.0
    %v2942 = vand.u32 %v1982, 4294901760
    %2943 = vmatpush1.msra.mxu0 %v2942
    %2944 = vmatprep.subr.mxu0 0.0
    %v2945 = vand.u32 %v1983, 4294901760
    %2946 = vmatpush1.msra.mxu0 %v2945
    %2947 = vmatprep.subr.mxu0 0.0
    %v2948 = vand.u32 %v1984, 4294901760
    %2949 = vmatpush1.msra.mxu0 %v2948
    %2950 = vmatprep.subr.mxu0 0.0
    %v2951 = vand.u32 %v1985, 4294901760
    %2952 = vmatpush1.msra.mxu0 %v2951
    %2953 = vmatprep.subr.mxu0 0.0
    %v2954 = vand.u32 %v1986, 4294901760
    %2955 = vmatpush1.msra.mxu0 %v2954
    %2956 = vmatprep.subr.mxu0 0.0
    %v2957 = vand.u32 %v1987, 4294901760
    %2958 = vmatpush1.msra.mxu0 %v2957
    %2959 = vmatprep.subr.mxu0 0.0
    %v2960 = vand.u32 %v1988, 4294901760
    %2961 = vmatpush1.msra.mxu0 %v2960
    %2962 = vmatprep.subr.mxu0 0.0
    %v2963 = vand.u32 %v1989, 4294901760
    %2964 = vmatpush1.msra.mxu0 %v2963
    %2965 = vmatprep.subr.mxu0 0.0
    %v2966 = vand.u32 %v1990, 4294901760
    %2967 = vmatpush1.msra.mxu0 %v2966
    %2968 = vmatprep.subr.mxu0 0.0
    %v2969 = vand.u32 %v1991, 4294901760
    %2970 = vmatpush1.msra.mxu0 %v2969
    %2971 = vmatprep.subr.mxu0 0.0
    %v2972 = vand.u32 %v1992, 4294901760
    %2973 = vmatpush1.msra.mxu0 %v2972
    %2974 = vmatprep.subr.mxu0 0.0
    %v2975 = vand.u32 %v1993, 4294901760
    %2976 = vmatpush1.msra.mxu0 %v2975
    %2977 = vmatprep.subr.mxu0 0.0
    %v2978 = vand.u32 %v1994, 4294901760
    %2979 = vmatpush1.msra.mxu0 %v2978
    %2980 = vmatprep.subr.mxu0 0.0
    %v2981 = vand.u32 %v1995, 4294901760
    %2982 = vmatpush1.msra.mxu0 %v2981
    %v2983 = vand.u32 %v2020, 4294901760
    %v2984 = vsub.f32 %v2020, %v2983
    %v2985 = vand.u32 %v2984, 4294901760
    %v2986 = vsub.f32 %v2984, %v2985
    %v2987 = vand.u32 %v2986, 4294901760
    %2988 = vmatprep.mubr.f32.mxu0 %v2987
    %v2989 = vand.u32 %v2018, 4294901760
    %v2990 = vsub.f32 %v2018, %v2989
    %v2991 = vand.u32 %v2990, 4294901760
    %v2992 = vsub.f32 %v2990, %v2991
    %v2993 = vand.u32 %v2992, 4294901760
    %2994 = vmatmul.mubr.f32.gmra.mrb[0].mxu0 %v2993
    %v2995 = vpop.f32.mrb[0].mxu0
    %v2996 = vadd.f32 %v2884, %v2995
    %v2997 = vpop.f32.mrb[0].mxu0
    %2998 = vdwg.mxu0
    %2999 = vmatprep.subr.mxu0 0.0
    %v3000 = vand.u32 %v1964, 4294901760
    %v3001 = vsub.f32 %v1964, %v3000
    %v3002 = vand.u32 %v3001, 4294901760
    %v3003 = vsub.f32 %v3001, %v3002
    %v3004 = vand.u32 %v3003, 4294901760
    %3005 = vmatpush1.msra.mxu0 %v3004
    %3006 = vmatprep.subr.mxu0 0.0
    %v3007 = vand.u32 %v1965, 4294901760
    %v3008 = vsub.f32 %v1965, %v3007
    %v3009 = vand.u32 %v3008, 4294901760
    %v3010 = vsub.f32 %v3008, %v3009
    %v3011 = vand.u32 %v3010, 4294901760
    %3012 = vmatpush1.msra.mxu0 %v3011
    %3013 = vmatprep.subr.mxu0 0.0
    %v3014 = vand.u32 %v1966, 4294901760
    %v3015 = vsub.f32 %v1966, %v3014
    %v3016 = vand.u32 %v3015, 4294901760
    %v3017 = vsub.f32 %v3015, %v3016
    %v3018 = vand.u32 %v3017, 4294901760
    %3019 = vmatpush1.msra.mxu0 %v3018
    %3020 = vmatprep.subr.mxu0 0.0
    %v3021 = vand.u32 %v1967, 4294901760
    %v3022 = vsub.f32 %v1967, %v3021
    %v3023 = vand.u32 %v3022, 4294901760
    %v3024 = vsub.f32 %v3022, %v3023
    %v3025 = vand.u32 %v3024, 4294901760
    %3026 = vmatpush1.msra.mxu0 %v3025
    %3027 = vmatprep.subr.mxu0 0.0
    %v3028 = vand.u32 %v1968, 4294901760
    %v3029 = vsub.f32 %v1968, %v3028
    %v3030 = vand.u32 %v3029, 4294901760
    %v3031 = vsub.f32 %v3029, %v3030
    %v3032 = vand.u32 %v3031, 4294901760
    %3033 = vmatpush1.msra.mxu0 %v3032
    %3034 = vmatprep.subr.mxu0 0.0
    %v3035 = vand.u32 %v1969, 4294901760
    %v3036 = vsub.f32 %v1969, %v3035
    %v3037 = vand.u32 %v3036, 4294901760
    %v3038 = vsub.f32 %v3036, %v3037
    %v3039 = vand.u32 %v3038, 4294901760
    %3040 = vmatpush1.msra.mxu0 %v3039
    %3041 = vmatprep.subr.mxu0 0.0
    %v3042 = vand.u32 %v1970, 4294901760
    %v3043 = vsub.f32 %v1970, %v3042
    %v3044 = vand.u32 %v3043, 4294901760
    %v3045 = vsub.f32 %v3043, %v3044
    %v3046 = vand.u32 %v3045, 4294901760
    %3047 = vmatpush1.msra.mxu0 %v3046
    %3048 = vmatprep.subr.mxu0 0.0
    %v3049 = vand.u32 %v1971, 4294901760
    %v3050 = vsub.f32 %v1971, %v3049
    %v3051 = vand.u32 %v3050, 4294901760
    %v3052 = vsub.f32 %v3050, %v3051
    %v3053 = vand.u32 %v3052, 4294901760
    %3054 = vmatpush1.msra.mxu0 %v3053
    %3055 = vmatprep.subr.mxu0 0.0
    %v3056 = vand.u32 %v1972, 4294901760
    %v3057 = vsub.f32 %v1972, %v3056
    %v3058 = vand.u32 %v3057, 4294901760
    %v3059 = vsub.f32 %v3057, %v3058
    %v3060 = vand.u32 %v3059, 4294901760
    %3061 = vmatpush1.msra.mxu0 %v3060
    %3062 = vmatprep.subr.mxu0 0.0
    %v3063 = vand.u32 %v1973, 4294901760
    %v3064 = vsub.f32 %v1973, %v3063
    %v3065 = vand.u32 %v3064, 4294901760
    %v3066 = vsub.f32 %v3064, %v3065
    %v3067 = vand.u32 %v3066, 4294901760
    %3068 = vmatpush1.msra.mxu0 %v3067
    %3069 = vmatprep.subr.mxu0 0.0
    %v3070 = vand.u32 %v1974, 4294901760
    %v3071 = vsub.f32 %v1974, %v3070
    %v3072 = vand.u32 %v3071, 4294901760
    %v3073 = vsub.f32 %v3071, %v3072
    %v3074 = vand.u32 %v3073, 4294901760
    %3075 = vmatpush1.msra.mxu0 %v3074
    %3076 = vmatprep.subr.mxu0 0.0
    %v3077 = vand.u32 %v1975, 4294901760
    %v3078 = vsub.f32 %v1975, %v3077
    %v3079 = vand.u32 %v3078, 4294901760
    %v3080 = vsub.f32 %v3078, %v3079
    %v3081 = vand.u32 %v3080, 4294901760
    %3082 = vmatpush1.msra.mxu0 %v3081
    %3083 = vmatprep.subr.mxu0 0.0
    %v3084 = vand.u32 %v1976, 4294901760
    %v3085 = vsub.f32 %v1976, %v3084
    %v3086 = vand.u32 %v3085, 4294901760
    %v3087 = vsub.f32 %v3085, %v3086
    %v3088 = vand.u32 %v3087, 4294901760
    %3089 = vmatpush1.msra.mxu0 %v3088
    %3090 = vmatprep.subr.mxu0 0.0
    %v3091 = vand.u32 %v1977, 4294901760
    %v3092 = vsub.f32 %v1977, %v3091
    %v3093 = vand.u32 %v3092, 4294901760
    %v3094 = vsub.f32 %v3092, %v3093
    %v3095 = vand.u32 %v3094, 4294901760
    %3096 = vmatpush1.msra.mxu0 %v3095
    %3097 = vmatprep.subr.mxu0 0.0
    %v3098 = vand.u32 %v1978, 4294901760
    %v3099 = vsub.f32 %v1978, %v3098
    %v3100 = vand.u32 %v3099, 4294901760
    %v3101 = vsub.f32 %v3099, %v3100
    %v3102 = vand.u32 %v3101, 4294901760
    %3103 = vmatpush1.msra.mxu0 %v3102
    %3104 = vmatprep.subr.mxu0 0.0
    %v3105 = vand.u32 %v1979, 4294901760
    %v3106 = vsub.f32 %v1979, %v3105
    %v3107 = vand.u32 %v3106, 4294901760
    %v3108 = vsub.f32 %v3106, %v3107
    %v3109 = vand.u32 %v3108, 4294901760
    %3110 = vmatpush1.msra.mxu0 %v3109
    %3111 = vmatprep.subr.mxu0 0.0
    %v3112 = vand.u32 %v1980, 4294901760
    %v3113 = vsub.f32 %v1980, %v3112
    %v3114 = vand.u32 %v3113, 4294901760
    %v3115 = vsub.f32 %v3113, %v3114
    %v3116 = vand.u32 %v3115, 4294901760
    %3117 = vmatpush1.msra.mxu0 %v3116
    %3118 = vmatprep.subr.mxu0 0.0
    %v3119 = vand.u32 %v1981, 4294901760
    %v3120 = vsub.f32 %v1981, %v3119
    %v3121 = vand.u32 %v3120, 4294901760
    %v3122 = vsub.f32 %v3120, %v3121
    %v3123 = vand.u32 %v3122, 4294901760
    %3124 = vmatpush1.msra.mxu0 %v3123
    %3125 = vmatprep.subr.mxu0 0.0
    %v3126 = vand.u32 %v1982, 4294901760
    %v3127 = vsub.f32 %v1982, %v3126
    %v3128 = vand.u32 %v3127, 4294901760
    %v3129 = vsub.f32 %v3127, %v3128
    %v3130 = vand.u32 %v3129, 4294901760
    %3131 = vmatpush1.msra.mxu0 %v3130
    %3132 = vmatprep.subr.mxu0 0.0
    %v3133 = vand.u32 %v1983, 4294901760
    %v3134 = vsub.f32 %v1983, %v3133
    %v3135 = vand.u32 %v3134, 4294901760
    %v3136 = vsub.f32 %v3134, %v3135
    %v3137 = vand.u32 %v3136, 4294901760
    %3138 = vmatpush1.msra.mxu0 %v3137
    %3139 = vmatprep.subr.mxu0 0.0
    %v3140 = vand.u32 %v1984, 4294901760
    %v3141 = vsub.f32 %v1984, %v3140
    %v3142 = vand.u32 %v3141, 4294901760
    %v3143 = vsub.f32 %v3141, %v3142
    %v3144 = vand.u32 %v3143, 4294901760
    %3145 = vmatpush1.msra.mxu0 %v3144
    %3146 = vmatprep.subr.mxu0 0.0
    %v3147 = vand.u32 %v1985, 4294901760
    %v3148 = vsub.f32 %v1985, %v3147
    %v3149 = vand.u32 %v3148, 4294901760
    %v3150 = vsub.f32 %v3148, %v3149
    %v3151 = vand.u32 %v3150, 4294901760
    %3152 = vmatpush1.msra.mxu0 %v3151
    %3153 = vmatprep.subr.mxu0 0.0
    %v3154 = vand.u32 %v1986, 4294901760
    %v3155 = vsub.f32 %v1986, %v3154
    %v3156 = vand.u32 %v3155, 4294901760
    %v3157 = vsub.f32 %v3155, %v3156
    %v3158 = vand.u32 %v3157, 4294901760
    %3159 = vmatpush1.msra.mxu0 %v3158
    %3160 = vmatprep.subr.mxu0 0.0
    %v3161 = vand.u32 %v1987, 4294901760
    %v3162 = vsub.f32 %v1987, %v3161
    %v3163 = vand.u32 %v3162, 4294901760
    %v3164 = vsub.f32 %v3162, %v3163
    %v3165 = vand.u32 %v3164, 4294901760
    %3166 = vmatpush1.msra.mxu0 %v3165
    %3167 = vmatprep.subr.mxu0 0.0
    %v3168 = vand.u32 %v1988, 4294901760
    %v3169 = vsub.f32 %v1988, %v3168
    %v3170 = vand.u32 %v3169, 4294901760
    %v3171 = vsub.f32 %v3169, %v3170
    %v3172 = vand.u32 %v3171, 4294901760
    %3173 = vmatpush1.msra.mxu0 %v3172
    %3174 = vmatprep.subr.mxu0 0.0
    %v3175 = vand.u32 %v1989, 4294901760
    %v3176 = vsub.f32 %v1989, %v3175
    %v3177 = vand.u32 %v3176, 4294901760
    %v3178 = vsub.f32 %v3176, %v3177
    %v3179 = vand.u32 %v3178, 4294901760
    %3180 = vmatpush1.msra.mxu0 %v3179
    %3181 = vmatprep.subr.mxu0 0.0
    %v3182 = vand.u32 %v1990, 4294901760
    %v3183 = vsub.f32 %v1990, %v3182
    %v3184 = vand.u32 %v3183, 4294901760
    %v3185 = vsub.f32 %v3183, %v3184
    %v3186 = vand.u32 %v3185, 4294901760
    %3187 = vmatpush1.msra.mxu0 %v3186
    %3188 = vmatprep.subr.mxu0 0.0
    %v3189 = vand.u32 %v1991, 4294901760
    %v3190 = vsub.f32 %v1991, %v3189
    %v3191 = vand.u32 %v3190, 4294901760
    %v3192 = vsub.f32 %v3190, %v3191
    %v3193 = vand.u32 %v3192, 4294901760
    %3194 = vmatpush1.msra.mxu0 %v3193
    %3195 = vmatprep.subr.mxu0 0.0
    %v3196 = vand.u32 %v1992, 4294901760
    %v3197 = vsub.f32 %v1992, %v3196
    %v3198 = vand.u32 %v3197, 4294901760
    %v3199 = vsub.f32 %v3197, %v3198
    %v3200 = vand.u32 %v3199, 4294901760
    %3201 = vmatpush1.msra.mxu0 %v3200
    %3202 = vmatprep.subr.mxu0 0.0
    %v3203 = vand.u32 %v1993, 4294901760
    %v3204 = vsub.f32 %v1993, %v3203
    %v3205 = vand.u32 %v3204, 4294901760
    %v3206 = vsub.f32 %v3204, %v3205
    %v3207 = vand.u32 %v3206, 4294901760
    %3208 = vmatpush1.msra.mxu0 %v3207
    %3209 = vmatprep.subr.mxu0 0.0
    %v3210 = vand.u32 %v1994, 4294901760
    %v3211 = vsub.f32 %v1994, %v3210
    %v3212 = vand.u32 %v3211, 4294901760
    %v3213 = vsub.f32 %v3211, %v3212
    %v3214 = vand.u32 %v3213, 4294901760
    %3215 = vmatpush1.msra.mxu0 %v3214
    %3216 = vmatprep.subr.mxu0 0.0
    %v3217 = vand.u32 %v1995, 4294901760
    %v3218 = vsub.f32 %v1995, %v3217
    %v3219 = vand.u32 %v3218, 4294901760
    %v3220 = vsub.f32 %v3218, %v3219
    %v3221 = vand.u32 %v3220, 4294901760
    %3222 = vmatpush1.msra.mxu0 %v3221
    %v3223 = vand.u32 %v2020, 4294901760
    %3224 = vmatprep.mubr.f32.mxu0 %v3223
    %v3225 = vand.u32 %v2018, 4294901760
    %3226 = vmatmul.mubr.f32.gmra.mrb[0].mxu0 %v3225
    %v3227 = vpop.f32.mrb[0].mxu0
    %v3228 = vadd.f32 %v2996, %v3227
    %v3229 = vpop.f32.mrb[0].mxu0
    %3230 = vdwg.mxu0
    %3231 = vmatprep.subr.mxu0 0.0
    %v3232 = vand.u32 %v1964, 4294901760
    %v3233 = vsub.f32 %v1964, %v3232
    %3234 = vmatpush1.msra.mxu0 %v3233
    %3235 = vmatprep.subr.mxu0 0.0
    %v3236 = vand.u32 %v1965, 4294901760
    %v3237 = vsub.f32 %v1965, %v3236
    %3238 = vmatpush1.msra.mxu0 %v3237
    %3239 = vmatprep.subr.mxu0 0.0
    %v3240 = vand.u32 %v1966, 4294901760
    %v3241 = vsub.f32 %v1966, %v3240
    %3242 = vmatpush1.msra.mxu0 %v3241
    %3243 = vmatprep.subr.mxu0 0.0
    %v3244 = vand.u32 %v1967, 4294901760
    %v3245 = vsub.f32 %v1967, %v3244
    %3246 = vmatpush1.msra.mxu0 %v3245
    %3247 = vmatprep.subr.mxu0 0.0
    %v3248 = vand.u32 %v1968, 4294901760
    %v3249 = vsub.f32 %v1968, %v3248
    %3250 = vmatpush1.msra.mxu0 %v3249
    %3251 = vmatprep.subr.mxu0 0.0
    %v3252 = vand.u32 %v1969, 4294901760
    %v3253 = vsub.f32 %v1969, %v3252
    %3254 = vmatpush1.msra.mxu0 %v3253
    %3255 = vmatprep.subr.mxu0 0.0
    %v3256 = vand.u32 %v1970, 4294901760
    %v3257 = vsub.f32 %v1970, %v3256
    %3258 = vmatpush1.msra.mxu0 %v3257
    %3259 = vmatprep.subr.mxu0 0.0
    %v3260 = vand.u32 %v1971, 4294901760
    %v3261 = vsub.f32 %v1971, %v3260
    %3262 = vmatpush1.msra.mxu0 %v3261
    %3263 = vmatprep.subr.mxu0 0.0
    %v3264 = vand.u32 %v1972, 4294901760
    %v3265 = vsub.f32 %v1972, %v3264
    %3266 = vmatpush1.msra.mxu0 %v3265
    %3267 = vmatprep.subr.mxu0 0.0
    %v3268 = vand.u32 %v1973, 4294901760
    %v3269 = vsub.f32 %v1973, %v3268
    %3270 = vmatpush1.msra.mxu0 %v3269
    %3271 = vmatprep.subr.mxu0 0.0
    %v3272 = vand.u32 %v1974, 4294901760
    %v3273 = vsub.f32 %v1974, %v3272
    %3274 = vmatpush1.msra.mxu0 %v3273
    %3275 = vmatprep.subr.mxu0 0.0
    %v3276 = vand.u32 %v1975, 4294901760
    %v3277 = vsub.f32 %v1975, %v3276
    %3278 = vmatpush1.msra.mxu0 %v3277
    %3279 = vmatprep.subr.mxu0 0.0
    %v3280 = vand.u32 %v1976, 4294901760
    %v3281 = vsub.f32 %v1976, %v3280
    %3282 = vmatpush1.msra.mxu0 %v3281
    %3283 = vmatprep.subr.mxu0 0.0
    %v3284 = vand.u32 %v1977, 4294901760
    %v3285 = vsub.f32 %v1977, %v3284
    %3286 = vmatpush1.msra.mxu0 %v3285
    %3287 = vmatprep.subr.mxu0 0.0
    %v3288 = vand.u32 %v1978, 4294901760
    %v3289 = vsub.f32 %v1978, %v3288
    %3290 = vmatpush1.msra.mxu0 %v3289
    %3291 = vmatprep.subr.mxu0 0.0
    %v3292 = vand.u32 %v1979, 4294901760
    %v3293 = vsub.f32 %v1979, %v3292
    %3294 = vmatpush1.msra.mxu0 %v3293
    %3295 = vmatprep.subr.mxu0 0.0
    %v3296 = vand.u32 %v1980, 4294901760
    %v3297 = vsub.f32 %v1980, %v3296
    %3298 = vmatpush1.msra.mxu0 %v3297
    %3299 = vmatprep.subr.mxu0 0.0
    %v3300 = vand.u32 %v1981, 4294901760
    %v3301 = vsub.f32 %v1981, %v3300
    %3302 = vmatpush1.msra.mxu0 %v3301
    %3303 = vmatprep.subr.mxu0 0.0
    %v3304 = vand.u32 %v1982, 4294901760
    %v3305 = vsub.f32 %v1982, %v3304
    %3306 = vmatpush1.msra.mxu0 %v3305
    %3307 = vmatprep.subr.mxu0 0.0
    %v3308 = vand.u32 %v1983, 4294901760
    %v3309 = vsub.f32 %v1983, %v3308
    %3310 = vmatpush1.msra.mxu0 %v3309
    %3311 = vmatprep.subr.mxu0 0.0
    %v3312 = vand.u32 %v1984, 4294901760
    %v3313 = vsub.f32 %v1984, %v3312
    %3314 = vmatpush1.msra.mxu0 %v3313
    %3315 = vmatprep.subr.mxu0 0.0
    %v3316 = vand.u32 %v1985, 4294901760
    %v3317 = vsub.f32 %v1985, %v3316
    %3318 = vmatpush1.msra.mxu0 %v3317
    %3319 = vmatprep.subr.mxu0 0.0
    %v3320 = vand.u32 %v1986, 4294901760
    %v3321 = vsub.f32 %v1986, %v3320
    %3322 = vmatpush1.msra.mxu0 %v3321
    %3323 = vmatprep.subr.mxu0 0.0
    %v3324 = vand.u32 %v1987, 4294901760
    %v3325 = vsub.f32 %v1987, %v3324
    %3326 = vmatpush1.msra.mxu0 %v3325
    %3327 = vmatprep.subr.mxu0 0.0
    %v3328 = vand.u32 %v1988, 4294901760
    %v3329 = vsub.f32 %v1988, %v3328
    %3330 = vmatpush1.msra.mxu0 %v3329
    %3331 = vmatprep.subr.mxu0 0.0
    %v3332 = vand.u32 %v1989, 4294901760
    %v3333 = vsub.f32 %v1989, %v3332
    %3334 = vmatpush1.msra.mxu0 %v3333
    %3335 = vmatprep.subr.mxu0 0.0
    %v3336 = vand.u32 %v1990, 4294901760
    %v3337 = vsub.f32 %v1990, %v3336
    %3338 = vmatpush1.msra.mxu0 %v3337
    %3339 = vmatprep.subr.mxu0 0.0
    %v3340 = vand.u32 %v1991, 4294901760
    %v3341 = vsub.f32 %v1991, %v3340
    %3342 = vmatpush1.msra.mxu0 %v3341
    %3343 = vmatprep.subr.mxu0 0.0
    %v3344 = vand.u32 %v1992, 4294901760
    %v3345 = vsub.f32 %v1992, %v3344
    %3346 = vmatpush1.msra.mxu0 %v3345
    %3347 = vmatprep.subr.mxu0 0.0
    %v3348 = vand.u32 %v1993, 4294901760
    %v3349 = vsub.f32 %v1993, %v3348
    %3350 = vmatpush1.msra.mxu0 %v3349
    %3351 = vmatprep.subr.mxu0 0.0
    %v3352 = vand.u32 %v1994, 4294901760
    %v3353 = vsub.f32 %v1994, %v3352
    %3354 = vmatpush1.msra.mxu0 %v3353
    %3355 = vmatprep.subr.mxu0 0.0
    %v3356 = vand.u32 %v1995, 4294901760
    %v3357 = vsub.f32 %v1995, %v3356
    %3358 = vmatpush1.msra.mxu0 %v3357
    %v3359 = vand.u32 %v2020, 4294901760
    %v3360 = vsub.f32 %v2020, %v3359
    %3361 = vmatprep.mubr.f32.mxu0 %v3360
    %v3362 = vand.u32 %v2018, 4294901760
    %v3363 = vsub.f32 %v2018, %v3362
    %3364 = vmatmul.mubr.f32.gmra.mrb[0].mxu0 %v3363
    %v3365 = vpop.f32.mrb[0].mxu0
    %v3366 = vadd.f32 %v3228, %v3365
    %v3367 = vpop.f32.mrb[0].mxu0
    %3368 = vdwg.mxu0
    %3369 = vmatprep.subr.mxu0 0.0
    %v3370 = vand.u32 %v1964, 4294901760
    %3371 = vmatpush1.msra.mxu0 %v3370
    %3372 = vmatprep.subr.mxu0 0.0
    %v3373 = vand.u32 %v1965, 4294901760
    %3374 = vmatpush1.msra.mxu0 %v3373
    %3375 = vmatprep.subr.mxu0 0.0
    %v3376 = vand.u32 %v1966, 4294901760
    %3377 = vmatpush1.msra.mxu0 %v3376
    %3378 = vmatprep.subr.mxu0 0.0
    %v3379 = vand.u32 %v1967, 4294901760
    %3380 = vmatpush1.msra.mxu0 %v3379
    %3381 = vmatprep.subr.mxu0 0.0
    %v3382 = vand.u32 %v1968, 4294901760
    %3383 = vmatpush1.msra.mxu0 %v3382
    %3384 = vmatprep.subr.mxu0 0.0
    %v3385 = vand.u32 %v1969, 4294901760
    %3386 = vmatpush1.msra.mxu0 %v3385
    %3387 = vmatprep.subr.mxu0 0.0
    %v3388 = vand.u32 %v1970, 4294901760
    %3389 = vmatpush1.msra.mxu0 %v3388
    %3390 = vmatprep.subr.mxu0 0.0
    %v3391 = vand.u32 %v1971, 4294901760
    %3392 = vmatpush1.msra.mxu0 %v3391
    %3393 = vmatprep.subr.mxu0 0.0
    %v3394 = vand.u32 %v1972, 4294901760
    %3395 = vmatpush1.msra.mxu0 %v3394
    %3396 = vmatprep.subr.mxu0 0.0
    %v3397 = vand.u32 %v1973, 4294901760
    %3398 = vmatpush1.msra.mxu0 %v3397
    %3399 = vmatprep.subr.mxu0 0.0
    %v3400 = vand.u32 %v1974, 4294901760
    %3401 = vmatpush1.msra.mxu0 %v3400
    %3402 = vmatprep.subr.mxu0 0.0
    %v3403 = vand.u32 %v1975, 4294901760
    %3404 = vmatpush1.msra.mxu0 %v3403
    %3405 = vmatprep.subr.mxu0 0.0
    %v3406 = vand.u32 %v1976, 4294901760
    %3407 = vmatpush1.msra.mxu0 %v3406
    %3408 = vmatprep.subr.mxu0 0.0
    %v3409 = vand.u32 %v1977, 4294901760
    %3410 = vmatpush1.msra.mxu0 %v3409
    %3411 = vmatprep.subr.mxu0 0.0
    %v3412 = vand.u32 %v1978, 4294901760
    %3413 = vmatpush1.msra.mxu0 %v3412
    %3414 = vmatprep.subr.mxu0 0.0
    %v3415 = vand.u32 %v1979, 4294901760
    %3416 = vmatpush1.msra.mxu0 %v3415
    %3417 = vmatprep.subr.mxu0 0.0
    %v3418 = vand.u32 %v1980, 4294901760
    %3419 = vmatpush1.msra.mxu0 %v3418
    %3420 = vmatprep.subr.mxu0 0.0
    %v3421 = vand.u32 %v1981, 4294901760
    %3422 = vmatpush1.msra.mxu0 %v3421
    %3423 = vmatprep.subr.mxu0 0.0
    %v3424 = vand.u32 %v1982, 4294901760
    %3425 = vmatpush1.msra.mxu0 %v3424
    %3426 = vmatprep.subr.mxu0 0.0
    %v3427 = vand.u32 %v1983, 4294901760
    %3428 = vmatpush1.msra.mxu0 %v3427
    %3429 = vmatprep.subr.mxu0 0.0
    %v3430 = vand.u32 %v1984, 4294901760
    %3431 = vmatpush1.msra.mxu0 %v3430
    %3432 = vmatprep.subr.mxu0 0.0
    %v3433 = vand.u32 %v1985, 4294901760
    %3434 = vmatpush1.msra.mxu0 %v3433
    %3435 = vmatprep.subr.mxu0 0.0
    %v3436 = vand.u32 %v1986, 4294901760
    %3437 = vmatpush1.msra.mxu0 %v3436
    %3438 = vmatprep.subr.mxu0 0.0
    %v3439 = vand.u32 %v1987, 4294901760
    %3440 = vmatpush1.msra.mxu0 %v3439
    %3441 = vmatprep.subr.mxu0 0.0
    %v3442 = vand.u32 %v1988, 4294901760
    %3443 = vmatpush1.msra.mxu0 %v3442
    %3444 = vmatprep.subr.mxu0 0.0
    %v3445 = vand.u32 %v1989, 4294901760
    %3446 = vmatpush1.msra.mxu0 %v3445
    %3447 = vmatprep.subr.mxu0 0.0
    %v3448 = vand.u32 %v1990, 4294901760
    %3449 = vmatpush1.msra.mxu0 %v3448
    %3450 = vmatprep.subr.mxu0 0.0
    %v3451 = vand.u32 %v1991, 4294901760
    %3452 = vmatpush1.msra.mxu0 %v3451
    %3453 = vmatprep.subr.mxu0 0.0
    %v3454 = vand.u32 %v1992, 4294901760
    %3455 = vmatpush1.msra.mxu0 %v3454
    %3456 = vmatprep.subr.mxu0 0.0
    %v3457 = vand.u32 %v1993, 4294901760
    %3458 = vmatpush1.msra.mxu0 %v3457
    %3459 = vmatprep.subr.mxu0 0.0
    %v3460 = vand.u32 %v1994, 4294901760
    %3461 = vmatpush1.msra.mxu0 %v3460
    %3462 = vmatprep.subr.mxu0 0.0
    %v3463 = vand.u32 %v1995, 4294901760
    %3464 = vmatpush1.msra.mxu0 %v3463
    %v3465 = vand.u32 %v2020, 4294901760
    %v3466 = vsub.f32 %v2020, %v3465
    %v3467 = vand.u32 %v3466, 4294901760
    %3468 = vmatprep.mubr.f32.mxu0 %v3467
    %v3469 = vand.u32 %v2018, 4294901760
    %v3470 = vsub.f32 %v2018, %v3469
    %v3471 = vand.u32 %v3470, 4294901760
    %3472 = vmatmul.mubr.f32.gmra.mrb[0].mxu0 %v3471
    %v3473 = vpop.f32.mrb[0].mxu0
    %v3474 = vadd.f32 %v3366, %v3473
    %v3475 = vpop.f32.mrb[0].mxu0
    %3476 = vdwg.mxu0
    %3477 = vmatprep.subr.mxu0 0.0
    %v3478 = vand.u32 %v1964, 4294901760
    %v3479 = vsub.f32 %v1964, %v3478
    %v3480 = vand.u32 %v3479, 4294901760
    %3481 = vmatpush1.msra.mxu0 %v3480
    %3482 = vmatprep.subr.mxu0 0.0
    %v3483 = vand.u32 %v1965, 4294901760
    %v3484 = vsub.f32 %v1965, %v3483
    %v3485 = vand.u32 %v3484, 4294901760
    %3486 = vmatpush1.msra.mxu0 %v3485
    %3487 = vmatprep.subr.mxu0 0.0
    %v3488 = vand.u32 %v1966, 4294901760
    %v3489 = vsub.f32 %v1966, %v3488
    %v3490 = vand.u32 %v3489, 4294901760
    %3491 = vmatpush1.msra.mxu0 %v3490
    %3492 = vmatprep.subr.mxu0 0.0
    %v3493 = vand.u32 %v1967, 4294901760
    %v3494 = vsub.f32 %v1967, %v3493
    %v3495 = vand.u32 %v3494, 4294901760
    %3496 = vmatpush1.msra.mxu0 %v3495
    %3497 = vmatprep.subr.mxu0 0.0
    %v3498 = vand.u32 %v1968, 4294901760
    %v3499 = vsub.f32 %v1968, %v3498
    %v3500 = vand.u32 %v3499, 4294901760
    %3501 = vmatpush1.msra.mxu0 %v3500
    %3502 = vmatprep.subr.mxu0 0.0
    %v3503 = vand.u32 %v1969, 4294901760
    %v3504 = vsub.f32 %v1969, %v3503
    %v3505 = vand.u32 %v3504, 4294901760
    %3506 = vmatpush1.msra.mxu0 %v3505
    %3507 = vmatprep.subr.mxu0 0.0
    %v3508 = vand.u32 %v1970, 4294901760
    %v3509 = vsub.f32 %v1970, %v3508
    %v3510 = vand.u32 %v3509, 4294901760
    %3511 = vmatpush1.msra.mxu0 %v3510
    %3512 = vmatprep.subr.mxu0 0.0
    %v3513 = vand.u32 %v1971, 4294901760
    %v3514 = vsub.f32 %v1971, %v3513
    %v3515 = vand.u32 %v3514, 4294901760
    %3516 = vmatpush1.msra.mxu0 %v3515
    %3517 = vmatprep.subr.mxu0 0.0
    %v3518 = vand.u32 %v1972, 4294901760
    %v3519 = vsub.f32 %v1972, %v3518
    %v3520 = vand.u32 %v3519, 4294901760
    %3521 = vmatpush1.msra.mxu0 %v3520
    %3522 = vmatprep.subr.mxu0 0.0
    %v3523 = vand.u32 %v1973, 4294901760
    %v3524 = vsub.f32 %v1973, %v3523
    %v3525 = vand.u32 %v3524, 4294901760
    %3526 = vmatpush1.msra.mxu0 %v3525
    %3527 = vmatprep.subr.mxu0 0.0
    %v3528 = vand.u32 %v1974, 4294901760
    %v3529 = vsub.f32 %v1974, %v3528
    %v3530 = vand.u32 %v3529, 4294901760
    %3531 = vmatpush1.msra.mxu0 %v3530
    %3532 = vmatprep.subr.mxu0 0.0
    %v3533 = vand.u32 %v1975, 4294901760
    %v3534 = vsub.f32 %v1975, %v3533
    %v3535 = vand.u32 %v3534, 4294901760
    %3536 = vmatpush1.msra.mxu0 %v3535
    %3537 = vmatprep.subr.mxu0 0.0
    %v3538 = vand.u32 %v1976, 4294901760
    %v3539 = vsub.f32 %v1976, %v3538
    %v3540 = vand.u32 %v3539, 4294901760
    %3541 = vmatpush1.msra.mxu0 %v3540
    %3542 = vmatprep.subr.mxu0 0.0
    %v3543 = vand.u32 %v1977, 4294901760
    %v3544 = vsub.f32 %v1977, %v3543
    %v3545 = vand.u32 %v3544, 4294901760
    %3546 = vmatpush1.msra.mxu0 %v3545
    %3547 = vmatprep.subr.mxu0 0.0
    %v3548 = vand.u32 %v1978, 4294901760
    %v3549 = vsub.f32 %v1978, %v3548
    %v3550 = vand.u32 %v3549, 4294901760
    %3551 = vmatpush1.msra.mxu0 %v3550
    %3552 = vmatprep.subr.mxu0 0.0
    %v3553 = vand.u32 %v1979, 4294901760
    %v3554 = vsub.f32 %v1979, %v3553
    %v3555 = vand.u32 %v3554, 4294901760
    %3556 = vmatpush1.msra.mxu0 %v3555
    %3557 = vmatprep.subr.mxu0 0.0
    %v3558 = vand.u32 %v1980, 4294901760
    %v3559 = vsub.f32 %v1980, %v3558
    %v3560 = vand.u32 %v3559, 4294901760
    %3561 = vmatpush1.msra.mxu0 %v3560
    %3562 = vmatprep.subr.mxu0 0.0
    %v3563 = vand.u32 %v1981, 4294901760
    %v3564 = vsub.f32 %v1981, %v3563
    %v3565 = vand.u32 %v3564, 4294901760
    %3566 = vmatpush1.msra.mxu0 %v3565
    %3567 = vmatprep.subr.mxu0 0.0
    %v3568 = vand.u32 %v1982, 4294901760
    %v3569 = vsub.f32 %v1982, %v3568
    %v3570 = vand.u32 %v3569, 4294901760
    %3571 = vmatpush1.msra.mxu0 %v3570
    %3572 = vmatprep.subr.mxu0 0.0
    %v3573 = vand.u32 %v1983, 4294901760
    %v3574 = vsub.f32 %v1983, %v3573
    %v3575 = vand.u32 %v3574, 4294901760
    %3576 = vmatpush1.msra.mxu0 %v3575
    %3577 = vmatprep.subr.mxu0 0.0
    %v3578 = vand.u32 %v1984, 4294901760
    %v3579 = vsub.f32 %v1984, %v3578
    %v3580 = vand.u32 %v3579, 4294901760
    %3581 = vmatpush1.msra.mxu0 %v3580
    %3582 = vmatprep.subr.mxu0 0.0
    %v3583 = vand.u32 %v1985, 4294901760
    %v3584 = vsub.f32 %v1985, %v3583
    %v3585 = vand.u32 %v3584, 4294901760
    %3586 = vmatpush1.msra.mxu0 %v3585
    %3587 = vmatprep.subr.mxu0 0.0
    %v3588 = vand.u32 %v1986, 4294901760
    %v3589 = vsub.f32 %v1986, %v3588
    %v3590 = vand.u32 %v3589, 4294901760
    %3591 = vmatpush1.msra.mxu0 %v3590
    %3592 = vmatprep.subr.mxu0 0.0
    %v3593 = vand.u32 %v1987, 4294901760
    %v3594 = vsub.f32 %v1987, %v3593
    %v3595 = vand.u32 %v3594, 4294901760
    %3596 = vmatpush1.msra.mxu0 %v3595
    %3597 = vmatprep.subr.mxu0 0.0
    %v3598 = vand.u32 %v1988, 4294901760
    %v3599 = vsub.f32 %v1988, %v3598
    %v3600 = vand.u32 %v3599, 4294901760
    %3601 = vmatpush1.msra.mxu0 %v3600
    %3602 = vmatprep.subr.mxu0 0.0
    %v3603 = vand.u32 %v1989, 4294901760
    %v3604 = vsub.f32 %v1989, %v3603
    %v3605 = vand.u32 %v3604, 4294901760
    %3606 = vmatpush1.msra.mxu0 %v3605
    %3607 = vmatprep.subr.mxu0 0.0
    %v3608 = vand.u32 %v1990, 4294901760
    %v3609 = vsub.f32 %v1990, %v3608
    %v3610 = vand.u32 %v3609, 4294901760
    %3611 = vmatpush1.msra.mxu0 %v3610
    %3612 = vmatprep.subr.mxu0 0.0
    %v3613 = vand.u32 %v1991, 4294901760
    %v3614 = vsub.f32 %v1991, %v3613
    %v3615 = vand.u32 %v3614, 4294901760
    %3616 = vmatpush1.msra.mxu0 %v3615
    %3617 = vmatprep.subr.mxu0 0.0
    %v3618 = vand.u32 %v1992, 4294901760
    %v3619 = vsub.f32 %v1992, %v3618
    %v3620 = vand.u32 %v3619, 4294901760
    %3621 = vmatpush1.msra.mxu0 %v3620
    %3622 = vmatprep.subr.mxu0 0.0
    %v3623 = vand.u32 %v1993, 4294901760
    %v3624 = vsub.f32 %v1993, %v3623
    %v3625 = vand.u32 %v3624, 4294901760
    %3626 = vmatpush1.msra.mxu0 %v3625
    %3627 = vmatprep.subr.mxu0 0.0
    %v3628 = vand.u32 %v1994, 4294901760
    %v3629 = vsub.f32 %v1994, %v3628
    %v3630 = vand.u32 %v3629, 4294901760
    %3631 = vmatpush1.msra.mxu0 %v3630
    %3632 = vmatprep.subr.mxu0 0.0
    %v3633 = vand.u32 %v1995, 4294901760
    %v3634 = vsub.f32 %v1995, %v3633
    %v3635 = vand.u32 %v3634, 4294901760
    %3636 = vmatpush1.msra.mxu0 %v3635
    %v3637 = vand.u32 %v2020, 4294901760
    %3638 = vmatprep.mubr.f32.mxu0 %v3637
    %v3639 = vand.u32 %v2018, 4294901760
    %3640 = vmatmul.mubr.f32.gmra.mrb[0].mxu0 %v3639
    %v3641 = vpop.f32.mrb[0].mxu0
    %v3642 = vadd.f32 %v3474, %v3641
    %v3643 = vpop.f32.mrb[0].mxu0
    %3644 = vdwg.mxu0
    %3645 = vmatprep.subr.mxu0 0.0
    %v3646 = vand.u32 %v1964, 4294901760
    %3647 = vmatpush1.msra.mxu0 %v3646
    %3648 = vmatprep.subr.mxu0 0.0
    %v3649 = vand.u32 %v1965, 4294901760
    %3650 = vmatpush1.msra.mxu0 %v3649
    %3651 = vmatprep.subr.mxu0 0.0
    %v3652 = vand.u32 %v1966, 4294901760
    %3653 = vmatpush1.msra.mxu0 %v3652
    %3654 = vmatprep.subr.mxu0 0.0
    %v3655 = vand.u32 %v1967, 4294901760
    %3656 = vmatpush1.msra.mxu0 %v3655
    %3657 = vmatprep.subr.mxu0 0.0
    %v3658 = vand.u32 %v1968, 4294901760
    %3659 = vmatpush1.msra.mxu0 %v3658
    %3660 = vmatprep.subr.mxu0 0.0
    %v3661 = vand.u32 %v1969, 4294901760
    %3662 = vmatpush1.msra.mxu0 %v3661
    %3663 = vmatprep.subr.mxu0 0.0
    %v3664 = vand.u32 %v1970, 4294901760
    %3665 = vmatpush1.msra.mxu0 %v3664
    %3666 = vmatprep.subr.mxu0 0.0
    %v3667 = vand.u32 %v1971, 4294901760
    %3668 = vmatpush1.msra.mxu0 %v3667
    %3669 = vmatprep.subr.mxu0 0.0
    %v3670 = vand.u32 %v1972, 4294901760
    %3671 = vmatpush1.msra.mxu0 %v3670
    %3672 = vmatprep.subr.mxu0 0.0
    %v3673 = vand.u32 %v1973, 4294901760
    %3674 = vmatpush1.msra.mxu0 %v3673
    %3675 = vmatprep.subr.mxu0 0.0
    %v3676 = vand.u32 %v1974, 4294901760
    %3677 = vmatpush1.msra.mxu0 %v3676
    %3678 = vmatprep.subr.mxu0 0.0
    %v3679 = vand.u32 %v1975, 4294901760
    %3680 = vmatpush1.msra.mxu0 %v3679
    %3681 = vmatprep.subr.mxu0 0.0
    %v3682 = vand.u32 %v1976, 4294901760
    %3683 = vmatpush1.msra.mxu0 %v3682
    %3684 = vmatprep.subr.mxu0 0.0
    %v3685 = vand.u32 %v1977, 4294901760
    %3686 = vmatpush1.msra.mxu0 %v3685
    %3687 = vmatprep.subr.mxu0 0.0
    %v3688 = vand.u32 %v1978, 4294901760
    %3689 = vmatpush1.msra.mxu0 %v3688
    %3690 = vmatprep.subr.mxu0 0.0
    %v3691 = vand.u32 %v1979, 4294901760
    %3692 = vmatpush1.msra.mxu0 %v3691
    %3693 = vmatprep.subr.mxu0 0.0
    %v3694 = vand.u32 %v1980, 4294901760
    %3695 = vmatpush1.msra.mxu0 %v3694
    %3696 = vmatprep.subr.mxu0 0.0
    %v3697 = vand.u32 %v1981, 4294901760
    %3698 = vmatpush1.msra.mxu0 %v3697
    %3699 = vmatprep.subr.mxu0 0.0
    %v3700 = vand.u32 %v1982, 4294901760
    %3701 = vmatpush1.msra.mxu0 %v3700
    %3702 = vmatprep.subr.mxu0 0.0
    %v3703 = vand.u32 %v1983, 4294901760
    %3704 = vmatpush1.msra.mxu0 %v3703
    %3705 = vmatprep.subr.mxu0 0.0
    %v3706 = vand.u32 %v1984, 4294901760
    %3707 = vmatpush1.msra.mxu0 %v3706
    %3708 = vmatprep.subr.mxu0 0.0
    %v3709 = vand.u32 %v1985, 4294901760
    %3710 = vmatpush1.msra.mxu0 %v3709
    %3711 = vmatprep.subr.mxu0 0.0
    %v3712 = vand.u32 %v1986, 4294901760
    %3713 = vmatpush1.msra.mxu0 %v3712
    %3714 = vmatprep.subr.mxu0 0.0
    %v3715 = vand.u32 %v1987, 4294901760
    %3716 = vmatpush1.msra.mxu0 %v3715
    %3717 = vmatprep.subr.mxu0 0.0
    %v3718 = vand.u32 %v1988, 4294901760
    %3719 = vmatpush1.msra.mxu0 %v3718
    %3720 = vmatprep.subr.mxu0 0.0
    %v3721 = vand.u32 %v1989, 4294901760
    %3722 = vmatpush1.msra.mxu0 %v3721
    %3723 = vmatprep.subr.mxu0 0.0
    %v3724 = vand.u32 %v1990, 4294901760
    %3725 = vmatpush1.msra.mxu0 %v3724
    %3726 = vmatprep.subr.mxu0 0.0
    %v3727 = vand.u32 %v1991, 4294901760
    %3728 = vmatpush1.msra.mxu0 %v3727
    %3729 = vmatprep.subr.mxu0 0.0
    %v3730 = vand.u32 %v1992, 4294901760
    %3731 = vmatpush1.msra.mxu0 %v3730
    %3732 = vmatprep.subr.mxu0 0.0
    %v3733 = vand.u32 %v1993, 4294901760
    %3734 = vmatpush1.msra.mxu0 %v3733
    %3735 = vmatprep.subr.mxu0 0.0
    %v3736 = vand.u32 %v1994, 4294901760
    %3737 = vmatpush1.msra.mxu0 %v3736
    %3738 = vmatprep.subr.mxu0 0.0
    %v3739 = vand.u32 %v1995, 4294901760
    %3740 = vmatpush1.msra.mxu0 %v3739
    %v3741 = vand.u32 %v2020, 4294901760
    %3742 = vmatprep.mubr.f32.mxu0 %v3741
    %v3743 = vand.u32 %v2018, 4294901760
    %3744 = vmatmul.mubr.f32.gmra.mrb[0].mxu0 %v3743
    %v3745 = vpop.f32.mrb[0].mxu0
    %v3746 = vadd.f32 %v3642, %v3745
    %v3747 = vpop.f32.mrb[0].mxu0
    %3748 = vdwg.mxu0
    %v3749 = vmax.f32 %v3746, 0.0
    %v3750 = vld [vmem:[%s7] sm:$0xff]
    %v3751 = vld [vmem:[%s7 + $0x8] sm:$0xff]
    %v3752 = vld [vmem:[%s7 + $0x10] sm:$0xff]
    %v3753 = vld [vmem:[%s7 + $0x18] sm:$0xff]
    %v3754 = vld [vmem:[%s8] sm:$0x1]
    %v3756 = vlaneseq
    %v3757 = vshrl.u32 %v3756, 7
    %v3758 = vsub.s32 0, %v3757
    %v3759 = vrot.slane %v3754, %v3758
    %v3762 = vsel %vm33, %v3749, 0
    %3764 = vmatprep.subr.mxu0 0.0
    %v3765 = vand.u32 %v3750, 4294901760
    %3766 = vmatpush1.msra.mxu0 %v3765
    %3767 = vmatprep.subr.mxu0 0.0
    %v3768 = vand.u32 %v3751, 4294901760
    %3769 = vmatpush1.msra.mxu0 %v3768
    %3770 = vmatprep.subr.mxu0 0.0
    %v3771 = vand.u32 %v3752, 4294901760
    %3772 = vmatpush1.msra.mxu0 %v3771
    %3773 = vmatprep.subr.mxu0 0.0
    %v3774 = vand.u32 %v3753, 4294901760
    %3775 = vmatpush1.msra.mxu0 %v3774
    %3776 = vmatprep.subr.mxu0 0.0
    %3777 = vmatpush1.msra.mxu0 0.0
    %3778 = vmatprep.subr.mxu0 0.0
    %3779 = vmatpush1.msra.mxu0 0.0
    %3780 = vmatprep.subr.mxu0 0.0
    %3781 = vmatpush1.msra.mxu0 0.0
    %3782 = vmatprep.subr.mxu0 0.0
    %3783 = vmatpush1.msra.mxu0 0.0
    %3784 = vmatprep.subr.mxu0 0.0
    %3785 = vmatpush1.msra.mxu0 0.0
    %3786 = vmatprep.subr.mxu0 0.0
    %3787 = vmatpush1.msra.mxu0 0.0
    %3788 = vmatprep.subr.mxu0 0.0
    %3789 = vmatpush1.msra.mxu0 0.0
    %3790 = vmatprep.subr.mxu0 0.0
    %3791 = vmatpush1.msra.mxu0 0.0
    %3792 = vmatprep.subr.mxu0 0.0
    %3793 = vmatpush1.msra.mxu0 0.0
    %3794 = vmatprep.subr.mxu0 0.0
    %3795 = vmatpush1.msra.mxu0 0.0
    %3796 = vmatprep.subr.mxu0 0.0
    %3797 = vmatpush1.msra.mxu0 0.0
    %3798 = vmatprep.subr.mxu0 0.0
    %3799 = vmatpush1.msra.mxu0 0.0
    %3800 = vmatprep.subr.mxu0 0.0
    %3801 = vmatpush1.msra.mxu0 0.0
    %3802 = vmatprep.subr.mxu0 0.0
    %3803 = vmatpush1.msra.mxu0 0.0
    %3804 = vmatprep.subr.mxu0 0.0
    %3805 = vmatpush1.msra.mxu0 0.0
    %3806 = vmatprep.subr.mxu0 0.0
    %3807 = vmatpush1.msra.mxu0 0.0
    %3808 = vmatprep.subr.mxu0 0.0
    %3809 = vmatpush1.msra.mxu0 0.0
    %3810 = vmatprep.subr.mxu0 0.0
    %3811 = vmatpush1.msra.mxu0 0.0
    %3812 = vmatprep.subr.mxu0 0.0
    %3813 = vmatpush1.msra.mxu0 0.0
    %3814 = vmatprep.subr.mxu0 0.0
    %3815 = vmatpush1.msra.mxu0 0.0
    %3816 = vmatprep.subr.mxu0 0.0
    %3817 = vmatpush1.msra.mxu0 0.0
    %3818 = vmatprep.subr.mxu0 0.0
    %3819 = vmatpush1.msra.mxu0 0.0
    %3820 = vmatprep.subr.mxu0 0.0
    %3821 = vmatpush1.msra.mxu0 0.0
    %3822 = vmatprep.subr.mxu0 0.0
    %3823 = vmatpush1.msra.mxu0 0.0
    %3824 = vmatprep.subr.mxu0 0.0
    %3825 = vmatpush1.msra.mxu0 0.0
    %3826 = vmatprep.subr.mxu0 0.0
    %3827 = vmatpush1.msra.mxu0 0.0
    %3828 = vmatprep.subr.mxu0 0.0
    %3829 = vmatpush1.msra.mxu0 0.0
    %3830 = vmatprep.subr.mxu0 0.0
    %3831 = vmatpush1.msra.mxu0 0.0
    %3832 = vmatprep.mubr.f32.mxu0 0.0
    %v3833 = vand.u32 %v3762, 4294901760
    %v3834 = vsub.f32 %v3762, %v3833
    %v3835 = vand.u32 %v3834, 4294901760
    %v3836 = vsub.f32 %v3834, %v3835
    %v3837 = vand.u32 %v3836, 4294901760
    %3838 = vmatmul.mubr.f32.gmra.mrb[0].mxu0 %v3837
    %v3839 = vpop.f32.mrb[0].mxu0
    %v3840 = vadd.f32 %v3759, %v3839
    %v3841 = vpop.f32.mrb[0].mxu0
    %3842 = vdwg.mxu0
    %3843 = vmatprep.subr.mxu0 0.0
    %v3844 = vand.u32 %v3750, 4294901760
    %v3845 = vsub.f32 %v3750, %v3844
    %v3846 = vand.u32 %v3845, 4294901760
    %v3847 = vsub.f32 %v3845, %v3846
    %v3848 = vand.u32 %v3847, 4294901760
    %3849 = vmatpush1.msra.mxu0 %v3848
    %3850 = vmatprep.subr.mxu0 0.0
    %v3851 = vand.u32 %v3751, 4294901760
    %v3852 = vsub.f32 %v3751, %v3851
    %v3853 = vand.u32 %v3852, 4294901760
    %v3854 = vsub.f32 %v3852, %v3853
    %v3855 = vand.u32 %v3854, 4294901760
    %3856 = vmatpush1.msra.mxu0 %v3855
    %3857 = vmatprep.subr.mxu0 0.0
    %v3858 = vand.u32 %v3752, 4294901760
    %v3859 = vsub.f32 %v3752, %v3858
    %v3860 = vand.u32 %v3859, 4294901760
    %v3861 = vsub.f32 %v3859, %v3860
    %v3862 = vand.u32 %v3861, 4294901760
    %3863 = vmatpush1.msra.mxu0 %v3862
    %3864 = vmatprep.subr.mxu0 0.0
    %v3865 = vand.u32 %v3753, 4294901760
    %v3866 = vsub.f32 %v3753, %v3865
    %v3867 = vand.u32 %v3866, 4294901760
    %v3868 = vsub.f32 %v3866, %v3867
    %v3869 = vand.u32 %v3868, 4294901760
    %3870 = vmatpush1.msra.mxu0 %v3869
    %3871 = vmatprep.subr.mxu0 0.0
    %3872 = vmatpush1.msra.mxu0 0.0
    %3873 = vmatprep.subr.mxu0 0.0
    %3874 = vmatpush1.msra.mxu0 0.0
    %3875 = vmatprep.subr.mxu0 0.0
    %3876 = vmatpush1.msra.mxu0 0.0
    %3877 = vmatprep.subr.mxu0 0.0
    %3878 = vmatpush1.msra.mxu0 0.0
    %3879 = vmatprep.subr.mxu0 0.0
    %3880 = vmatpush1.msra.mxu0 0.0
    %3881 = vmatprep.subr.mxu0 0.0
    %3882 = vmatpush1.msra.mxu0 0.0
    %3883 = vmatprep.subr.mxu0 0.0
    %3884 = vmatpush1.msra.mxu0 0.0
    %3885 = vmatprep.subr.mxu0 0.0
    %3886 = vmatpush1.msra.mxu0 0.0
    %3887 = vmatprep.subr.mxu0 0.0
    %3888 = vmatpush1.msra.mxu0 0.0
    %3889 = vmatprep.subr.mxu0 0.0
    %3890 = vmatpush1.msra.mxu0 0.0
    %3891 = vmatprep.subr.mxu0 0.0
    %3892 = vmatpush1.msra.mxu0 0.0
    %3893 = vmatprep.subr.mxu0 0.0
    %3894 = vmatpush1.msra.mxu0 0.0
    %3895 = vmatprep.subr.mxu0 0.0
    %3896 = vmatpush1.msra.mxu0 0.0
    %3897 = vmatprep.subr.mxu0 0.0
    %3898 = vmatpush1.msra.mxu0 0.0
    %3899 = vmatprep.subr.mxu0 0.0
    %3900 = vmatpush1.msra.mxu0 0.0
    %3901 = vmatprep.subr.mxu0 0.0
    %3902 = vmatpush1.msra.mxu0 0.0
    %3903 = vmatprep.subr.mxu0 0.0
    %3904 = vmatpush1.msra.mxu0 0.0
    %3905 = vmatprep.subr.mxu0 0.0
    %3906 = vmatpush1.msra.mxu0 0.0
    %3907 = vmatprep.subr.mxu0 0.0
    %3908 = vmatpush1.msra.mxu0 0.0
    %3909 = vmatprep.subr.mxu0 0.0
    %3910 = vmatpush1.msra.mxu0 0.0
    %3911 = vmatprep.subr.mxu0 0.0
    %3912 = vmatpush1.msra.mxu0 0.0
    %3913 = vmatprep.subr.mxu0 0.0
    %3914 = vmatpush1.msra.mxu0 0.0
    %3915 = vmatprep.subr.mxu0 0.0
    %3916 = vmatpush1.msra.mxu0 0.0
    %3917 = vmatprep.subr.mxu0 0.0
    %3918 = vmatpush1.msra.mxu0 0.0
    %3919 = vmatprep.subr.mxu0 0.0
    %3920 = vmatpush1.msra.mxu0 0.0
    %3921 = vmatprep.subr.mxu0 0.0
    %3922 = vmatpush1.msra.mxu0 0.0
    %3923 = vmatprep.subr.mxu0 0.0
    %3924 = vmatpush1.msra.mxu0 0.0
    %3925 = vmatprep.subr.mxu0 0.0
    %3926 = vmatpush1.msra.mxu0 0.0
    %3927 = vmatprep.mubr.f32.mxu0 0.0
    %v3928 = vand.u32 %v3762, 4294901760
    %3929 = vmatmul.mubr.f32.gmra.mrb[0].mxu0 %v3928
    %v3930 = vpop.f32.mrb[0].mxu0
    %v3931 = vadd.f32 %v3840, %v3930
    %v3932 = vpop.f32.mrb[0].mxu0
    %3933 = vdwg.mxu0
    %3934 = vmatprep.subr.mxu0 0.0
    %v3935 = vand.u32 %v3750, 4294901760
    %v3936 = vsub.f32 %v3750, %v3935
    %3937 = vmatpush1.msra.mxu0 %v3936
    %3938 = vmatprep.subr.mxu0 0.0
    %v3939 = vand.u32 %v3751, 4294901760
    %v3940 = vsub.f32 %v3751, %v3939
    %3941 = vmatpush1.msra.mxu0 %v3940
    %3942 = vmatprep.subr.mxu0 0.0
    %v3943 = vand.u32 %v3752, 4294901760
    %v3944 = vsub.f32 %v3752, %v3943
    %3945 = vmatpush1.msra.mxu0 %v3944
    %3946 = vmatprep.subr.mxu0 0.0
    %v3947 = vand.u32 %v3753, 4294901760
    %v3948 = vsub.f32 %v3753, %v3947
    %3949 = vmatpush1.msra.mxu0 %v3948
    %3950 = vmatprep.subr.mxu0 0.0
    %3951 = vmatpush1.msra.mxu0 0.0
    %3952 = vmatprep.subr.mxu0 0.0
    %3953 = vmatpush1.msra.mxu0 0.0
    %3954 = vmatprep.subr.mxu0 0.0
    %3955 = vmatpush1.msra.mxu0 0.0
    %3956 = vmatprep.subr.mxu0 0.0
    %3957 = vmatpush1.msra.mxu0 0.0
    %3958 = vmatprep.subr.mxu0 0.0
    %3959 = vmatpush1.msra.mxu0 0.0
    %3960 = vmatprep.subr.mxu0 0.0
    %3961 = vmatpush1.msra.mxu0 0.0
    %3962 = vmatprep.subr.mxu0 0.0
    %3963 = vmatpush1.msra.mxu0 0.0
    %3964 = vmatprep.subr.mxu0 0.0
    %3965 = vmatpush1.msra.mxu0 0.0
    %3966 = vmatprep.subr.mxu0 0.0
    %3967 = vmatpush1.msra.mxu0 0.0
    %3968 = vmatprep.subr.mxu0 0.0
    %3969 = vmatpush1.msra.mxu0 0.0
    %3970 = vmatprep.subr.mxu0 0.0
    %3971 = vmatpush1.msra.mxu0 0.0
    %3972 = vmatprep.subr.mxu0 0.0
    %3973 = vmatpush1.msra.mxu0 0.0
    %3974 = vmatprep.subr.mxu0 0.0
    %3975 = vmatpush1.msra.mxu0 0.0
    %3976 = vmatprep.subr.mxu0 0.0
    %3977 = vmatpush1.msra.mxu0 0.0
    %3978 = vmatprep.subr.mxu0 0.0
    %3979 = vmatpush1.msra.mxu0 0.0
    %3980 = vmatprep.subr.mxu0 0.0
    %3981 = vmatpush1.msra.mxu0 0.0
    %3982 = vmatprep.subr.mxu0 0.0
    %3983 = vmatpush1.msra.mxu0 0.0
    %3984 = vmatprep.subr.mxu0 0.0
    %3985 = vmatpush1.msra.mxu0 0.0
    %3986 = vmatprep.subr.mxu0 0.0
    %3987 = vmatpush1.msra.mxu0 0.0
    %3988 = vmatprep.subr.mxu0 0.0
    %3989 = vmatpush1.msra.mxu0 0.0
    %3990 = vmatprep.subr.mxu0 0.0
    %3991 = vmatpush1.msra.mxu0 0.0
    %3992 = vmatprep.subr.mxu0 0.0
    %3993 = vmatpush1.msra.mxu0 0.0
    %3994 = vmatprep.subr.mxu0 0.0
    %3995 = vmatpush1.msra.mxu0 0.0
    %3996 = vmatprep.subr.mxu0 0.0
    %3997 = vmatpush1.msra.mxu0 0.0
    %3998 = vmatprep.subr.mxu0 0.0
    %3999 = vmatpush1.msra.mxu0 0.0
    %4000 = vmatprep.subr.mxu0 0.0
    %4001 = vmatpush1.msra.mxu0 0.0
    %4002 = vmatprep.subr.mxu0 0.0
    %4003 = vmatpush1.msra.mxu0 0.0
    %4004 = vmatprep.subr.mxu0 0.0
    %4005 = vmatpush1.msra.mxu0 0.0
    %4006 = vmatprep.mubr.f32.mxu0 0.0
    %v4007 = vand.u32 %v3762, 4294901760
    %v4008 = vsub.f32 %v3762, %v4007
    %4009 = vmatmul.mubr.f32.gmra.mrb[0].mxu0 %v4008
    %v4010 = vpop.f32.mrb[0].mxu0
    %v4011 = vadd.f32 %v3931, %v4010
    %v4012 = vpop.f32.mrb[0].mxu0
    %4013 = vdwg.mxu0
    %4014 = vmatprep.subr.mxu0 0.0
    %v4015 = vand.u32 %v3750, 4294901760
    %4016 = vmatpush1.msra.mxu0 %v4015
    %4017 = vmatprep.subr.mxu0 0.0
    %v4018 = vand.u32 %v3751, 4294901760
    %4019 = vmatpush1.msra.mxu0 %v4018
    %4020 = vmatprep.subr.mxu0 0.0
    %v4021 = vand.u32 %v3752, 4294901760
    %4022 = vmatpush1.msra.mxu0 %v4021
    %4023 = vmatprep.subr.mxu0 0.0
    %v4024 = vand.u32 %v3753, 4294901760
    %4025 = vmatpush1.msra.mxu0 %v4024
    %4026 = vmatprep.subr.mxu0 0.0
    %4027 = vmatpush1.msra.mxu0 0.0
    %4028 = vmatprep.subr.mxu0 0.0
    %4029 = vmatpush1.msra.mxu0 0.0
    %4030 = vmatprep.subr.mxu0 0.0
    %4031 = vmatpush1.msra.mxu0 0.0
    %4032 = vmatprep.subr.mxu0 0.0
    %4033 = vmatpush1.msra.mxu0 0.0
    %4034 = vmatprep.subr.mxu0 0.0
    %4035 = vmatpush1.msra.mxu0 0.0
    %4036 = vmatprep.subr.mxu0 0.0
    %4037 = vmatpush1.msra.mxu0 0.0
    %4038 = vmatprep.subr.mxu0 0.0
    %4039 = vmatpush1.msra.mxu0 0.0
    %4040 = vmatprep.subr.mxu0 0.0
    %4041 = vmatpush1.msra.mxu0 0.0
    %4042 = vmatprep.subr.mxu0 0.0
    %4043 = vmatpush1.msra.mxu0 0.0
    %4044 = vmatprep.subr.mxu0 0.0
    %4045 = vmatpush1.msra.mxu0 0.0
    %4046 = vmatprep.subr.mxu0 0.0
    %4047 = vmatpush1.msra.mxu0 0.0
    %4048 = vmatprep.subr.mxu0 0.0
    %4049 = vmatpush1.msra.mxu0 0.0
    %4050 = vmatprep.subr.mxu0 0.0
    %4051 = vmatpush1.msra.mxu0 0.0
    %4052 = vmatprep.subr.mxu0 0.0
    %4053 = vmatpush1.msra.mxu0 0.0
    %4054 = vmatprep.subr.mxu0 0.0
    %4055 = vmatpush1.msra.mxu0 0.0
    %4056 = vmatprep.subr.mxu0 0.0
    %4057 = vmatpush1.msra.mxu0 0.0
    %4058 = vmatprep.subr.mxu0 0.0
    %4059 = vmatpush1.msra.mxu0 0.0
    %4060 = vmatprep.subr.mxu0 0.0
    %4061 = vmatpush1.msra.mxu0 0.0
    %4062 = vmatprep.subr.mxu0 0.0
    %4063 = vmatpush1.msra.mxu0 0.0
    %4064 = vmatprep.subr.mxu0 0.0
    %4065 = vmatpush1.msra.mxu0 0.0
    %4066 = vmatprep.subr.mxu0 0.0
    %4067 = vmatpush1.msra.mxu0 0.0
    %4068 = vmatprep.subr.mxu0 0.0
    %4069 = vmatpush1.msra.mxu0 0.0
    %4070 = vmatprep.subr.mxu0 0.0
    %4071 = vmatpush1.msra.mxu0 0.0
    %4072 = vmatprep.subr.mxu0 0.0
    %4073 = vmatpush1.msra.mxu0 0.0
    %4074 = vmatprep.subr.mxu0 0.0
    %4075 = vmatpush1.msra.mxu0 0.0
    %4076 = vmatprep.subr.mxu0 0.0
    %4077 = vmatpush1.msra.mxu0 0.0
    %4078 = vmatprep.subr.mxu0 0.0
    %4079 = vmatpush1.msra.mxu0 0.0
    %4080 = vmatprep.subr.mxu0 0.0
    %4081 = vmatpush1.msra.mxu0 0.0
    %4082 = vmatprep.mubr.f32.mxu0 0.0
    %v4083 = vand.u32 %v3762, 4294901760
    %v4084 = vsub.f32 %v3762, %v4083
    %v4085 = vand.u32 %v4084, 4294901760
    %4086 = vmatmul.mubr.f32.gmra.mrb[0].mxu0 %v4085
    %v4087 = vpop.f32.mrb[0].mxu0
    %v4088 = vadd.f32 %v4011, %v4087
    %v4089 = vpop.f32.mrb[0].mxu0
    %4090 = vdwg.mxu0
    %4091 = vmatprep.subr.mxu0 0.0
    %v4092 = vand.u32 %v3750, 4294901760
    %v4093 = vsub.f32 %v3750, %v4092
    %v4094 = vand.u32 %v4093, 4294901760
    %4095 = vmatpush1.msra.mxu0 %v4094
    %4096 = vmatprep.subr.mxu0 0.0
    %v4097 = vand.u32 %v3751, 4294901760
    %v4098 = vsub.f32 %v3751, %v4097
    %v4099 = vand.u32 %v4098, 4294901760
    %4100 = vmatpush1.msra.mxu0 %v4099
    %4101 = vmatprep.subr.mxu0 0.0
    %v4102 = vand.u32 %v3752, 4294901760
    %v4103 = vsub.f32 %v3752, %v4102
    %v4104 = vand.u32 %v4103, 4294901760
    %4105 = vmatpush1.msra.mxu0 %v4104
    %4106 = vmatprep.subr.mxu0 0.0
    %v4107 = vand.u32 %v3753, 4294901760
    %v4108 = vsub.f32 %v3753, %v4107
    %v4109 = vand.u32 %v4108, 4294901760
    %4110 = vmatpush1.msra.mxu0 %v4109
    %4111 = vmatprep.subr.mxu0 0.0
    %4112 = vmatpush1.msra.mxu0 0.0
    %4113 = vmatprep.subr.mxu0 0.0
    %4114 = vmatpush1.msra.mxu0 0.0
    %4115 = vmatprep.subr.mxu0 0.0
    %4116 = vmatpush1.msra.mxu0 0.0
    %4117 = vmatprep.subr.mxu0 0.0
    %4118 = vmatpush1.msra.mxu0 0.0
    %4119 = vmatprep.subr.mxu0 0.0
    %4120 = vmatpush1.msra.mxu0 0.0
    %4121 = vmatprep.subr.mxu0 0.0
    %4122 = vmatpush1.msra.mxu0 0.0
    %4123 = vmatprep.subr.mxu0 0.0
    %4124 = vmatpush1.msra.mxu0 0.0
    %4125 = vmatprep.subr.mxu0 0.0
    %4126 = vmatpush1.msra.mxu0 0.0
    %4127 = vmatprep.subr.mxu0 0.0
    %4128 = vmatpush1.msra.mxu0 0.0
    %4129 = vmatprep.subr.mxu0 0.0
    %4130 = vmatpush1.msra.mxu0 0.0
    %4131 = vmatprep.subr.mxu0 0.0
    %4132 = vmatpush1.msra.mxu0 0.0
    %4133 = vmatprep.subr.mxu0 0.0
    %4134 = vmatpush1.msra.mxu0 0.0
    %4135 = vmatprep.subr.mxu0 0.0
    %4136 = vmatpush1.msra.mxu0 0.0
    %4137 = vmatprep.subr.mxu0 0.0
    %4138 = vmatpush1.msra.mxu0 0.0
    %4139 = vmatprep.subr.mxu0 0.0
    %4140 = vmatpush1.msra.mxu0 0.0
    %4141 = vmatprep.subr.mxu0 0.0
    %4142 = vmatpush1.msra.mxu0 0.0
    %4143 = vmatprep.subr.mxu0 0.0
    %4144 = vmatpush1.msra.mxu0 0.0
    %4145 = vmatprep.subr.mxu0 0.0
    %4146 = vmatpush1.msra.mxu0 0.0
    %4147 = vmatprep.subr.mxu0 0.0
    %4148 = vmatpush1.msra.mxu0 0.0
    %4149 = vmatprep.subr.mxu0 0.0
    %4150 = vmatpush1.msra.mxu0 0.0
    %4151 = vmatprep.subr.mxu0 0.0
    %4152 = vmatpush1.msra.mxu0 0.0
    %4153 = vmatprep.subr.mxu0 0.0
    %4154 = vmatpush1.msra.mxu0 0.0
    %4155 = vmatprep.subr.mxu0 0.0
    %4156 = vmatpush1.msra.mxu0 0.0
    %4157 = vmatprep.subr.mxu0 0.0
    %4158 = vmatpush1.msra.mxu0 0.0
    %4159 = vmatprep.subr.mxu0 0.0
    %4160 = vmatpush1.msra.mxu0 0.0
    %4161 = vmatprep.subr.mxu0 0.0
    %4162 = vmatpush1.msra.mxu0 0.0
    %4163 = vmatprep.subr.mxu0 0.0
    %4164 = vmatpush1.msra.mxu0 0.0
    %4165 = vmatprep.subr.mxu0 0.0
    %4166 = vmatpush1.msra.mxu0 0.0
    %4167 = vmatprep.mubr.f32.mxu0 0.0
    %v4168 = vand.u32 %v3762, 4294901760
    %4169 = vmatmul.mubr.f32.gmra.mrb[0].mxu0 %v4168
    %v4170 = vpop.f32.mrb[0].mxu0
    %v4171 = vadd.f32 %v4088, %v4170
    %v4172 = vpop.f32.mrb[0].mxu0
    %4173 = vdwg.mxu0
    %4174 = vmatprep.subr.mxu0 0.0
    %v4175 = vand.u32 %v3750, 4294901760
    %4176 = vmatpush1.msra.mxu0 %v4175
    %4177 = vmatprep.subr.mxu0 0.0
    %v4178 = vand.u32 %v3751, 4294901760
    %4179 = vmatpush1.msra.mxu0 %v4178
    %4180 = vmatprep.subr.mxu0 0.0
    %v4181 = vand.u32 %v3752, 4294901760
    %4182 = vmatpush1.msra.mxu0 %v4181
    %4183 = vmatprep.subr.mxu0 0.0
    %v4184 = vand.u32 %v3753, 4294901760
    %4185 = vmatpush1.msra.mxu0 %v4184
    %4186 = vmatprep.subr.mxu0 0.0
    %4187 = vmatpush1.msra.mxu0 0.0
    %4188 = vmatprep.subr.mxu0 0.0
    %4189 = vmatpush1.msra.mxu0 0.0
    %4190 = vmatprep.subr.mxu0 0.0
    %4191 = vmatpush1.msra.mxu0 0.0
    %4192 = vmatprep.subr.mxu0 0.0
    %4193 = vmatpush1.msra.mxu0 0.0
    %4194 = vmatprep.subr.mxu0 0.0
    %4195 = vmatpush1.msra.mxu0 0.0
    %4196 = vmatprep.subr.mxu0 0.0
    %4197 = vmatpush1.msra.mxu0 0.0
    %4198 = vmatprep.subr.mxu0 0.0
    %4199 = vmatpush1.msra.mxu0 0.0
    %4200 = vmatprep.subr.mxu0 0.0
    %4201 = vmatpush1.msra.mxu0 0.0
    %4202 = vmatprep.subr.mxu0 0.0
    %4203 = vmatpush1.msra.mxu0 0.0
    %4204 = vmatprep.subr.mxu0 0.0
    %4205 = vmatpush1.msra.mxu0 0.0
    %4206 = vmatprep.subr.mxu0 0.0
    %4207 = vmatpush1.msra.mxu0 0.0
    %4208 = vmatprep.subr.mxu0 0.0
    %4209 = vmatpush1.msra.mxu0 0.0
    %4210 = vmatprep.subr.mxu0 0.0
    %4211 = vmatpush1.msra.mxu0 0.0
    %4212 = vmatprep.subr.mxu0 0.0
    %4213 = vmatpush1.msra.mxu0 0.0
    %4214 = vmatprep.subr.mxu0 0.0
    %4215 = vmatpush1.msra.mxu0 0.0
    %4216 = vmatprep.subr.mxu0 0.0
    %4217 = vmatpush1.msra.mxu0 0.0
    %4218 = vmatprep.subr.mxu0 0.0
    %4219 = vmatpush1.msra.mxu0 0.0
    %4220 = vmatprep.subr.mxu0 0.0
    %4221 = vmatpush1.msra.mxu0 0.0
    %4222 = vmatprep.subr.mxu0 0.0
    %4223 = vmatpush1.msra.mxu0 0.0
    %4224 = vmatprep.subr.mxu0 0.0
    %4225 = vmatpush1.msra.mxu0 0.0
    %4226 = vmatprep.subr.mxu0 0.0
    %4227 = vmatpush1.msra.mxu0 0.0
    %4228 = vmatprep.subr.mxu0 0.0
    %4229 = vmatpush1.msra.mxu0 0.0
    %4230 = vmatprep.subr.mxu0 0.0
    %4231 = vmatpush1.msra.mxu0 0.0
    %4232 = vmatprep.subr.mxu0 0.0
    %4233 = vmatpush1.msra.mxu0 0.0
    %4234 = vmatprep.subr.mxu0 0.0
    %4235 = vmatpush1.msra.mxu0 0.0
    %4236 = vmatprep.subr.mxu0 0.0
    %4237 = vmatpush1.msra.mxu0 0.0
    %4238 = vmatprep.subr.mxu0 0.0
    %4239 = vmatpush1.msra.mxu0 0.0
    %4240 = vmatprep.subr.mxu0 0.0
    %4241 = vmatpush1.msra.mxu0 0.0
    %4242 = vmatprep.mubr.f32.mxu0 0.0
    %v4243 = vand.u32 %v3762, 4294901760
    %4244 = vmatmul.mubr.f32.gmra.mrb[0].mxu0 %v4243
    %v4245 = vpop.f32.mrb[0].mxu0
    %v4246 = vadd.f32 %v4171, %v4245
    %v4247 = vpop.f32.mrb[0].mxu0
    %4248 = vdwg.mxu0
    %vm4249 = vcmask 58368
    %4250 = vst.msk [vmem:[#allocation5] sm:$0x3] %vm4249, %v4246
    // Predicated region
    $region38: #{tpu_custom_call.1} parent=1 // pred_check
      _
    $region39: #{tpu_custom_call.1} parent=1 // pred_check_branch
      %4252 = sbr.rel (0) target = $region41
    $region40: #{tpu_custom_call.1} parent=1 // pred_region
      %s4254 = ssub.s32 32, 32
      %4255 = vsyncadd [#allocation6], %s4254
      %s4257 = sshll.u32 [#allocation5], 4
      %s4258 = int_to_ptr.vmem [resolvable:$true] %s4257
      %4260 = dma.vmem_to_hbm [thread:$0]  %s4258, 32, %s9, [#allocation6]
    $region41: #{tpu_custom_call.1} parent=1 // pred_fallthru
      _
    // Predicated region
    $region42: #{tpu_custom_call.1} parent=1 // pred_check
      _
    $region43: #{tpu_custom_call.1} parent=1 // pred_check_branch
      %4262 = sbr.rel (0) target = $region45
    $region44: #{tpu_custom_call.1} parent=1 // pred_region
      %4263 = dma.done [#allocation6], 32
    $region45: #{tpu_custom_call.1} parent=1 // pred_fallthru
      _
    %4264 = vsyncpa [#allocation6], 1

</llo_original>
